<compile_context>
chip_gen: v7x
topology: tpu7x:2x2x1
jax: 0.10.0
libtpu: 0.0.40
codegen_flags: <defaults>
</compile_context>

<pallas_src>
import functools

import numpy as np

import jax
import jax.numpy as jnp
from jax.experimental import pallas as pl
from jax.experimental.pallas import tpu as pltpu


# ----------------------------------------------------------------------------
# Model dimensions
# ----------------------------------------------------------------------------
OBS_C, OBS_H, OBS_W = 4, 16, 16
CONV1_OUT, CONV2_OUT = 16, 32
ENC_OUT = 64           # encoder output size (fc out)
RNN_SIZE = 64          # GRU hidden size (decoder is identity)
NUM_ACTIONS = 6

HEAD_PAD = 128         # critic+actor head padded to a full 128-lane matmul output
OUT_SLAB = 128         # single lane-dense output slab width (also the packed aux-input width)
assert RNN_SIZE + NUM_ACTIONS + 3 <= OUT_SLAB
assert RNN_SIZE + NUM_ACTIONS <= OUT_SLAB

FLAT_IN = OBS_C * OBS_H * OBS_W                      # 1024
CONV1_FLAT = CONV1_OUT * (OBS_H // 2) * (OBS_W // 2) # 1024
CONV2_FLAT = CONV2_OUT * (OBS_H // 4) * (OBS_W // 4) # 512
MAX_BT = 512


# ----------------------------------------------------------------------------
# Fused Pallas kernel: conv1 -> conv2 -> fc -> GRU -> heads -> sampling
# ----------------------------------------------------------------------------
def _fused_kernel(x_ref, aux_ref,
                  w1_ref, b1_ref, w2_ref, b2_ref,
                  fcw_ref, fcb_ref, gw_ref, gb_ref, hw_ref, hb_ref,
                  out_ref, *, num_actions, rnn_size):
    f32 = jnp.float32
    bf16 = jnp.bfloat16
    H = rnn_size
    A = num_actions

    # ---- encoder: conv1 / conv2 as dense matmuls on NCHW-flat activations, + fc -------------
    # obs arrives f32; cast to bf16 in-kernel (saves a separate XLA cast pass + HBM round trip)
    x = x_ref[...].astype(bf16)                                            # (BT, 1024)
    h1 = jnp.dot(x, w1_ref[...], preferred_element_type=f32) + b1_ref[...]
    h1 = jnp.maximum(h1, 0.0)                                              # (BT, 1024)
    h2 = jnp.dot(h1.astype(bf16), w2_ref[...], preferred_element_type=f32) + b2_ref[...]
    h2 = jnp.maximum(h2, 0.0)                                              # (BT, 512) NCHW flat
    head = jnp.dot(h2.astype(bf16), fcw_ref[...], preferred_element_type=f32) + fcb_ref[...]
    head = jnp.maximum(head, 0.0)                                          # (BT, 64)

    # ---- packed aux input: [h_prev (64) | gumbel (A) | zero pad] ------------------------------
    aux = aux_ref[...]                                                     # (BT, 128) f32
    h_prev = aux[:, 0:H]
    gumbel = aux[:, H:H + A]

    # ---- GRU cell: one K=128, N=256 MXU pass over repacked [Wr | Wz | Win | Whn] weight -------
    xh = jnp.concatenate([head, h_prev], axis=1).astype(bf16)              # (BT, 128)
    gates = jnp.dot(xh, gw_ref[...], preferred_element_type=f32) + gb_ref[...]  # (BT, 256)
    r = jax.nn.sigmoid(gates[:, 0:H])            # i_r + h_r (+ fused biases)
    z = jax.nn.sigmoid(gates[:, H:2 * H])        # i_z + h_z
    n = jnp.tanh(gates[:, 2 * H:3 * H] + r * gates[:, 3 * H:4 * H])   # i_n + r * h_n
    h_new = (1.0 - z) * n + z * h_prev                                     # (BT, 64) f32

    # ---- fused critic + actor heads (lane-padded to 128 output columns) ----------------------
    ho = jnp.dot(h_new.astype(bf16), hw_ref[...], preferred_element_type=f32) + hb_ref[...]
    values = ho[:, 0:1]                                                    # (BT, 1)
    logits = ho[:, 1:1 + A]                                                # (BT, A)

    # ---- log-softmax + Gumbel-max categorical sampling + log-prob of sampled action ----------
    m = jnp.max(logits, axis=-1, keepdims=True)
    lse = jnp.log(jnp.sum(jnp.exp(logits - m), axis=-1, keepdims=True)) + m
    logp = logits - lse
    zg = logits + gumbel
    zmax = jnp.max(zg, axis=-1, keepdims=True)
    iota = jax.lax.broadcasted_iota(jnp.int32, zg.shape, 1)
    act = jnp.min(jnp.where(zg >= zmax, iota, A), axis=-1, keepdims=True)              # (BT, 1)
    logp_act = jnp.sum(jnp.where(iota == act, logp, 0.0), axis=-1, keepdims=True)      # (BT, 1)

    # ---- single unmasked full-width (BT, 128) store --------------------------------------------
    pad_w = out_ref.shape[1] - (H + A + 3)
    slab = jnp.concatenate(
        [h_new, logits, values, act.astype(f32), logp_act,
         jnp.zeros((h_new.shape[0], pad_w), f32)],
        axis=1)
    out_ref[...] = slab


# ----------------------------------------------------------------------------
# Parameters (deterministic synthetic init; biases = 0 as in initialize_weights)
# ----------------------------------------------------------------------------
def init_params(key):
    def w(k, shape, scale):
        return scale * jax.random.normal(k, shape, dtype=jnp.float32)

    ks = jax.random.split(key, 7)
    return {
        "conv1_w": w(ks[0], (CONV1_OUT, OBS_C, 3, 3), 0.1),       # torch OIHW layout
        "conv1_b": jnp.zeros((CONV1_OUT,), jnp.float32),
        "conv2_w": w(ks[1], (CONV2_OUT, CONV1_OUT, 3, 3), 0.1),
        "conv2_b": jnp.zeros((CONV2_OUT,), jnp.float32),
        "fc_w": w(ks[2], (CONV2_FLAT, ENC_OUT), 0.05),             # rows in NCHW-flatten order
        "fc_b": jnp.zeros((ENC_OUT,), jnp.float32),
        "gru_wih": w(ks[3], (ENC_OUT, 3 * RNN_SIZE), 0.1),         # gate order (r, z, n)
        "gru_whh": w(ks[4], (RNN_SIZE, 3 * RNN_SIZE), 0.1),
        "gru_bih": jnp.zeros((3 * RNN_SIZE,), jnp.float32),
        "gru_bhh": jnp.zeros((3 * RNN_SIZE,), jnp.float32),
        "critic_w": w(ks[5], (RNN_SIZE, 1), 0.1),
        "critic_b": jnp.zeros((1,), jnp.float32),
        "actor_w": w(ks[6], (RNN_SIZE, NUM_ACTIONS), 0.1),
        "actor_b": jnp.zeros((NUM_ACTIONS,), jnp.float32),
    }


def _conv_to_dense(w, in_hw, stride, pad):
    """Exact dense matrix of a Conv2d: NCHW-flat input -> NCHW-flat output. Done once, on host."""
    oc, ic, kh, kw = w.shape
    h, wd = in_hw
    oh = (h + 2 * pad - kh) // stride + 1
    ow = (wd + 2 * pad - kw) // stride + 1
    dense = np.zeros((ic * h * wd, oc * oh * ow), np.float32)
    oc_idx = np.arange(oc)
    for oy in range(oh):
        for ox in range(ow):
            col = oy * ow + ox
            for ky in range(kh):
                iy = oy * stride + ky - pad
                if not (0 <= iy < h):
                    continue
                for kx in range(kw):
                    ix = ox * stride + kx - pad
                    if not (0 <= ix < wd):
                        continue
                    for ci in range(ic):
                        dense[ci * h * wd + iy * wd + ix, oc_idx * oh * ow + col] = w[:, ci, ky, kx]
    return dense


def prepare_inference_params(params):
    """One-time weight preprocessing: dense conv matrices, repacked GRU / head weights, bf16 cast."""
    f32 = np.float32
    H = RNN_SIZE
    w1d = _conv_to_dense(np.asarray(params["conv1_w"], f32), (OBS_H, OBS_W), 2, 1)
    b1d = np.repeat(np.asarray(params["conv1_b"], f32), (OBS_H // 2) * (OBS_W // 2))[None, :]
    w2d = _conv_to_dense(np.asarray(params["conv2_w"], f32), (OBS_H // 2, OBS_W // 2), 2, 1)
    b2d = np.repeat(np.asarray(params["conv2_b"], f32), (OBS_H // 4) * (OBS_W // 4))[None, :]

    # Repacked GRU weight (128, 256): columns [Wih_r;Whh_r | Wih_z;Whh_z | Wih_n;0 | 0;Whh_n]
    # so one matmul of [x | h] directly yields (i_r+h_r, i_z+h_z, i_n, h_n).
    wih = np.asarray(params["gru_wih"], f32)   # (64, 192)
    whh = np.asarray(params["gru_whh"], f32)   # (64, 192)
    bih = np.asarray(params["gru_bih"], f32)
    bhh = np.asarray(params["gru_bhh"], f32)
    gru_w = np.zeros((ENC_OUT + H, 4 * H), f32)
    gru_w[:ENC_OUT, 0 * H:1 * H] = wih[:, 0 * H:1 * H]
    gru_w[ENC_OUT:, 0 * H:1 * H] = whh[:, 0 * H:1 * H]
    gru_w[:ENC_OUT, 1 * H:2 * H] = wih[:, 1 * H:2 * H]
    gru_w[ENC_OUT:, 1 * H:2 * H] = whh[:, 1 * H:2 * H]
    gru_w[:ENC_OUT, 2 * H:3 * H] = wih[:, 2 * H:3 * H]
    gru_w[ENC_OUT:, 3 * H:4 * H] = whh[:, 2 * H:3 * H]
    gru_b = np.zeros((1, 4 * H), f32)
    gru_b[0, 0 * H:1 * H] = bih[0 * H:1 * H] + bhh[0 * H:1 * H]
    gru_b[0, 1 * H:2 * H] = bih[1 * H:2 * H] + bhh[1 * H:2 * H]
    gru_b[0, 2 * H:3 * H] = bih[2 * H:3 * H]
    gru_b[0, 3 * H:4 * H] = bhh[2 * H:3 * H]

    # merged critic + actor head, padded to 128 lanes
    head_w = np.zeros((H, HEAD_PAD), f32)
    head_w[:, 0:1] = np.asarray(params["critic_w"], f32)
    head_w[:, 1:1 + NUM_ACTIONS] = np.asarray(params["actor_w"], f32)
    head_b = np.zeros((1, HEAD_PAD), f32)
    head_b[0, 0] = float(np.asarray(params["critic_b"], f32)[0])
    head_b[0, 1:1 + NUM_ACTIONS] = np.asarray(params["actor_b"], f32)

    bf16 = jnp.bfloat16
    return {
        "w1d": jnp.asarray(w1d, dtype=bf16), "b1d": jnp.asarray(b1d, dtype=jnp.float32),
        "w2d": jnp.asarray(w2d, dtype=bf16), "b2d": jnp.asarray(b2d, dtype=jnp.float32),
        "fc_w": jnp.asarray(np.asarray(params["fc_w"], f32), dtype=bf16),
        "fc_b": jnp.asarray(np.asarray(params["fc_b"], f32)[None, :], dtype=jnp.float32),
        "gru_w": jnp.asarray(gru_w, dtype=bf16), "gru_b": jnp.asarray(gru_b, dtype=jnp.float32),
        "head_w": jnp.asarray(head_w, dtype=bf16), "head_b": jnp.asarray(head_b, dtype=jnp.float32),
    }


# ----------------------------------------------------------------------------
# Batch tiling: big tiles (amortize ~0.35us/step overhead), >=2 grid steps for v7x's 2 TCs
# ----------------------------------------------------------------------------
def _choose_batch_tile(B):
    if B <= 8:
        return B                                   # single tile; block dim == array dim is legal
    half = -(-B // 2)                              # ceil(B / 2)
    return min(MAX_BT, ((half + 7) // 8) * 8)      # multiple of 8, capped at 512


# ----------------------------------------------------------------------------
# Forward pass (ActorCriticSharedWeights.forward, values_only=False, sample_actions=True)
# ----------------------------------------------------------------------------
def actor_critic_forward(prep, obs_nchw, rnn_states, gumbel_noise):
    B = obs_nchw.shape[0]
    A = NUM_ACTIONS
    H = RNN_SIZE
    f32 = jnp.float32

    # NCHW flatten (matches PyTorch flatten order); reshape is metadata-only. No cast, no pad:
    # the bf16 cast happens inside the kernel and ragged batches use Pallas partial blocks.
    x_flat = obs_nchw.reshape(B, -1)
    # Pack h0 (64 lanes) + gumbel (A lanes) into one lane-dense (B, 128) input -> one unmasked DMA.
    aux = jnp.concatenate(
        [rnn_states.astype(f32), gumbel_noise.astype(f32),
         jnp.zeros((B, OUT_SLAB - H - A), f32)],
        axis=1)

    BT = _choose_batch_tile(B)
    grid = (pl.cdiv(B, BT),)

    row = lambda i: (i, 0)     # batch-tiled operands
    rep = lambda i: (0, 0)     # weights: VMEM-resident, never re-fetched across grid steps

    weight_bytes = int(sum(int(np.prod(v.shape)) * v.dtype.itemsize for v in prep.values()))
    flops = 2 * B * (FLAT_IN * CONV1_FLAT + CONV1_FLAT * CONV2_FLAT + CONV2_FLAT * ENC_OUT
                     + (ENC_OUT + H) * 4 * H + H * HEAD_PAD)
    cost = pl.CostEstimate(
        flops=int(flops),
        transcendentals=int(B * (3 * H + 2 * A + 2)),      # sigmoid/tanh/exp/log
        bytes_accessed=int(x_flat.size * x_flat.dtype.itemsize + aux.size * 4
                           + B * OUT_SLAB * 4 + weight_bytes),
    )

    slab = pl.pallas_call(
        functools.partial(_fused_kernel, num_actions=A, rnn_size=H),
        out_shape=jax.ShapeDtypeStruct((B, OUT_SLAB), f32),
        grid=grid,
        in_specs=[
            pl.BlockSpec((BT, x_flat.shape[1]), row),
            pl.BlockSpec((BT, OUT_SLAB), row),
            pl.BlockSpec(prep["w1d"].shape, rep),
            pl.BlockSpec(prep["b1d"].shape, rep),
            pl.BlockSpec(prep["w2d"].shape, rep),
            pl.BlockSpec(prep["b2d"].shape, rep),
            pl.BlockSpec(prep["fc_w"].shape, rep),
            pl.BlockSpec(prep["fc_b"].shape, rep),
            pl.BlockSpec(prep["gru_w"].shape, rep),
            pl.BlockSpec(prep["gru_b"].shape, rep),
            pl.BlockSpec(prep["head_w"].shape, rep),
            pl.BlockSpec(prep["head_b"].shape, rep),
        ],
        out_specs=pl.BlockSpec((BT, OUT_SLAB), row),
        compiler_params=pltpu.CompilerParams(
            dimension_semantics=("parallel",),
            vmem_limit_bytes=48 * 1024 * 1024),   # v5e default scoped VMEM (16 MiB) is too small at BT>=256
        cost_estimate=cost,
    )(x_flat, aux,
      prep["w1d"], prep["b1d"], prep["w2d"], prep["b2d"],
      prep["fc_w"], prep["fc_b"], prep["gru_w"], prep["gru_b"],
      prep["head_w"], prep["head_b"])

    c0 = H
    c1 = H + A
    new_rnn_states = slab[:, :c0]
    action_logits = slab[:, c0:c1]
    values = slab[:, c1]                              # critic(dec).squeeze()
    actions = slab[:, c1 + 1].astype(jnp.int32)       # actions.squeeze(dim=1)
    log_prob_actions = slab[:, c1 + 2]

    # TODO(synk): returns a plain dict instead of sample_factory TensorDict / distribution object.
    return {
        "values": values,
        "action_logits": action_logits,
        "actions": actions,
        "log_prob_actions": log_prob_actions,
        "new_rnn_states": new_rnn_states,
    }


# ----------------------------------------------------------------------------
# Pure-JAX reference (for correctness check)
# ----------------------------------------------------------------------------
def reference_forward(params, obs, rnn_states):
    x = jax.lax.conv_general_dilated(
        obs, params["conv1_w"], window_strides=(2, 2), padding=((1, 1), (1, 1)),
        dimension_numbers=("NCHW", "OIHW", "NCHW"))
    x = jax.nn.relu(x + params["conv1_b"][None, :, None, None])
    x = jax.lax.conv_general_dilated(
        x, params["conv2_w"], window_strides=(2, 2), padding=((1, 1), (1, 1)),
        dimension_numbers=("NCHW", "OIHW", "NCHW"))
    x = jax.nn.relu(x + params["conv2_b"][None, :, None, None])
    flat = x.reshape(x.shape[0], -1)
    head = jax.nn.relu(flat @ params["fc_w"] + params["fc_b"][None, :])
    gi = head @ params["gru_wih"] + params["gru_bih"][None, :]
    gh = rnn_states @ params["gru_whh"] + params["gru_bhh"][None, :]
    H = RNN_SIZE
    r = jax.nn.sigmoid(gi[:, :H] + gh[:, :H])
    z = jax.nn.sigmoid(gi[:, H:2 * H] + gh[:, H:2 * H])
    n = jnp.tanh(gi[:, 2 * H:] + r * gh[:, 2 * H:])
    h_new = (1.0 - z) * n + z * rnn_states
    values = (h_new @ params["critic_w"] + params["critic_b"][None, :])[:, 0]
    logits = h_new @ params["actor_w"] + params["actor_b"][None, :]
    return values, logits, h_new


def _close(a, b, atol=5e-2, rtol=5e-2):
    return bool(jnp.all(jnp.abs(a - b) <= atol + rtol * jnp.abs(b)))


def _check(params, fwd, B, seed):
    k_obs, k_rnn, k_gum = jax.random.split(jax.random.PRNGKey(seed), 3)
    obs = jax.random.normal(k_obs, (B, OBS_C, OBS_H, OBS_W), dtype=jnp.float32)
    rnn_states = jax.random.normal(k_rnn, (B, RNN_SIZE), dtype=jnp.float32)
    gumbel_noise = jax.random.gumbel(k_gum, (B, NUM_ACTIONS), dtype=jnp.float32)

    out = fwd(obs, rnn_states, gumbel_noise)
    jax.block_until_ready(out)

    assert out["values"].shape == (B,)
    assert out["action_logits"].shape == (B, NUM_ACTIONS)
    assert out["actions"].shape == (B,)
    assert out["log_prob_actions"].shape == (B,)
    assert out["new_rnn_states"].shape == (B, RNN_SIZE)

    ref_values, ref_logits, ref_h = reference_forward(params, obs, rnn_states)
    assert _close(out["values"], ref_values)
    assert _close(out["action_logits"], ref_logits)
    assert _close(out["new_rnn_states"], ref_h)
    assert bool(jnp.all((out["actions"] >= 0) & (out["actions"] < NUM_ACTIONS)))
    ref_logp = jax.nn.log_softmax(ref_logits, axis=-1)[jnp.arange(B), out["actions"]]
    assert _close(out["log_prob_actions"], ref_logp)
    return out


# ----------------------------------------------------------------------------
if __name__ == "__main__":
    key = jax.random.PRNGKey(0)
    params = init_params(key)
    prep = prepare_inference_params(params)

    fwd = jax.jit(functools.partial(actor_critic_forward, prep))

    # small spec-consistent batch (B=2, single tile)
    _check(params, fwd, B=2, seed=1)
    # ragged multi-tile batch exercising the cdiv grid + masked partial-block path (B=13, BT=8)
    _check(params, fwd, B=13, seed=2)

    print("KERNEL_OK")
</pallas_src>

<mosaic_0001>
module attributes {stable_mosaic.version = 11 : i64} {
  func.func @_fused_kernel(%arg0: i32, %arg1: memref<2x1024xf32, #tpu.memory_space<vmem>>, %arg2: memref<2x128xf32, #tpu.memory_space<vmem>>, %arg3: memref<1024x1024xbf16, #tpu.memory_space<vmem>>, %arg4: memref<1x1024xf32, #tpu.memory_space<vmem>>, %arg5: memref<1024x512xbf16, #tpu.memory_space<vmem>>, %arg6: memref<1x512xf32, #tpu.memory_space<vmem>>, %arg7: memref<512x64xbf16, #tpu.memory_space<vmem>>, %arg8: memref<1x64xf32, #tpu.memory_space<vmem>>, %arg9: memref<128x256xbf16, #tpu.memory_space<vmem>>, %arg10: memref<1x256xf32, #tpu.memory_space<vmem>>, %arg11: memref<64x128xbf16, #tpu.memory_space<vmem>>, %arg12: memref<1x128xf32, #tpu.memory_space<vmem>>, %arg13: memref<2x128xf32, #tpu.memory_space<vmem>>) attributes {dimension_semantics = [#tpu.dimension_semantics<parallel>], iteration_bounds = array<i64: 1>, scalar_prefetch = 0 : i64, scratch_operands = 0 : i64, tpu.core_type = #tpu.core_type<tc>, window_params = [{transform_indices = @transform_0, window_bounds = array<i64: 2, 1024>}, {transform_indices = @transform_1, window_bounds = array<i64: 2, 128>}, {pipeline_mode = #tpu.pipeline_mode<synchronous>, transform_indices = @transform_2, window_bounds = array<i64: 1024, 1024>}, {pipeline_mode = #tpu.pipeline_mode<synchronous>, transform_indices = @transform_3, window_bounds = array<i64: 1, 1024>}, {pipeline_mode = #tpu.pipeline_mode<synchronous>, transform_indices = @transform_4, window_bounds = array<i64: 1024, 512>}, {pipeline_mode = #tpu.pipeline_mode<synchronous>, transform_indices = @transform_5, window_bounds = array<i64: 1, 512>}, {pipeline_mode = #tpu.pipeline_mode<synchronous>, transform_indices = @transform_6, window_bounds = array<i64: 512, 64>}, {pipeline_mode = #tpu.pipeline_mode<synchronous>, transform_indices = @transform_7, window_bounds = array<i64: 1, 64>}, {pipeline_mode = #tpu.pipeline_mode<synchronous>, transform_indices = @transform_8, window_bounds = array<i64: 128, 256>}, {pipeline_mode = #tpu.pipeline_mode<synchronous>, transform_indices = @transform_9, window_bounds = array<i64: 1, 256>}, {pipeline_mode = #tpu.pipeline_mode<synchronous>, transform_indices = @transform_10, window_bounds = array<i64: 64, 128>}, {pipeline_mode = #tpu.pipeline_mode<synchronous>, transform_indices = @transform_11, window_bounds = array<i64: 1, 128>}, {transform_indices = @transform_12, window_bounds = array<i64: 2, 128>}]} {
    %c0 = arith.constant 0 : index
    %c0_0 = arith.constant 0 : index
    %0 = vector.load %arg1[%c0, %c0_0] : memref<2x1024xf32, #tpu.memory_space<vmem>>, vector<2x1024xf32>
    %1 = arith.truncf %0 : vector<2x1024xf32> to vector<2x1024xbf16>
    %c0_1 = arith.constant 0 : index
    %c0_2 = arith.constant 0 : index
    %2 = vector.load %arg3[%c0_1, %c0_2] : memref<1024x1024xbf16, #tpu.memory_space<vmem>>, vector<1024x1024xbf16>
    %cst = arith.constant dense<0.000000e+00> : vector<2x1024xf32>
    %3 = tpu.matmul %1, %2, %cst {dimension_numbers = #tpu.dot_dimension_numbers<[1], [0], [0], [1], [0, 0, 1, 1], [], []>} : vector<2x1024xbf16>, vector<1024x1024xbf16>, vector<2x1024xf32> -> vector<2x1024xf32>
    %c0_3 = arith.constant 0 : index
    %c0_4 = arith.constant 0 : index
    %4 = vector.load %arg4[%c0_3, %c0_4] : memref<1x1024xf32, #tpu.memory_space<vmem>>, vector<1x1024xf32>
    %5 = vector.broadcast %4 : vector<1x1024xf32> to vector<2x1024xf32>
    %6 = arith.addf %3, %5 : vector<2x1024xf32>
    %cst_5 = arith.constant 0.000000e+00 : f32
    %7 = vector.broadcast %cst_5 : f32 to vector<2x1024xf32>
    %8 = arith.maximumf %6, %7 : vector<2x1024xf32>
    %9 = arith.truncf %8 : vector<2x1024xf32> to vector<2x1024xbf16>
    %c0_6 = arith.constant 0 : index
    %c0_7 = arith.constant 0 : index
    %10 = vector.load %arg5[%c0_6, %c0_7] : memref<1024x512xbf16, #tpu.memory_space<vmem>>, vector<1024x512xbf16>
    %cst_8 = arith.constant dense<0.000000e+00> : vector<2x512xf32>
    %11 = tpu.matmul %9, %10, %cst_8 {dimension_numbers = #tpu.dot_dimension_numbers<[1], [0], [0], [1], [0, 0, 1, 1], [], []>} : vector<2x1024xbf16>, vector<1024x512xbf16>, vector<2x512xf32> -> vector<2x512xf32>
    %c0_9 = arith.constant 0 : index
    %c0_10 = arith.constant 0 : index
    %12 = vector.load %arg6[%c0_9, %c0_10] : memref<1x512xf32, #tpu.memory_space<vmem>>, vector<1x512xf32>
    %13 = vector.broadcast %12 : vector<1x512xf32> to vector<2x512xf32>
    %14 = arith.addf %11, %13 : vector<2x512xf32>
    %cst_11 = arith.constant 0.000000e+00 : f32
    %15 = vector.broadcast %cst_11 : f32 to vector<2x512xf32>
    %16 = arith.maximumf %14, %15 : vector<2x512xf32>
    %17 = arith.truncf %16 : vector<2x512xf32> to vector<2x512xbf16>
    %c0_12 = arith.constant 0 : index
    %c0_13 = arith.constant 0 : index
    %18 = vector.load %arg7[%c0_12, %c0_13] : memref<512x64xbf16, #tpu.memory_space<vmem>>, vector<512x64xbf16>
    %cst_14 = arith.constant dense<0.000000e+00> : vector<2x64xf32>
    %19 = tpu.matmul %17, %18, %cst_14 {dimension_numbers = #tpu.dot_dimension_numbers<[1], [0], [0], [1], [0, 0, 1, 1], [], []>} : vector<2x512xbf16>, vector<512x64xbf16>, vector<2x64xf32> -> vector<2x64xf32>
    %c0_15 = arith.constant 0 : index
    %c0_16 = arith.constant 0 : index
    %20 = vector.load %arg8[%c0_15, %c0_16] : memref<1x64xf32, #tpu.memory_space<vmem>>, vector<1x64xf32>
    %21 = vector.broadcast %20 : vector<1x64xf32> to vector<2x64xf32>
    %22 = arith.addf %19, %21 : vector<2x64xf32>
    %cst_17 = arith.constant 0.000000e+00 : f32
    %23 = vector.broadcast %cst_17 : f32 to vector<2x64xf32>
    %24 = arith.maximumf %22, %23 : vector<2x64xf32>
    %c0_18 = arith.constant 0 : index
    %c0_19 = arith.constant 0 : index
    %25 = vector.load %arg2[%c0_18, %c0_19] : memref<2x128xf32, #tpu.memory_space<vmem>>, vector<2x128xf32>
    %26 = vector.extract_strided_slice %25 {offsets = [0, 0], sizes = [2, 64], strides = [1, 1]} : vector<2x128xf32> to vector<2x64xf32>
    %27 = vector.extract_strided_slice %25 {offsets = [0, 64], sizes = [2, 6], strides = [1, 1]} : vector<2x128xf32> to vector<2x6xf32>
    %28 = tpu.concatenate %24, %26 in 1 : vector<2x64xf32>, vector<2x64xf32> -> vector<2x128xf32>
    %29 = arith.truncf %28 : vector<2x128xf32> to vector<2x128xbf16>
    %c0_20 = arith.constant 0 : index
    %c0_21 = arith.constant 0 : index
    %30 = vector.load %arg9[%c0_20, %c0_21] : memref<128x256xbf16, #tpu.memory_space<vmem>>, vector<128x256xbf16>
    %cst_22 = arith.constant dense<0.000000e+00> : vector<2x256xf32>
    %31 = tpu.matmul %29, %30, %cst_22 {dimension_numbers = #tpu.dot_dimension_numbers<[1], [0], [0], [1], [0, 0, 1, 1], [], []>} : vector<2x128xbf16>, vector<128x256xbf16>, vector<2x256xf32> -> vector<2x256xf32>
    %c0_23 = arith.constant 0 : index
    %c0_24 = arith.constant 0 : index
    %32 = vector.load %arg10[%c0_23, %c0_24] : memref<1x256xf32, #tpu.memory_space<vmem>>, vector<1x256xf32>
    %33 = vector.broadcast %32 : vector<1x256xf32> to vector<2x256xf32>
    %34 = arith.addf %31, %33 : vector<2x256xf32>
    %35 = vector.extract_strided_slice %34 {offsets = [0, 0], sizes = [2, 64], strides = [1, 1]} : vector<2x256xf32> to vector<2x64xf32>
    %36 = arith.negf %35 : vector<2x64xf32>
    %37 = math.exp %36 : vector<2x64xf32>
    %cst_25 = arith.constant 1.000000e+00 : f32
    %38 = vector.broadcast %cst_25 : f32 to vector<2x64xf32>
    %39 = arith.addf %38, %37 : vector<2x64xf32>
    %40 = arith.divf %38, %39 : vector<2x64xf32>
    %41 = vector.extract_strided_slice %34 {offsets = [0, 64], sizes = [2, 64], strides = [1, 1]} : vector<2x256xf32> to vector<2x64xf32>
    %42 = arith.negf %41 : vector<2x64xf32>
    %43 = math.exp %42 : vector<2x64xf32>
    %cst_26 = arith.constant 1.000000e+00 : f32
    %44 = vector.broadcast %cst_26 : f32 to vector<2x64xf32>
    %45 = arith.addf %44, %43 : vector<2x64xf32>
    %46 = arith.divf %44, %45 : vector<2x64xf32>
    %47 = vector.extract_strided_slice %34 {offsets = [0, 128], sizes = [2, 64], strides = [1, 1]} : vector<2x256xf32> to vector<2x64xf32>
    %48 = vector.extract_strided_slice %34 {offsets = [0, 192], sizes = [2, 64], strides = [1, 1]} : vector<2x256xf32> to vector<2x64xf32>
    %49 = arith.mulf %40, %48 : vector<2x64xf32>
    %50 = arith.addf %47, %49 : vector<2x64xf32>
    %51 = math.tanh %50 : vector<2x64xf32>
    %cst_27 = arith.constant 1.000000e+00 : f32
    %52 = vector.broadcast %cst_27 : f32 to vector<2x64xf32>
    %53 = arith.subf %52, %46 : vector<2x64xf32>
    %54 = arith.mulf %53, %51 : vector<2x64xf32>
    %55 = arith.mulf %46, %26 : vector<2x64xf32>
    %56 = arith.addf %54, %55 : vector<2x64xf32>
    %57 = arith.truncf %56 : vector<2x64xf32> to vector<2x64xbf16>
    %c0_28 = arith.constant 0 : index
    %c0_29 = arith.constant 0 : index
    %58 = vector.load %arg11[%c0_28, %c0_29] : memref<64x128xbf16, #tpu.memory_space<vmem>>, vector<64x128xbf16>
    %cst_30 = arith.constant dense<0.000000e+00> : vector<2x128xf32>
    %59 = tpu.matmul %57, %58, %cst_30 {dimension_numbers = #tpu.dot_dimension_numbers<[1], [0], [0], [1], [0, 0, 1, 1], [], []>} : vector<2x64xbf16>, vector<64x128xbf16>, vector<2x128xf32> -> vector<2x128xf32>
    %c0_31 = arith.constant 0 : index
    %c0_32 = arith.constant 0 : index
    %60 = vector.load %arg12[%c0_31, %c0_32] : memref<1x128xf32, #tpu.memory_space<vmem>>, vector<1x128xf32>
    %61 = vector.broadcast %60 : vector<1x128xf32> to vector<2x128xf32>
    %62 = arith.addf %59, %61 : vector<2x128xf32>
    %63 = vector.extract_strided_slice %62 {offsets = [0, 0], sizes = [2, 1], strides = [1, 1]} : vector<2x128xf32> to vector<2x1xf32>
    %64 = vector.extract_strided_slice %62 {offsets = [0, 1], sizes = [2, 6], strides = [1, 1]} : vector<2x128xf32> to vector<2x6xf32>
    %cst_33 = arith.constant dense<0xFF800000> : vector<2xf32>
    %65 = vector.multi_reduction <maximumf>, %64, %cst_33 [1] : vector<2x6xf32> to vector<2xf32>
    %66 = vector.shape_cast %65 : vector<2xf32> to vector<2x1xf32>
    %67 = vector.broadcast %66 : vector<2x1xf32> to vector<2x6xf32>
    %68 = arith.subf %64, %67 : vector<2x6xf32>
    %69 = math.exp %68 : vector<2x6xf32>
    %cst_34 = arith.constant dense<0.000000e+00> : vector<2xf32>
    %70 = vector.multi_reduction <add>, %69, %cst_34 [1] : vector<2x6xf32> to vector<2xf32>
    %71 = vector.shape_cast %70 : vector<2xf32> to vector<2x1xf32>
    %72 = math.log %71 : vector<2x1xf32>
    %73 = arith.addf %72, %66 : vector<2x1xf32>
    %74 = vector.broadcast %73 : vector<2x1xf32> to vector<2x6xf32>
    %75 = arith.subf %64, %74 : vector<2x6xf32>
    %76 = arith.addf %64, %27 : vector<2x6xf32>
    %cst_35 = arith.constant dense<0xFF800000> : vector<2xf32>
    %77 = vector.multi_reduction <maximumf>, %76, %cst_35 [1] : vector<2x6xf32> to vector<2xf32>
    %78 = vector.shape_cast %77 : vector<2xf32> to vector<2x1xf32>
    %79 = tpu.iota {dimensions = array<i32: 1>} : vector<2x6xi32>
    %80 = vector.broadcast %78 : vector<2x1xf32> to vector<2x6xf32>
    %81 = arith.cmpf oge, %76, %80 : vector<2x6xf32>
    %c6_i32 = arith.constant 6 : i32
    %82 = vector.broadcast %c6_i32 : i32 to vector<2x6xi32>
    %83 = arith.select %81, %79, %82 : vector<2x6xi1>, vector<2x6xi32>
    %cst_36 = arith.constant dense<2147483647> : vector<2xi32>
    %84 = vector.multi_reduction <minsi>, %83, %cst_36 [1] : vector<2x6xi32> to vector<2xi32>
    %85 = vector.shape_cast %84 : vector<2xi32> to vector<2x1xi32>
    %86 = vector.broadcast %85 : vector<2x1xi32> to vector<2x6xi32>
    %87 = arith.cmpi eq, %79, %86 : vector<2x6xi32>
    %cst_37 = arith.constant 0.000000e+00 : f32
    %88 = vector.broadcast %cst_37 : f32 to vector<2x6xf32>
    %89 = arith.select %87, %75, %88 : vector<2x6xi1>, vector<2x6xf32>
    %cst_38 = arith.constant dense<0.000000e+00> : vector<2xf32>
    %90 = vector.multi_reduction <add>, %89, %cst_38 [1] : vector<2x6xf32> to vector<2xf32>
    %91 = vector.shape_cast %90 : vector<2xf32> to vector<2x1xf32>
    %92 = arith.sitofp %85 : vector<2x1xi32> to vector<2x1xf32>
    %cst_39 = arith.constant 0.000000e+00 : f32
    %93 = vector.broadcast %cst_39 : f32 to vector<2x55xf32>
    %94 = tpu.concatenate %56, %64, %63, %92, %91, %93 in 1 : vector<2x64xf32>, vector<2x6xf32>, vector<2x1xf32>, vector<2x1xf32>, vector<2x1xf32>, vector<2x55xf32> -> vector<2x128xf32>
    %c0_40 = arith.constant 0 : index
    %c0_41 = arith.constant 0 : index
    %95 = vector.load %arg13[%c0_40, %c0_41] : memref<2x128xf32, #tpu.memory_space<vmem>>, vector<2x128xf32>
    tpu.vector_store %arg13[%c0_40, %c0_41], %94 {strides = array<i32>} : memref<2x128xf32, #tpu.memory_space<vmem>>, vector<2x128xf32>,
    return
  }
  func.func @transform_0(%arg0: i32) -> (i32, i32) {
    %c0_i32 = arith.constant 0 : i32
    %c0_i32_0 = arith.constant 0 : i32
    return %arg0, %c0_i32 : i32, i32
  }
  func.func @transform_1(%arg0: i32) -> (i32, i32) {
    %c0_i32 = arith.constant 0 : i32
    %c0_i32_0 = arith.constant 0 : i32
    return %arg0, %c0_i32 : i32, i32
  }
  func.func @transform_2(%arg0: i32) -> (i32, i32) {
    %c0_i32 = arith.constant 0 : i32
    %c0_i32_0 = arith.constant 0 : i32
    %c0_i32_1 = arith.constant 0 : i32
    return %c0_i32, %c0_i32_0 : i32, i32
  }
  func.func @transform_3(%arg0: i32) -> (i32, i32) {
    %c0_i32 = arith.constant 0 : i32
    %c0_i32_0 = arith.constant 0 : i32
    %c0_i32_1 = arith.constant 0 : i32
    return %c0_i32, %c0_i32_0 : i32, i32
  }
  func.func @transform_4(%arg0: i32) -> (i32, i32) {
    %c0_i32 = arith.constant 0 : i32
    %c0_i32_0 = arith.constant 0 : i32
    %c0_i32_1 = arith.constant 0 : i32
    return %c0_i32, %c0_i32_0 : i32, i32
  }
  func.func @transform_5(%arg0: i32) -> (i32, i32) {
    %c0_i32 = arith.constant 0 : i32
    %c0_i32_0 = arith.constant 0 : i32
    %c0_i32_1 = arith.constant 0 : i32
    return %c0_i32, %c0_i32_0 : i32, i32
  }
  func.func @transform_6(%arg0: i32) -> (i32, i32) {
    %c0_i32 = arith.constant 0 : i32
    %c0_i32_0 = arith.constant 0 : i32
    %c0_i32_1 = arith.constant 0 : i32
    return %c0_i32, %c0_i32_0 : i32, i32
  }
  func.func @transform_7(%arg0: i32) -> (i32, i32) {
    %c0_i32 = arith.constant 0 : i32
    %c0_i32_0 = arith.constant 0 : i32
    %c0_i32_1 = arith.constant 0 : i32
    return %c0_i32, %c0_i32_0 : i32, i32
  }
  func.func @transform_8(%arg0: i32) -> (i32, i32) {
    %c0_i32 = arith.constant 0 : i32
    %c0_i32_0 = arith.constant 0 : i32
    %c0_i32_1 = arith.constant 0 : i32
    return %c0_i32, %c0_i32_0 : i32, i32
  }
  func.func @transform_9(%arg0: i32) -> (i32, i32) {
    %c0_i32 = arith.constant 0 : i32
    %c0_i32_0 = arith.constant 0 : i32
    %c0_i32_1 = arith.constant 0 : i32
    return %c0_i32, %c0_i32_0 : i32, i32
  }
  func.func @transform_10(%arg0: i32) -> (i32, i32) {
    %c0_i32 = arith.constant 0 : i32
    %c0_i32_0 = arith.constant 0 : i32
    %c0_i32_1 = arith.constant 0 : i32
    return %c0_i32, %c0_i32_0 : i32, i32
  }
  func.func @transform_11(%arg0: i32) -> (i32, i32) {
    %c0_i32 = arith.constant 0 : i32
    %c0_i32_0 = arith.constant 0 : i32
    %c0_i32_1 = arith.constant 0 : i32
    return %c0_i32, %c0_i32_0 : i32, i32
  }
  func.func @transform_12(%arg0: i32) -> (i32, i32) {
    %c0_i32 = arith.constant 0 : i32
    %c0_i32_0 = arith.constant 0 : i32
    return %arg0, %c0_i32 : i32, i32
  }
}

</mosaic_0001>

<llo_original>
// kernel: actor_critic_forward.1
$region0: #{actor_critic_forward.1}
  #allocation0 [shape = 'u32[]', space=smem, size = 0x4, offset = 0x4, fixed_abs, tag = 'smem constant byte address 0x4 - core index']
  #allocation1 [shape = 'u32[144,128]{1,0:T(1,128)}', space=vmem, size = 0x12000, scoped, tag = 'internal scratch']
  %s0 = inlined_call_operand.vmem [shape: f32[2,1024], index: 0, kind: input, shape index: {}]
  %s1 = inlined_call_operand.vmem [shape: f32[2,128], index: 1, kind: input, shape index: {}]
  %s2 = inlined_call_operand.vmem [shape: bf16[1024,1024], index: 2, kind: input, shape index: {}]
  %s3 = inlined_call_operand.vmem [shape: f32[1,1024], index: 3, kind: input, shape index: {}]
  %s4 = inlined_call_operand.vmem [shape: bf16[1024,512], index: 4, kind: input, shape index: {}]
  %s5 = inlined_call_operand.vmem [shape: f32[1,512], index: 5, kind: input, shape index: {}]
  %s6 = inlined_call_operand.vmem [shape: bf16[512,64], index: 6, kind: input, shape index: {}]
  %s7 = inlined_call_operand.vmem [shape: f32[1,64], index: 7, kind: input, shape index: {}]
  %s8 = inlined_call_operand.vmem [shape: bf16[128,256], index: 8, kind: input, shape index: {}]
  %s9 = inlined_call_operand.vmem [shape: f32[1,256], index: 9, kind: input, shape index: {}]
  %s10 = inlined_call_operand.vmem [shape: bf16[64,128], index: 10, kind: input, shape index: {}]
  %s11 = inlined_call_operand.vmem [shape: f32[1,128], index: 11, kind: input, shape index: {}]
  %s12 = inlined_call_operand.vmem [shape: f32[2,128], index: 12, kind: output, shape index: {}]
  %s13 = sld [smem:[#allocation0]]
  $region58: #{actor_critic_forward.1} parent=0
    _
  %s15 = ssub.s32 1, %s13
  %s16 = scalar_select 0, %s15, %s13
  // Predicated region
  $region2: #{actor_critic_forward.1} parent=0 // pred_check
    _
  $region3: #{actor_critic_forward.1} parent=0 // pred_check_branch
    %18 = sbr.rel (0) target = $region5
  $region4: #{actor_critic_forward.1} parent=0 // pred_region
    _
  $region5: #{actor_critic_forward.1} parent=0 // pred_fallthru
    _
  // Predicated region
  $region6: #{actor_critic_forward.1} parent=0 // pred_check
    _
  $region7: #{actor_critic_forward.1} parent=0 // pred_check_branch
    %20 = sbr.rel (0) target = $region9
  $region8: #{actor_critic_forward.1} parent=0 // pred_region
    _
  $region9: #{actor_critic_forward.1} parent=0 // pred_fallthru
    _
  // Predicated region
  $region10: #{actor_critic_forward.1} parent=0 // pred_check
    _
  $region11: #{actor_critic_forward.1} parent=0 // pred_check_branch
    %22 = sbr.rel (0) target = $region13
  $region12: #{actor_critic_forward.1} parent=0 // pred_region
    _
  $region13: #{actor_critic_forward.1} parent=0 // pred_fallthru
    _
  // Predicated region
  $region14: #{actor_critic_forward.1} parent=0 // pred_check
    _
  $region15: #{actor_critic_forward.1} parent=0 // pred_check_branch
    %24 = sbr.rel (0) target = $region17
  $region16: #{actor_critic_forward.1} parent=0 // pred_region
    _
  $region17: #{actor_critic_forward.1} parent=0 // pred_fallthru
    _
  // Predicated region
  $region18: #{actor_critic_forward.1} parent=0 // pred_check
    _
  $region19: #{actor_critic_forward.1} parent=0 // pred_check_branch
    %26 = sbr.rel (0) target = $region21
  $region20: #{actor_critic_forward.1} parent=0 // pred_region
    _
  $region21: #{actor_critic_forward.1} parent=0 // pred_fallthru
    _
  // Predicated region
  $region22: #{actor_critic_forward.1} parent=0 // pred_check
    _
  $region23: #{actor_critic_forward.1} parent=0 // pred_check_branch
    %28 = sbr.rel (0) target = $region25
  $region24: #{actor_critic_forward.1} parent=0 // pred_region
    _
  $region25: #{actor_critic_forward.1} parent=0 // pred_fallthru
    _
  // Predicated region
  $region26: #{actor_critic_forward.1} parent=0 // pred_check
    _
  $region27: #{actor_critic_forward.1} parent=0 // pred_check_branch
    %30 = sbr.rel (0) target = $region29
  $region28: #{actor_critic_forward.1} parent=0 // pred_region
    _
  $region29: #{actor_critic_forward.1} parent=0 // pred_fallthru
    _
  // Predicated region
  $region30: #{actor_critic_forward.1} parent=0 // pred_check
    _
  $region31: #{actor_critic_forward.1} parent=0 // pred_check_branch
    %32 = sbr.rel (0) target = $region33
  $region32: #{actor_critic_forward.1} parent=0 // pred_region
    _
  $region33: #{actor_critic_forward.1} parent=0 // pred_fallthru
    _
  // Predicated region
  $region34: #{actor_critic_forward.1} parent=0 // pred_check
    _
  $region35: #{actor_critic_forward.1} parent=0 // pred_check_branch
    %34 = sbr.rel (0) target = $region37
  $region36: #{actor_critic_forward.1} parent=0 // pred_region
    _
  $region37: #{actor_critic_forward.1} parent=0 // pred_fallthru
    _
  // Predicated region
  $region38: #{actor_critic_forward.1} parent=0 // pred_check
    _
  $region39: #{actor_critic_forward.1} parent=0 // pred_check_branch
    %36 = sbr.rel (0) target = $region41
  $region40: #{actor_critic_forward.1} parent=0 // pred_region
    _
  $region41: #{actor_critic_forward.1} parent=0 // pred_fallthru
    _
  // Predicated region
  $region42: #{actor_critic_forward.1} parent=0 // pred_check
    _
  $region43: #{actor_critic_forward.1} parent=0 // pred_check_branch
    %38 = sbr.rel (0) target = $region45
  $region44: #{actor_critic_forward.1} parent=0 // pred_region
    _
  $region45: #{actor_critic_forward.1} parent=0 // pred_fallthru
    _
  // Predicated region
  $region46: #{actor_critic_forward.1} parent=0 // pred_check
    _
  $region47: #{actor_critic_forward.1} parent=0 // pred_check_branch
    %40 = sbr.rel (0) target = $region49
  $region48: #{actor_critic_forward.1} parent=0 // pred_region
    _
  $region49: #{actor_critic_forward.1} parent=0 // pred_fallthru
    _
  %v42 = vld [vmem:[%s0] sm:$0xff]
  %v43 = vld [vmem:[%s0 + $0x8] sm:$0xff]
  %v46 = vcombine.high %v42, %v42
  %v48 = vunpack.c.l.s4 1983009808
  %v49 = vunpack.c.0.s8 %v48
  %v50 = vlaneseq
  %v51 = vshrl.u32 %v50, 7
  %v52 = vsub.s32 %v49, %v51
  %v53 = vrot.slane %v42, %v52
  %v55 = vunpack.c.l.s4 1983009808
  %v56 = vunpack.c.0.s8 %v55
  %v57 = vlaneseq
  %v58 = vshrl.u32 %v57, 7
  %v59 = vsub.s32 %v56, %v58
  %v60 = vrot.slane %v46, %v59
  %v61 = vcombine.high %v53, %v53
  %v62 = vcombine.high %v60, %v60
  %v63 = vcombine.high %v43, %v43
  %v65 = vunpack.c.l.s4 1983009808
  %v66 = vunpack.c.0.s8 %v65
  %v67 = vlaneseq
  %v68 = vshrl.u32 %v67, 7
  %v69 = vsub.s32 %v66, %v68
  %v70 = vrot.slane %v43, %v69
  %v72 = vunpack.c.l.s4 1983009808
  %v73 = vunpack.c.0.s8 %v72
  %v74 = vlaneseq
  %v75 = vshrl.u32 %v74, 7
  %v76 = vsub.s32 %v73, %v75
  %v77 = vrot.slane %v63, %v76
  %v78 = vcombine.high %v70, %v70
  %v79 = vcombine.high %v77, %v77
  %v88 = vpack.c.bf16 %v53, %v53
  %v89 = vpack.c.bf16 %v61, %v61
  %v90 = vpack.c.bf16 %v60, %v60
  %v91 = vpack.c.bf16 %v62, %v62
  %v92 = vpack.c.bf16 %v70, %v70
  %v93 = vpack.c.bf16 %v78, %v78
  %v94 = vpack.c.bf16 %v77, %v77
  %v95 = vpack.c.bf16 %v79, %v79
  %v96 = vld [vmem:[%s2] sm:$0xff]
  %v97 = vld [vmem:[%s2 + $0x8] sm:$0xff]
  %v98 = vld [vmem:[%s2 + $0x10] sm:$0xff]
  %v99 = vld [vmem:[%s2 + $0x18] sm:$0xff]
  %v100 = vld [vmem:[%s2 + $0x20] sm:$0xff]
  %v101 = vld [vmem:[%s2 + $0x28] sm:$0xff]
  %v102 = vld [vmem:[%s2 + $0x30] sm:$0xff]
  %v103 = vld [vmem:[%s2 + $0x38] sm:$0xff]
  %v104 = vld [vmem:[%s2 + $0x40] sm:$0xff]
  %v105 = vld [vmem:[%s2 + $0x48] sm:$0xff]
  %v106 = vld [vmem:[%s2 + $0x50] sm:$0xff]
  %v107 = vld [vmem:[%s2 + $0x58] sm:$0xff]
  %v108 = vld [vmem:[%s2 + $0x60] sm:$0xff]
  %v109 = vld [vmem:[%s2 + $0x68] sm:$0xff]
  %v110 = vld [vmem:[%s2 + $0x70] sm:$0xff]
  %v111 = vld [vmem:[%s2 + $0x78] sm:$0xff]
  %v112 = vld [vmem:[%s2 + $0x80] sm:$0xff]
  %v113 = vld [vmem:[%s2 + $0x88] sm:$0xff]
  %v114 = vld [vmem:[%s2 + $0x90] sm:$0xff]
  %v115 = vld [vmem:[%s2 + $0x98] sm:$0xff]
  %v116 = vld [vmem:[%s2 + $0xa0] sm:$0xff]
  %v117 = vld [vmem:[%s2 + $0xa8] sm:$0xff]
  %v118 = vld [vmem:[%s2 + $0xb0] sm:$0xff]
  %v119 = vld [vmem:[%s2 + $0xb8] sm:$0xff]
  %v120 = vld [vmem:[%s2 + $0xc0] sm:$0xff]
  %v121 = vld [vmem:[%s2 + $0xc8] sm:$0xff]
  %v122 = vld [vmem:[%s2 + $0xd0] sm:$0xff]
  %v123 = vld [vmem:[%s2 + $0xd8] sm:$0xff]
  %v124 = vld [vmem:[%s2 + $0xe0] sm:$0xff]
  %v125 = vld [vmem:[%s2 + $0xe8] sm:$0xff]
  %v126 = vld [vmem:[%s2 + $0xf0] sm:$0xff]
  %v127 = vld [vmem:[%s2 + $0xf8] sm:$0xff]
  %v128 = vld [vmem:[%s2 + $0x100] sm:$0xff]
  %v129 = vld [vmem:[%s2 + $0x108] sm:$0xff]
  %v130 = vld [vmem:[%s2 + $0x110] sm:$0xff]
  %v131 = vld [vmem:[%s2 + $0x118] sm:$0xff]
  %v132 = vld [vmem:[%s2 + $0x120] sm:$0xff]
  %v133 = vld [vmem:[%s2 + $0x128] sm:$0xff]
  %v134 = vld [vmem:[%s2 + $0x130] sm:$0xff]
  %v135 = vld [vmem:[%s2 + $0x138] sm:$0xff]
  %v136 = vld [vmem:[%s2 + $0x140] sm:$0xff]
  %v137 = vld [vmem:[%s2 + $0x148] sm:$0xff]
  %v138 = vld [vmem:[%s2 + $0x150] sm:$0xff]
  %v139 = vld [vmem:[%s2 + $0x158] sm:$0xff]
  %v140 = vld [vmem:[%s2 + $0x160] sm:$0xff]
  %v141 = vld [vmem:[%s2 + $0x168] sm:$0xff]
  %v142 = vld [vmem:[%s2 + $0x170] sm:$0xff]
  %v143 = vld [vmem:[%s2 + $0x178] sm:$0xff]
  %v144 = vld [vmem:[%s2 + $0x180] sm:$0xff]
  %v145 = vld [vmem:[%s2 + $0x188] sm:$0xff]
  %v146 = vld [vmem:[%s2 + $0x190] sm:$0xff]
  %v147 = vld [vmem:[%s2 + $0x198] sm:$0xff]
  %v148 = vld [vmem:[%s2 + $0x1a0] sm:$0xff]
  %v149 = vld [vmem:[%s2 + $0x1a8] sm:$0xff]
  %v150 = vld [vmem:[%s2 + $0x1b0] sm:$0xff]
  %v151 = vld [vmem:[%s2 + $0x1b8] sm:$0xff]
  %v152 = vld [vmem:[%s2 + $0x1c0] sm:$0xff]
  %v153 = vld [vmem:[%s2 + $0x1c8] sm:$0xff]
  %v154 = vld [vmem:[%s2 + $0x1d0] sm:$0xff]
  %v155 = vld [vmem:[%s2 + $0x1d8] sm:$0xff]
  %v156 = vld [vmem:[%s2 + $0x1e0] sm:$0xff]
  %v157 = vld [vmem:[%s2 + $0x1e8] sm:$0xff]
  %v158 = vld [vmem:[%s2 + $0x1f0] sm:$0xff]
  %v159 = vld [vmem:[%s2 + $0x1f8] sm:$0xff]
  %v160 = vld [vmem:[%s2 + $0x200] sm:$0xff]
  %v161 = vld [vmem:[%s2 + $0x208] sm:$0xff]
  %v162 = vld [vmem:[%s2 + $0x210] sm:$0xff]
  %v163 = vld [vmem:[%s2 + $0x218] sm:$0xff]
  %v164 = vld [vmem:[%s2 + $0x220] sm:$0xff]
  %v165 = vld [vmem:[%s2 + $0x228] sm:$0xff]
  %v166 = vld [vmem:[%s2 + $0x230] sm:$0xff]
  %v167 = vld [vmem:[%s2 + $0x238] sm:$0xff]
  %v168 = vld [vmem:[%s2 + $0x240] sm:$0xff]
  %v169 = vld [vmem:[%s2 + $0x248] sm:$0xff]
  %v170 = vld [vmem:[%s2 + $0x250] sm:$0xff]
  %v171 = vld [vmem:[%s2 + $0x258] sm:$0xff]
  %v172 = vld [vmem:[%s2 + $0x260] sm:$0xff]
  %v173 = vld [vmem:[%s2 + $0x268] sm:$0xff]
  %v174 = vld [vmem:[%s2 + $0x270] sm:$0xff]
  %v175 = vld [vmem:[%s2 + $0x278] sm:$0xff]
  %v176 = vld [vmem:[%s2 + $0x280] sm:$0xff]
  %v177 = vld [vmem:[%s2 + $0x288] sm:$0xff]
  %v178 = vld [vmem:[%s2 + $0x290] sm:$0xff]
  %v179 = vld [vmem:[%s2 + $0x298] sm:$0xff]
  %v180 = vld [vmem:[%s2 + $0x2a0] sm:$0xff]
  %v181 = vld [vmem:[%s2 + $0x2a8] sm:$0xff]
  %v182 = vld [vmem:[%s2 + $0x2b0] sm:$0xff]
  %v183 = vld [vmem:[%s2 + $0x2b8] sm:$0xff]
  %v184 = vld [vmem:[%s2 + $0x2c0] sm:$0xff]
  %v185 = vld [vmem:[%s2 + $0x2c8] sm:$0xff]
  %v186 = vld [vmem:[%s2 + $0x2d0] sm:$0xff]
  %v187 = vld [vmem:[%s2 + $0x2d8] sm:$0xff]
  %v188 = vld [vmem:[%s2 + $0x2e0] sm:$0xff]
  %v189 = vld [vmem:[%s2 + $0x2e8] sm:$0xff]
  %v190 = vld [vmem:[%s2 + $0x2f0] sm:$0xff]
  %v191 = vld [vmem:[%s2 + $0x2f8] sm:$0xff]
  %v192 = vld [vmem:[%s2 + $0x300] sm:$0xff]
  %v193 = vld [vmem:[%s2 + $0x308] sm:$0xff]
  %v194 = vld [vmem:[%s2 + $0x310] sm:$0xff]
  %v195 = vld [vmem:[%s2 + $0x318] sm:$0xff]
  %v196 = vld [vmem:[%s2 + $0x320] sm:$0xff]
  %v197 = vld [vmem:[%s2 + $0x328] sm:$0xff]
  %v198 = vld [vmem:[%s2 + $0x330] sm:$0xff]
  %v199 = vld [vmem:[%s2 + $0x338] sm:$0xff]
  %v200 = vld [vmem:[%s2 + $0x340] sm:$0xff]
  %v201 = vld [vmem:[%s2 + $0x348] sm:$0xff]
  %v202 = vld [vmem:[%s2 + $0x350] sm:$0xff]
  %v203 = vld [vmem:[%s2 + $0x358] sm:$0xff]
  %v204 = vld [vmem:[%s2 + $0x360] sm:$0xff]
  %v205 = vld [vmem:[%s2 + $0x368] sm:$0xff]
  %v206 = vld [vmem:[%s2 + $0x370] sm:$0xff]
  %v207 = vld [vmem:[%s2 + $0x378] sm:$0xff]
  %v208 = vld [vmem:[%s2 + $0x380] sm:$0xff]
  %v209 = vld [vmem:[%s2 + $0x388] sm:$0xff]
  %v210 = vld [vmem:[%s2 + $0x390] sm:$0xff]
  %v211 = vld [vmem:[%s2 + $0x398] sm:$0xff]
  %v212 = vld [vmem:[%s2 + $0x3a0] sm:$0xff]
  %v213 = vld [vmem:[%s2 + $0x3a8] sm:$0xff]
  %v214 = vld [vmem:[%s2 + $0x3b0] sm:$0xff]
  %v215 = vld [vmem:[%s2 + $0x3b8] sm:$0xff]
  %v216 = vld [vmem:[%s2 + $0x3c0] sm:$0xff]
  %v217 = vld [vmem:[%s2 + $0x3c8] sm:$0xff]
  %v218 = vld [vmem:[%s2 + $0x3d0] sm:$0xff]
  %v219 = vld [vmem:[%s2 + $0x3d8] sm:$0xff]
  %v220 = vld [vmem:[%s2 + $0x3e0] sm:$0xff]
  %v221 = vld [vmem:[%s2 + $0x3e8] sm:$0xff]
  %v222 = vld [vmem:[%s2 + $0x3f0] sm:$0xff]
  %v223 = vld [vmem:[%s2 + $0x3f8] sm:$0xff]
  %v224 = vld [vmem:[%s2 + $0x400] sm:$0xff]
  %v225 = vld [vmem:[%s2 + $0x408] sm:$0xff]
  %v226 = vld [vmem:[%s2 + $0x410] sm:$0xff]
  %v227 = vld [vmem:[%s2 + $0x418] sm:$0xff]
  %v228 = vld [vmem:[%s2 + $0x420] sm:$0xff]
  %v229 = vld [vmem:[%s2 + $0x428] sm:$0xff]
  %v230 = vld [vmem:[%s2 + $0x430] sm:$0xff]
  %v231 = vld [vmem:[%s2 + $0x438] sm:$0xff]
  %v232 = vld [vmem:[%s2 + $0x440] sm:$0xff]
  %v233 = vld [vmem:[%s2 + $0x448] sm:$0xff]
  %v234 = vld [vmem:[%s2 + $0x450] sm:$0xff]
  %v235 = vld [vmem:[%s2 + $0x458] sm:$0xff]
  %v236 = vld [vmem:[%s2 + $0x460] sm:$0xff]
  %v237 = vld [vmem:[%s2 + $0x468] sm:$0xff]
  %v238 = vld [vmem:[%s2 + $0x470] sm:$0xff]
  %v239 = vld [vmem:[%s2 + $0x478] sm:$0xff]
  %v240 = vld [vmem:[%s2 + $0x480] sm:$0xff]
  %v241 = vld [vmem:[%s2 + $0x488] sm:$0xff]
  %v242 = vld [vmem:[%s2 + $0x490] sm:$0xff]
  %v243 = vld [vmem:[%s2 + $0x498] sm:$0xff]
  %v244 = vld [vmem:[%s2 + $0x4a0] sm:$0xff]
  %v245 = vld [vmem:[%s2 + $0x4a8] sm:$0xff]
  %v246 = vld [vmem:[%s2 + $0x4b0] sm:$0xff]
  %v247 = vld [vmem:[%s2 + $0x4b8] sm:$0xff]
  %v248 = vld [vmem:[%s2 + $0x4c0] sm:$0xff]
  %v249 = vld [vmem:[%s2 + $0x4c8] sm:$0xff]
  %v250 = vld [vmem:[%s2 + $0x4d0] sm:$0xff]
  %v251 = vld [vmem:[%s2 + $0x4d8] sm:$0xff]
  %v252 = vld [vmem:[%s2 + $0x4e0] sm:$0xff]
  %v253 = vld [vmem:[%s2 + $0x4e8] sm:$0xff]
  %v254 = vld [vmem:[%s2 + $0x4f0] sm:$0xff]
  %v255 = vld [vmem:[%s2 + $0x4f8] sm:$0xff]
  %v256 = vld [vmem:[%s2 + $0x500] sm:$0xff]
  %v257 = vld [vmem:[%s2 + $0x508] sm:$0xff]
  %v258 = vld [vmem:[%s2 + $0x510] sm:$0xff]
  %v259 = vld [vmem:[%s2 + $0x518] sm:$0xff]
  %v260 = vld [vmem:[%s2 + $0x520] sm:$0xff]
  %v261 = vld [vmem:[%s2 + $0x528] sm:$0xff]
  %v262 = vld [vmem:[%s2 + $0x530] sm:$0xff]
  %v263 = vld [vmem:[%s2 + $0x538] sm:$0xff]
  %v264 = vld [vmem:[%s2 + $0x540] sm:$0xff]
  %v265 = vld [vmem:[%s2 + $0x548] sm:$0xff]
  %v266 = vld [vmem:[%s2 + $0x550] sm:$0xff]
  %v267 = vld [vmem:[%s2 + $0x558] sm:$0xff]
  %v268 = vld [vmem:[%s2 + $0x560] sm:$0xff]
  %v269 = vld [vmem:[%s2 + $0x568] sm:$0xff]
  %v270 = vld [vmem:[%s2 + $0x570] sm:$0xff]
  %v271 = vld [vmem:[%s2 + $0x578] sm:$0xff]
  %v272 = vld [vmem:[%s2 + $0x580] sm:$0xff]
  %v273 = vld [vmem:[%s2 + $0x588] sm:$0xff]
  %v274 = vld [vmem:[%s2 + $0x590] sm:$0xff]
  %v275 = vld [vmem:[%s2 + $0x598] sm:$0xff]
  %v276 = vld [vmem:[%s2 + $0x5a0] sm:$0xff]
  %v277 = vld [vmem:[%s2 + $0x5a8] sm:$0xff]
  %v278 = vld [vmem:[%s2 + $0x5b0] sm:$0xff]
  %v279 = vld [vmem:[%s2 + $0x5b8] sm:$0xff]
  %v280 = vld [vmem:[%s2 + $0x5c0] sm:$0xff]
  %v281 = vld [vmem:[%s2 + $0x5c8] sm:$0xff]
  %v282 = vld [vmem:[%s2 + $0x5d0] sm:$0xff]
  %v283 = vld [vmem:[%s2 + $0x5d8] sm:$0xff]
  %v284 = vld [vmem:[%s2 + $0x5e0] sm:$0xff]
  %v285 = vld [vmem:[%s2 + $0x5e8] sm:$0xff]
  %v286 = vld [vmem:[%s2 + $0x5f0] sm:$0xff]
  %v287 = vld [vmem:[%s2 + $0x5f8] sm:$0xff]
  %v288 = vld [vmem:[%s2 + $0x600] sm:$0xff]
  %v289 = vld [vmem:[%s2 + $0x608] sm:$0xff]
  %v290 = vld [vmem:[%s2 + $0x610] sm:$0xff]
  %v291 = vld [vmem:[%s2 + $0x618] sm:$0xff]
  %v292 = vld [vmem:[%s2 + $0x620] sm:$0xff]
  %v293 = vld [vmem:[%s2 + $0x628] sm:$0xff]
  %v294 = vld [vmem:[%s2 + $0x630] sm:$0xff]
  %v295 = vld [vmem:[%s2 + $0x638] sm:$0xff]
  %v296 = vld [vmem:[%s2 + $0x640] sm:$0xff]
  %v297 = vld [vmem:[%s2 + $0x648] sm:$0xff]
  %v298 = vld [vmem:[%s2 + $0x650] sm:$0xff]
  %v299 = vld [vmem:[%s2 + $0x658] sm:$0xff]
  %v300 = vld [vmem:[%s2 + $0x660] sm:$0xff]
  %v301 = vld [vmem:[%s2 + $0x668] sm:$0xff]
  %v302 = vld [vmem:[%s2 + $0x670] sm:$0xff]
  %v303 = vld [vmem:[%s2 + $0x678] sm:$0xff]
  %v304 = vld [vmem:[%s2 + $0x680] sm:$0xff]
  %v305 = vld [vmem:[%s2 + $0x688] sm:$0xff]
  %v306 = vld [vmem:[%s2 + $0x690] sm:$0xff]
  %v307 = vld [vmem:[%s2 + $0x698] sm:$0xff]
  %v308 = vld [vmem:[%s2 + $0x6a0] sm:$0xff]
  %v309 = vld [vmem:[%s2 + $0x6a8] sm:$0xff]
  %v310 = vld [vmem:[%s2 + $0x6b0] sm:$0xff]
  %v311 = vld [vmem:[%s2 + $0x6b8] sm:$0xff]
  %v312 = vld [vmem:[%s2 + $0x6c0] sm:$0xff]
  %v313 = vld [vmem:[%s2 + $0x6c8] sm:$0xff]
  %v314 = vld [vmem:[%s2 + $0x6d0] sm:$0xff]
  %v315 = vld [vmem:[%s2 + $0x6d8] sm:$0xff]
  %v316 = vld [vmem:[%s2 + $0x6e0] sm:$0xff]
  %v317 = vld [vmem:[%s2 + $0x6e8] sm:$0xff]
  %v318 = vld [vmem:[%s2 + $0x6f0] sm:$0xff]
  %v319 = vld [vmem:[%s2 + $0x6f8] sm:$0xff]
  %v320 = vld [vmem:[%s2 + $0x700] sm:$0xff]
  %v321 = vld [vmem:[%s2 + $0x708] sm:$0xff]
  %v322 = vld [vmem:[%s2 + $0x710] sm:$0xff]
  %v323 = vld [vmem:[%s2 + $0x718] sm:$0xff]
  %v324 = vld [vmem:[%s2 + $0x720] sm:$0xff]
  %v325 = vld [vmem:[%s2 + $0x728] sm:$0xff]
  %v326 = vld [vmem:[%s2 + $0x730] sm:$0xff]
  %v327 = vld [vmem:[%s2 + $0x738] sm:$0xff]
  %v328 = vld [vmem:[%s2 + $0x740] sm:$0xff]
  %v329 = vld [vmem:[%s2 + $0x748] sm:$0xff]
  %v330 = vld [vmem:[%s2 + $0x750] sm:$0xff]
  %v331 = vld [vmem:[%s2 + $0x758] sm:$0xff]
  %v332 = vld [vmem:[%s2 + $0x760] sm:$0xff]
  %v333 = vld [vmem:[%s2 + $0x768] sm:$0xff]
  %v334 = vld [vmem:[%s2 + $0x770] sm:$0xff]
  %v335 = vld [vmem:[%s2 + $0x778] sm:$0xff]
  %v336 = vld [vmem:[%s2 + $0x780] sm:$0xff]
  %v337 = vld [vmem:[%s2 + $0x788] sm:$0xff]
  %v338 = vld [vmem:[%s2 + $0x790] sm:$0xff]
  %v339 = vld [vmem:[%s2 + $0x798] sm:$0xff]
  %v340 = vld [vmem:[%s2 + $0x7a0] sm:$0xff]
  %v341 = vld [vmem:[%s2 + $0x7a8] sm:$0xff]
  %v342 = vld [vmem:[%s2 + $0x7b0] sm:$0xff]
  %v343 = vld [vmem:[%s2 + $0x7b8] sm:$0xff]
  %v344 = vld [vmem:[%s2 + $0x7c0] sm:$0xff]
  %v345 = vld [vmem:[%s2 + $0x7c8] sm:$0xff]
  %v346 = vld [vmem:[%s2 + $0x7d0] sm:$0xff]
  %v347 = vld [vmem:[%s2 + $0x7d8] sm:$0xff]
  %v348 = vld [vmem:[%s2 + $0x7e0] sm:$0xff]
  %v349 = vld [vmem:[%s2 + $0x7e8] sm:$0xff]
  %v350 = vld [vmem:[%s2 + $0x7f0] sm:$0xff]
  %v351 = vld [vmem:[%s2 + $0x7f8] sm:$0xff]
  %v352 = vld [vmem:[%s2 + $0x800] sm:$0xff]
  %v353 = vld [vmem:[%s2 + $0x808] sm:$0xff]
  %v354 = vld [vmem:[%s2 + $0x810] sm:$0xff]
  %v355 = vld [vmem:[%s2 + $0x818] sm:$0xff]
  %v356 = vld [vmem:[%s2 + $0x820] sm:$0xff]
  %v357 = vld [vmem:[%s2 + $0x828] sm:$0xff]
  %v358 = vld [vmem:[%s2 + $0x830] sm:$0xff]
  %v359 = vld [vmem:[%s2 + $0x838] sm:$0xff]
  %v360 = vld [vmem:[%s2 + $0x840] sm:$0xff]
  %v361 = vld [vmem:[%s2 + $0x848] sm:$0xff]
  %v362 = vld [vmem:[%s2 + $0x850] sm:$0xff]
  %v363 = vld [vmem:[%s2 + $0x858] sm:$0xff]
  %v364 = vld [vmem:[%s2 + $0x860] sm:$0xff]
  %v365 = vld [vmem:[%s2 + $0x868] sm:$0xff]
  %v366 = vld [vmem:[%s2 + $0x870] sm:$0xff]
  %v367 = vld [vmem:[%s2 + $0x878] sm:$0xff]
  %v368 = vld [vmem:[%s2 + $0x880] sm:$0xff]
  %v369 = vld [vmem:[%s2 + $0x888] sm:$0xff]
  %v370 = vld [vmem:[%s2 + $0x890] sm:$0xff]
  %v371 = vld [vmem:[%s2 + $0x898] sm:$0xff]
  %v372 = vld [vmem:[%s2 + $0x8a0] sm:$0xff]
  %v373 = vld [vmem:[%s2 + $0x8a8] sm:$0xff]
  %v374 = vld [vmem:[%s2 + $0x8b0] sm:$0xff]
  %v375 = vld [vmem:[%s2 + $0x8b8] sm:$0xff]
  %v376 = vld [vmem:[%s2 + $0x8c0] sm:$0xff]
  %v377 = vld [vmem:[%s2 + $0x8c8] sm:$0xff]
  %v378 = vld [vmem:[%s2 + $0x8d0] sm:$0xff]
  %v379 = vld [vmem:[%s2 + $0x8d8] sm:$0xff]
  %v380 = vld [vmem:[%s2 + $0x8e0] sm:$0xff]
  %v381 = vld [vmem:[%s2 + $0x8e8] sm:$0xff]
  %v382 = vld [vmem:[%s2 + $0x8f0] sm:$0xff]
  %v383 = vld [vmem:[%s2 + $0x8f8] sm:$0xff]
  %v384 = vld [vmem:[%s2 + $0x900] sm:$0xff]
  %v385 = vld [vmem:[%s2 + $0x908] sm:$0xff]
  %v386 = vld [vmem:[%s2 + $0x910] sm:$0xff]
  %v387 = vld [vmem:[%s2 + $0x918] sm:$0xff]
  %v388 = vld [vmem:[%s2 + $0x920] sm:$0xff]
  %v389 = vld [vmem:[%s2 + $0x928] sm:$0xff]
  %v390 = vld [vmem:[%s2 + $0x930] sm:$0xff]
  %v391 = vld [vmem:[%s2 + $0x938] sm:$0xff]
  %v392 = vld [vmem:[%s2 + $0x940] sm:$0xff]
  %v393 = vld [vmem:[%s2 + $0x948] sm:$0xff]
  %v394 = vld [vmem:[%s2 + $0x950] sm:$0xff]
  %v395 = vld [vmem:[%s2 + $0x958] sm:$0xff]
  %v396 = vld [vmem:[%s2 + $0x960] sm:$0xff]
  %v397 = vld [vmem:[%s2 + $0x968] sm:$0xff]
  %v398 = vld [vmem:[%s2 + $0x970] sm:$0xff]
  %v399 = vld [vmem:[%s2 + $0x978] sm:$0xff]
  %v400 = vld [vmem:[%s2 + $0x980] sm:$0xff]
  %v401 = vld [vmem:[%s2 + $0x988] sm:$0xff]
  %v402 = vld [vmem:[%s2 + $0x990] sm:$0xff]
  %v403 = vld [vmem:[%s2 + $0x998] sm:$0xff]
  %v404 = vld [vmem:[%s2 + $0x9a0] sm:$0xff]
  %v405 = vld [vmem:[%s2 + $0x9a8] sm:$0xff]
  %v406 = vld [vmem:[%s2 + $0x9b0] sm:$0xff]
  %v407 = vld [vmem:[%s2 + $0x9b8] sm:$0xff]
  %v408 = vld [vmem:[%s2 + $0x9c0] sm:$0xff]
  %v409 = vld [vmem:[%s2 + $0x9c8] sm:$0xff]
  %v410 = vld [vmem:[%s2 + $0x9d0] sm:$0xff]
  %v411 = vld [vmem:[%s2 + $0x9d8] sm:$0xff]
  %v412 = vld [vmem:[%s2 + $0x9e0] sm:$0xff]
  %v413 = vld [vmem:[%s2 + $0x9e8] sm:$0xff]
  %v414 = vld [vmem:[%s2 + $0x9f0] sm:$0xff]
  %v415 = vld [vmem:[%s2 + $0x9f8] sm:$0xff]
  %v416 = vld [vmem:[%s2 + $0xa00] sm:$0xff]
  %v417 = vld [vmem:[%s2 + $0xa08] sm:$0xff]
  %v418 = vld [vmem:[%s2 + $0xa10] sm:$0xff]
  %v419 = vld [vmem:[%s2 + $0xa18] sm:$0xff]
  %v420 = vld [vmem:[%s2 + $0xa20] sm:$0xff]
  %v421 = vld [vmem:[%s2 + $0xa28] sm:$0xff]
  %v422 = vld [vmem:[%s2 + $0xa30] sm:$0xff]
  %v423 = vld [vmem:[%s2 + $0xa38] sm:$0xff]
  %v424 = vld [vmem:[%s2 + $0xa40] sm:$0xff]
  %v425 = vld [vmem:[%s2 + $0xa48] sm:$0xff]
  %v426 = vld [vmem:[%s2 + $0xa50] sm:$0xff]
  %v427 = vld [vmem:[%s2 + $0xa58] sm:$0xff]
  %v428 = vld [vmem:[%s2 + $0xa60] sm:$0xff]
  %v429 = vld [vmem:[%s2 + $0xa68] sm:$0xff]
  %v430 = vld [vmem:[%s2 + $0xa70] sm:$0xff]
  %v431 = vld [vmem:[%s2 + $0xa78] sm:$0xff]
  %v432 = vld [vmem:[%s2 + $0xa80] sm:$0xff]
  %v433 = vld [vmem:[%s2 + $0xa88] sm:$0xff]
  %v434 = vld [vmem:[%s2 + $0xa90] sm:$0xff]
  %v435 = vld [vmem:[%s2 + $0xa98] sm:$0xff]
  %v436 = vld [vmem:[%s2 + $0xaa0] sm:$0xff]
  %v437 = vld [vmem:[%s2 + $0xaa8] sm:$0xff]
  %v438 = vld [vmem:[%s2 + $0xab0] sm:$0xff]
  %v439 = vld [vmem:[%s2 + $0xab8] sm:$0xff]
  %v440 = vld [vmem:[%s2 + $0xac0] sm:$0xff]
  %v441 = vld [vmem:[%s2 + $0xac8] sm:$0xff]
  %v442 = vld [vmem:[%s2 + $0xad0] sm:$0xff]
  %v443 = vld [vmem:[%s2 + $0xad8] sm:$0xff]
  %v444 = vld [vmem:[%s2 + $0xae0] sm:$0xff]
  %v445 = vld [vmem:[%s2 + $0xae8] sm:$0xff]
  %v446 = vld [vmem:[%s2 + $0xaf0] sm:$0xff]
  %v447 = vld [vmem:[%s2 + $0xaf8] sm:$0xff]
  %v448 = vld [vmem:[%s2 + $0xb00] sm:$0xff]
  %v449 = vld [vmem:[%s2 + $0xb08] sm:$0xff]
  %v450 = vld [vmem:[%s2 + $0xb10] sm:$0xff]
  %v451 = vld [vmem:[%s2 + $0xb18] sm:$0xff]
  %v452 = vld [vmem:[%s2 + $0xb20] sm:$0xff]
  %v453 = vld [vmem:[%s2 + $0xb28] sm:$0xff]
  %v454 = vld [vmem:[%s2 + $0xb30] sm:$0xff]
  %v455 = vld [vmem:[%s2 + $0xb38] sm:$0xff]
  %v456 = vld [vmem:[%s2 + $0xb40] sm:$0xff]
  %v457 = vld [vmem:[%s2 + $0xb48] sm:$0xff]
  %v458 = vld [vmem:[%s2 + $0xb50] sm:$0xff]
  %v459 = vld [vmem:[%s2 + $0xb58] sm:$0xff]
  %v460 = vld [vmem:[%s2 + $0xb60] sm:$0xff]
  %v461 = vld [vmem:[%s2 + $0xb68] sm:$0xff]
  %v462 = vld [vmem:[%s2 + $0xb70] sm:$0xff]
  %v463 = vld [vmem:[%s2 + $0xb78] sm:$0xff]
  %v464 = vld [vmem:[%s2 + $0xb80] sm:$0xff]
  %v465 = vld [vmem:[%s2 + $0xb88] sm:$0xff]
  %v466 = vld [vmem:[%s2 + $0xb90] sm:$0xff]
  %v467 = vld [vmem:[%s2 + $0xb98] sm:$0xff]
  %v468 = vld [vmem:[%s2 + $0xba0] sm:$0xff]
  %v469 = vld [vmem:[%s2 + $0xba8] sm:$0xff]
  %v470 = vld [vmem:[%s2 + $0xbb0] sm:$0xff]
  %v471 = vld [vmem:[%s2 + $0xbb8] sm:$0xff]
  %v472 = vld [vmem:[%s2 + $0xbc0] sm:$0xff]
  %v473 = vld [vmem:[%s2 + $0xbc8] sm:$0xff]
  %v474 = vld [vmem:[%s2 + $0xbd0] sm:$0xff]
  %v475 = vld [vmem:[%s2 + $0xbd8] sm:$0xff]
  %v476 = vld [vmem:[%s2 + $0xbe0] sm:$0xff]
  %v477 = vld [vmem:[%s2 + $0xbe8] sm:$0xff]
  %v478 = vld [vmem:[%s2 + $0xbf0] sm:$0xff]
  %v479 = vld [vmem:[%s2 + $0xbf8] sm:$0xff]
  %v480 = vld [vmem:[%s2 + $0xc00] sm:$0xff]
  %v481 = vld [vmem:[%s2 + $0xc08] sm:$0xff]
  %v482 = vld [vmem:[%s2 + $0xc10] sm:$0xff]
  %v483 = vld [vmem:[%s2 + $0xc18] sm:$0xff]
  %v484 = vld [vmem:[%s2 + $0xc20] sm:$0xff]
  %v485 = vld [vmem:[%s2 + $0xc28] sm:$0xff]
  %v486 = vld [vmem:[%s2 + $0xc30] sm:$0xff]
  %v487 = vld [vmem:[%s2 + $0xc38] sm:$0xff]
  %v488 = vld [vmem:[%s2 + $0xc40] sm:$0xff]
  %v489 = vld [vmem:[%s2 + $0xc48] sm:$0xff]
  %v490 = vld [vmem:[%s2 + $0xc50] sm:$0xff]
  %v491 = vld [vmem:[%s2 + $0xc58] sm:$0xff]
  %v492 = vld [vmem:[%s2 + $0xc60] sm:$0xff]
  %v493 = vld [vmem:[%s2 + $0xc68] sm:$0xff]
  %v494 = vld [vmem:[%s2 + $0xc70] sm:$0xff]
  %v495 = vld [vmem:[%s2 + $0xc78] sm:$0xff]
  %v496 = vld [vmem:[%s2 + $0xc80] sm:$0xff]
  %v497 = vld [vmem:[%s2 + $0xc88] sm:$0xff]
  %v498 = vld [vmem:[%s2 + $0xc90] sm:$0xff]
  %v499 = vld [vmem:[%s2 + $0xc98] sm:$0xff]
  %v500 = vld [vmem:[%s2 + $0xca0] sm:$0xff]
  %v501 = vld [vmem:[%s2 + $0xca8] sm:$0xff]
  %v502 = vld [vmem:[%s2 + $0xcb0] sm:$0xff]
  %v503 = vld [vmem:[%s2 + $0xcb8] sm:$0xff]
  %v504 = vld [vmem:[%s2 + $0xcc0] sm:$0xff]
  %v505 = vld [vmem:[%s2 + $0xcc8] sm:$0xff]
  %v506 = vld [vmem:[%s2 + $0xcd0] sm:$0xff]
  %v507 = vld [vmem:[%s2 + $0xcd8] sm:$0xff]
  %v508 = vld [vmem:[%s2 + $0xce0] sm:$0xff]
  %v509 = vld [vmem:[%s2 + $0xce8] sm:$0xff]
  %v510 = vld [vmem:[%s2 + $0xcf0] sm:$0xff]
  %v511 = vld [vmem:[%s2 + $0xcf8] sm:$0xff]
  %v512 = vld [vmem:[%s2 + $0xd00] sm:$0xff]
  %v513 = vld [vmem:[%s2 + $0xd08] sm:$0xff]
  %v514 = vld [vmem:[%s2 + $0xd10] sm:$0xff]
  %v515 = vld [vmem:[%s2 + $0xd18] sm:$0xff]
  %v516 = vld [vmem:[%s2 + $0xd20] sm:$0xff]
  %v517 = vld [vmem:[%s2 + $0xd28] sm:$0xff]
  %v518 = vld [vmem:[%s2 + $0xd30] sm:$0xff]
  %v519 = vld [vmem:[%s2 + $0xd38] sm:$0xff]
  %v520 = vld [vmem:[%s2 + $0xd40] sm:$0xff]
  %v521 = vld [vmem:[%s2 + $0xd48] sm:$0xff]
  %v522 = vld [vmem:[%s2 + $0xd50] sm:$0xff]
  %v523 = vld [vmem:[%s2 + $0xd58] sm:$0xff]
  %v524 = vld [vmem:[%s2 + $0xd60] sm:$0xff]
  %v525 = vld [vmem:[%s2 + $0xd68] sm:$0xff]
  %v526 = vld [vmem:[%s2 + $0xd70] sm:$0xff]
  %v527 = vld [vmem:[%s2 + $0xd78] sm:$0xff]
  %v528 = vld [vmem:[%s2 + $0xd80] sm:$0xff]
  %v529 = vld [vmem:[%s2 + $0xd88] sm:$0xff]
  %v530 = vld [vmem:[%s2 + $0xd90] sm:$0xff]
  %v531 = vld [vmem:[%s2 + $0xd98] sm:$0xff]
  %v532 = vld [vmem:[%s2 + $0xda0] sm:$0xff]
  %v533 = vld [vmem:[%s2 + $0xda8] sm:$0xff]
  %v534 = vld [vmem:[%s2 + $0xdb0] sm:$0xff]
  %v535 = vld [vmem:[%s2 + $0xdb8] sm:$0xff]
  %v536 = vld [vmem:[%s2 + $0xdc0] sm:$0xff]
  %v537 = vld [vmem:[%s2 + $0xdc8] sm:$0xff]
  %v538 = vld [vmem:[%s2 + $0xdd0] sm:$0xff]
  %v539 = vld [vmem:[%s2 + $0xdd8] sm:$0xff]
  %v540 = vld [vmem:[%s2 + $0xde0] sm:$0xff]
  %v541 = vld [vmem:[%s2 + $0xde8] sm:$0xff]
  %v542 = vld [vmem:[%s2 + $0xdf0] sm:$0xff]
  %v543 = vld [vmem:[%s2 + $0xdf8] sm:$0xff]
  %v544 = vld [vmem:[%s2 + $0xe00] sm:$0xff]
  %v545 = vld [vmem:[%s2 + $0xe08] sm:$0xff]
  %v546 = vld [vmem:[%s2 + $0xe10] sm:$0xff]
  %v547 = vld [vmem:[%s2 + $0xe18] sm:$0xff]
  %v548 = vld [vmem:[%s2 + $0xe20] sm:$0xff]
  %v549 = vld [vmem:[%s2 + $0xe28] sm:$0xff]
  %v550 = vld [vmem:[%s2 + $0xe30] sm:$0xff]
  %v551 = vld [vmem:[%s2 + $0xe38] sm:$0xff]
  %v552 = vld [vmem:[%s2 + $0xe40] sm:$0xff]
  %v553 = vld [vmem:[%s2 + $0xe48] sm:$0xff]
  %v554 = vld [vmem:[%s2 + $0xe50] sm:$0xff]
  %v555 = vld [vmem:[%s2 + $0xe58] sm:$0xff]
  %v556 = vld [vmem:[%s2 + $0xe60] sm:$0xff]
  %v557 = vld [vmem:[%s2 + $0xe68] sm:$0xff]
  %v558 = vld [vmem:[%s2 + $0xe70] sm:$0xff]
  %v559 = vld [vmem:[%s2 + $0xe78] sm:$0xff]
  %v560 = vld [vmem:[%s2 + $0xe80] sm:$0xff]
  %v561 = vld [vmem:[%s2 + $0xe88] sm:$0xff]
  %v562 = vld [vmem:[%s2 + $0xe90] sm:$0xff]
  %v563 = vld [vmem:[%s2 + $0xe98] sm:$0xff]
  %v564 = vld [vmem:[%s2 + $0xea0] sm:$0xff]
  %v565 = vld [vmem:[%s2 + $0xea8] sm:$0xff]
  %v566 = vld [vmem:[%s2 + $0xeb0] sm:$0xff]
  %v567 = vld [vmem:[%s2 + $0xeb8] sm:$0xff]
  %v568 = vld [vmem:[%s2 + $0xec0] sm:$0xff]
  %v569 = vld [vmem:[%s2 + $0xec8] sm:$0xff]
  %v570 = vld [vmem:[%s2 + $0xed0] sm:$0xff]
  %v571 = vld [vmem:[%s2 + $0xed8] sm:$0xff]
  %v572 = vld [vmem:[%s2 + $0xee0] sm:$0xff]
  %v573 = vld [vmem:[%s2 + $0xee8] sm:$0xff]
  %v574 = vld [vmem:[%s2 + $0xef0] sm:$0xff]
  %v575 = vld [vmem:[%s2 + $0xef8] sm:$0xff]
  %v576 = vld [vmem:[%s2 + $0xf00] sm:$0xff]
  %v577 = vld [vmem:[%s2 + $0xf08] sm:$0xff]
  %v578 = vld [vmem:[%s2 + $0xf10] sm:$0xff]
  %v579 = vld [vmem:[%s2 + $0xf18] sm:$0xff]
  %v580 = vld [vmem:[%s2 + $0xf20] sm:$0xff]
  %v581 = vld [vmem:[%s2 + $0xf28] sm:$0xff]
  %v582 = vld [vmem:[%s2 + $0xf30] sm:$0xff]
  %v583 = vld [vmem:[%s2 + $0xf38] sm:$0xff]
  %v584 = vld [vmem:[%s2 + $0xf40] sm:$0xff]
  %v585 = vld [vmem:[%s2 + $0xf48] sm:$0xff]
  %v586 = vld [vmem:[%s2 + $0xf50] sm:$0xff]
  %v587 = vld [vmem:[%s2 + $0xf58] sm:$0xff]
  %v588 = vld [vmem:[%s2 + $0xf60] sm:$0xff]
  %v589 = vld [vmem:[%s2 + $0xf68] sm:$0xff]
  %v590 = vld [vmem:[%s2 + $0xf70] sm:$0xff]
  %v591 = vld [vmem:[%s2 + $0xf78] sm:$0xff]
  %v592 = vld [vmem:[%s2 + $0xf80] sm:$0xff]
  %v593 = vld [vmem:[%s2 + $0xf88] sm:$0xff]
  %v594 = vld [vmem:[%s2 + $0xf90] sm:$0xff]
  %v595 = vld [vmem:[%s2 + $0xf98] sm:$0xff]
  %v596 = vld [vmem:[%s2 + $0xfa0] sm:$0xff]
  %v597 = vld [vmem:[%s2 + $0xfa8] sm:$0xff]
  %v598 = vld [vmem:[%s2 + $0xfb0] sm:$0xff]
  %v599 = vld [vmem:[%s2 + $0xfb8] sm:$0xff]
  %v600 = vld [vmem:[%s2 + $0xfc0] sm:$0xff]
  %v601 = vld [vmem:[%s2 + $0xfc8] sm:$0xff]
  %v602 = vld [vmem:[%s2 + $0xfd0] sm:$0xff]
  %v603 = vld [vmem:[%s2 + $0xfd8] sm:$0xff]
  %v604 = vld [vmem:[%s2 + $0xfe0] sm:$0xff]
  %v605 = vld [vmem:[%s2 + $0xfe8] sm:$0xff]
  %v606 = vld [vmem:[%s2 + $0xff0] sm:$0xff]
  %v607 = vld [vmem:[%s2 + $0xff8] sm:$0xff]
  %v608 = vld [vmem:[%s3] sm:$0xff]
  %v610 = vlaneseq
  %v611 = vshrl.u32 %v610, 7
  %v612 = vsub.s32 0, %v611
  %v613 = vrot.slane %v608, %v612
  %v614 = vlaneseq
  %v615 = vshrl.u32 %v614, 7
  %v616 = vsub.s32 1, %v615
  %v617 = vrot.slane %v608, %v616
  %v618 = vlaneseq
  %v619 = vshrl.u32 %v618, 7
  %v620 = vsub.s32 2, %v619
  %v621 = vrot.slane %v608, %v620
  %v622 = vlaneseq
  %v623 = vshrl.u32 %v622, 7
  %v624 = vsub.s32 3, %v623
  %v625 = vrot.slane %v608, %v624
  %v626 = vlaneseq
  %v627 = vshrl.u32 %v626, 7
  %v628 = vsub.s32 4, %v627
  %v629 = vrot.slane %v608, %v628
  %v630 = vlaneseq
  %v631 = vshrl.u32 %v630, 7
  %v632 = vsub.s32 5, %v631
  %v633 = vrot.slane %v608, %v632
  %v634 = vlaneseq
  %v635 = vshrl.u32 %v634, 7
  %v636 = vsub.s32 6, %v635
  %v637 = vrot.slane %v608, %v636
  %v638 = vlaneseq
  %v639 = vshrl.u32 %v638, 7
  %v640 = vsub.s32 7, %v639
  %v641 = vrot.slane %v608, %v640
  %v1162 = vunpack.c.l.b16 %v96
  %v1163 = vunpack.c.h.b16 %v96
  %v1164 = vunpack.c.l.b16 %v97
  %v1165 = vunpack.c.h.b16 %v97
  %v1166 = vunpack.c.l.b16 %v98
  %v1167 = vunpack.c.h.b16 %v98
  %v1168 = vunpack.c.l.b16 %v99
  %v1169 = vunpack.c.h.b16 %v99
  %v1170 = vunpack.c.l.b16 %v100
  %v1171 = vunpack.c.h.b16 %v100
  %v1172 = vunpack.c.l.b16 %v101
  %v1173 = vunpack.c.h.b16 %v101
  %v1174 = vunpack.c.l.b16 %v102
  %v1175 = vunpack.c.h.b16 %v102
  %v1176 = vunpack.c.l.b16 %v103
  %v1177 = vunpack.c.h.b16 %v103
  %v1178 = vunpack.c.l.b16 %v104
  %v1179 = vunpack.c.h.b16 %v104
  %v1180 = vunpack.c.l.b16 %v105
  %v1181 = vunpack.c.h.b16 %v105
  %v1182 = vunpack.c.l.b16 %v106
  %v1183 = vunpack.c.h.b16 %v106
  %v1184 = vunpack.c.l.b16 %v107
  %v1185 = vunpack.c.h.b16 %v107
  %v1186 = vunpack.c.l.b16 %v108
  %v1187 = vunpack.c.h.b16 %v108
  %v1188 = vunpack.c.l.b16 %v109
  %v1189 = vunpack.c.h.b16 %v109
  %v1190 = vunpack.c.l.b16 %v110
  %v1191 = vunpack.c.h.b16 %v110
  %v1192 = vunpack.c.l.b16 %v111
  %v1193 = vunpack.c.h.b16 %v111
  %v1194 = vunpack.c.l.b16 %v112
  %v1195 = vunpack.c.h.b16 %v112
  %v1196 = vunpack.c.l.b16 %v113
  %v1197 = vunpack.c.h.b16 %v113
  %v1198 = vunpack.c.l.b16 %v114
  %v1199 = vunpack.c.h.b16 %v114
  %v1200 = vunpack.c.l.b16 %v115
  %v1201 = vunpack.c.h.b16 %v115
  %v1202 = vunpack.c.l.b16 %v116
  %v1203 = vunpack.c.h.b16 %v116
  %v1204 = vunpack.c.l.b16 %v117
  %v1205 = vunpack.c.h.b16 %v117
  %v1206 = vunpack.c.l.b16 %v118
  %v1207 = vunpack.c.h.b16 %v118
  %v1208 = vunpack.c.l.b16 %v119
  %v1209 = vunpack.c.h.b16 %v119
  %v1210 = vunpack.c.l.b16 %v120
  %v1211 = vunpack.c.h.b16 %v120
  %v1212 = vunpack.c.l.b16 %v121
  %v1213 = vunpack.c.h.b16 %v121
  %v1214 = vunpack.c.l.b16 %v122
  %v1215 = vunpack.c.h.b16 %v122
  %v1216 = vunpack.c.l.b16 %v123
  %v1217 = vunpack.c.h.b16 %v123
  %v1218 = vunpack.c.l.b16 %v124
  %v1219 = vunpack.c.h.b16 %v124
  %v1220 = vunpack.c.l.b16 %v125
  %v1221 = vunpack.c.h.b16 %v125
  %v1222 = vunpack.c.l.b16 %v126
  %v1223 = vunpack.c.h.b16 %v126
  %v1224 = vunpack.c.l.b16 %v127
  %v1225 = vunpack.c.h.b16 %v127
  %v1226 = vunpack.c.l.b16 %v128
  %v1227 = vunpack.c.h.b16 %v128
  %v1228 = vunpack.c.l.b16 %v129
  %v1229 = vunpack.c.h.b16 %v129
  %v1230 = vunpack.c.l.b16 %v130
  %v1231 = vunpack.c.h.b16 %v130
  %v1232 = vunpack.c.l.b16 %v131
  %v1233 = vunpack.c.h.b16 %v131
  %v1234 = vunpack.c.l.b16 %v132
  %v1235 = vunpack.c.h.b16 %v132
  %v1236 = vunpack.c.l.b16 %v133
  %v1237 = vunpack.c.h.b16 %v133
  %v1238 = vunpack.c.l.b16 %v134
  %v1239 = vunpack.c.h.b16 %v134
  %v1240 = vunpack.c.l.b16 %v135
  %v1241 = vunpack.c.h.b16 %v135
  %v1242 = vunpack.c.l.b16 %v136
  %v1243 = vunpack.c.h.b16 %v136
  %v1244 = vunpack.c.l.b16 %v137
  %v1245 = vunpack.c.h.b16 %v137
  %v1246 = vunpack.c.l.b16 %v138
  %v1247 = vunpack.c.h.b16 %v138
  %v1248 = vunpack.c.l.b16 %v139
  %v1249 = vunpack.c.h.b16 %v139
  %v1250 = vunpack.c.l.b16 %v140
  %v1251 = vunpack.c.h.b16 %v140
  %v1252 = vunpack.c.l.b16 %v141
  %v1253 = vunpack.c.h.b16 %v141
  %v1254 = vunpack.c.l.b16 %v142
  %v1255 = vunpack.c.h.b16 %v142
  %v1256 = vunpack.c.l.b16 %v143
  %v1257 = vunpack.c.h.b16 %v143
  %v1258 = vunpack.c.l.b16 %v144
  %v1259 = vunpack.c.h.b16 %v144
  %v1260 = vunpack.c.l.b16 %v145
  %v1261 = vunpack.c.h.b16 %v145
  %v1262 = vunpack.c.l.b16 %v146
  %v1263 = vunpack.c.h.b16 %v146
  %v1264 = vunpack.c.l.b16 %v147
  %v1265 = vunpack.c.h.b16 %v147
  %v1266 = vunpack.c.l.b16 %v148
  %v1267 = vunpack.c.h.b16 %v148
  %v1268 = vunpack.c.l.b16 %v149
  %v1269 = vunpack.c.h.b16 %v149
  %v1270 = vunpack.c.l.b16 %v150
  %v1271 = vunpack.c.h.b16 %v150
  %v1272 = vunpack.c.l.b16 %v151
  %v1273 = vunpack.c.h.b16 %v151
  %v1274 = vunpack.c.l.b16 %v152
  %v1275 = vunpack.c.h.b16 %v152
  %v1276 = vunpack.c.l.b16 %v153
  %v1277 = vunpack.c.h.b16 %v153
  %v1278 = vunpack.c.l.b16 %v154
  %v1279 = vunpack.c.h.b16 %v154
  %v1280 = vunpack.c.l.b16 %v155
  %v1281 = vunpack.c.h.b16 %v155
  %v1282 = vunpack.c.l.b16 %v156
  %v1283 = vunpack.c.h.b16 %v156
  %v1284 = vunpack.c.l.b16 %v157
  %v1285 = vunpack.c.h.b16 %v157
  %v1286 = vunpack.c.l.b16 %v158
  %v1287 = vunpack.c.h.b16 %v158
  %v1288 = vunpack.c.l.b16 %v159
  %v1289 = vunpack.c.h.b16 %v159
  %v1290 = vunpack.c.l.b16 %v160
  %v1291 = vunpack.c.h.b16 %v160
  %v1292 = vunpack.c.l.b16 %v161
  %v1293 = vunpack.c.h.b16 %v161
  %v1294 = vunpack.c.l.b16 %v162
  %v1295 = vunpack.c.h.b16 %v162
  %v1296 = vunpack.c.l.b16 %v163
  %v1297 = vunpack.c.h.b16 %v163
  %v1298 = vunpack.c.l.b16 %v164
  %v1299 = vunpack.c.h.b16 %v164
  %v1300 = vunpack.c.l.b16 %v165
  %v1301 = vunpack.c.h.b16 %v165
  %v1302 = vunpack.c.l.b16 %v166
  %v1303 = vunpack.c.h.b16 %v166
  %v1304 = vunpack.c.l.b16 %v167
  %v1305 = vunpack.c.h.b16 %v167
  %v1306 = vunpack.c.l.b16 %v168
  %v1307 = vunpack.c.h.b16 %v168
  %v1308 = vunpack.c.l.b16 %v169
  %v1309 = vunpack.c.h.b16 %v169
  %v1310 = vunpack.c.l.b16 %v170
  %v1311 = vunpack.c.h.b16 %v170
  %v1312 = vunpack.c.l.b16 %v171
  %v1313 = vunpack.c.h.b16 %v171
  %v1314 = vunpack.c.l.b16 %v172
  %v1315 = vunpack.c.h.b16 %v172
  %v1316 = vunpack.c.l.b16 %v173
  %v1317 = vunpack.c.h.b16 %v173
  %v1318 = vunpack.c.l.b16 %v174
  %v1319 = vunpack.c.h.b16 %v174
  %v1320 = vunpack.c.l.b16 %v175
  %v1321 = vunpack.c.h.b16 %v175
  %v1322 = vunpack.c.l.b16 %v176
  %v1323 = vunpack.c.h.b16 %v176
  %v1324 = vunpack.c.l.b16 %v177
  %v1325 = vunpack.c.h.b16 %v177
  %v1326 = vunpack.c.l.b16 %v178
  %v1327 = vunpack.c.h.b16 %v178
  %v1328 = vunpack.c.l.b16 %v179
  %v1329 = vunpack.c.h.b16 %v179
  %v1330 = vunpack.c.l.b16 %v180
  %v1331 = vunpack.c.h.b16 %v180
  %v1332 = vunpack.c.l.b16 %v181
  %v1333 = vunpack.c.h.b16 %v181
  %v1334 = vunpack.c.l.b16 %v182
  %v1335 = vunpack.c.h.b16 %v182
  %v1336 = vunpack.c.l.b16 %v183
  %v1337 = vunpack.c.h.b16 %v183
  %v1338 = vunpack.c.l.b16 %v184
  %v1339 = vunpack.c.h.b16 %v184
  %v1340 = vunpack.c.l.b16 %v185
  %v1341 = vunpack.c.h.b16 %v185
  %v1342 = vunpack.c.l.b16 %v186
  %v1343 = vunpack.c.h.b16 %v186
  %v1344 = vunpack.c.l.b16 %v187
  %v1345 = vunpack.c.h.b16 %v187
  %v1346 = vunpack.c.l.b16 %v188
  %v1347 = vunpack.c.h.b16 %v188
  %v1348 = vunpack.c.l.b16 %v189
  %v1349 = vunpack.c.h.b16 %v189
  %v1350 = vunpack.c.l.b16 %v190
  %v1351 = vunpack.c.h.b16 %v190
  %v1352 = vunpack.c.l.b16 %v191
  %v1353 = vunpack.c.h.b16 %v191
  %v1354 = vunpack.c.l.b16 %v192
  %v1355 = vunpack.c.h.b16 %v192
  %v1356 = vunpack.c.l.b16 %v193
  %v1357 = vunpack.c.h.b16 %v193
  %v1358 = vunpack.c.l.b16 %v194
  %v1359 = vunpack.c.h.b16 %v194
  %v1360 = vunpack.c.l.b16 %v195
  %v1361 = vunpack.c.h.b16 %v195
  %v1362 = vunpack.c.l.b16 %v196
  %v1363 = vunpack.c.h.b16 %v196
  %v1364 = vunpack.c.l.b16 %v197
  %v1365 = vunpack.c.h.b16 %v197
  %v1366 = vunpack.c.l.b16 %v198
  %v1367 = vunpack.c.h.b16 %v198
  %v1368 = vunpack.c.l.b16 %v199
  %v1369 = vunpack.c.h.b16 %v199
  %v1370 = vunpack.c.l.b16 %v200
  %v1371 = vunpack.c.h.b16 %v200
  %v1372 = vunpack.c.l.b16 %v201
  %v1373 = vunpack.c.h.b16 %v201
  %v1374 = vunpack.c.l.b16 %v202
  %v1375 = vunpack.c.h.b16 %v202
  %v1376 = vunpack.c.l.b16 %v203
  %v1377 = vunpack.c.h.b16 %v203
  %v1378 = vunpack.c.l.b16 %v204
  %v1379 = vunpack.c.h.b16 %v204
  %v1380 = vunpack.c.l.b16 %v205
  %v1381 = vunpack.c.h.b16 %v205
  %v1382 = vunpack.c.l.b16 %v206
  %v1383 = vunpack.c.h.b16 %v206
  %v1384 = vunpack.c.l.b16 %v207
  %v1385 = vunpack.c.h.b16 %v207
  %v1386 = vunpack.c.l.b16 %v208
  %v1387 = vunpack.c.h.b16 %v208
  %v1388 = vunpack.c.l.b16 %v209
  %v1389 = vunpack.c.h.b16 %v209
  %v1390 = vunpack.c.l.b16 %v210
  %v1391 = vunpack.c.h.b16 %v210
  %v1392 = vunpack.c.l.b16 %v211
  %v1393 = vunpack.c.h.b16 %v211
  %v1394 = vunpack.c.l.b16 %v212
  %v1395 = vunpack.c.h.b16 %v212
  %v1396 = vunpack.c.l.b16 %v213
  %v1397 = vunpack.c.h.b16 %v213
  %v1398 = vunpack.c.l.b16 %v214
  %v1399 = vunpack.c.h.b16 %v214
  %v1400 = vunpack.c.l.b16 %v215
  %v1401 = vunpack.c.h.b16 %v215
  %v1402 = vunpack.c.l.b16 %v216
  %v1403 = vunpack.c.h.b16 %v216
  %v1404 = vunpack.c.l.b16 %v217
  %v1405 = vunpack.c.h.b16 %v217
  %v1406 = vunpack.c.l.b16 %v218
  %v1407 = vunpack.c.h.b16 %v218
  %v1408 = vunpack.c.l.b16 %v219
  %v1409 = vunpack.c.h.b16 %v219
  %v1410 = vunpack.c.l.b16 %v220
  %v1411 = vunpack.c.h.b16 %v220
  %v1412 = vunpack.c.l.b16 %v221
  %v1413 = vunpack.c.h.b16 %v221
  %v1414 = vunpack.c.l.b16 %v222
  %v1415 = vunpack.c.h.b16 %v222
  %v1416 = vunpack.c.l.b16 %v223
  %v1417 = vunpack.c.h.b16 %v223
  %v1418 = vunpack.c.l.b16 %v224
  %v1419 = vunpack.c.h.b16 %v224
  %v1420 = vunpack.c.l.b16 %v225
  %v1421 = vunpack.c.h.b16 %v225
  %v1422 = vunpack.c.l.b16 %v226
  %v1423 = vunpack.c.h.b16 %v226
  %v1424 = vunpack.c.l.b16 %v227
  %v1425 = vunpack.c.h.b16 %v227
  %v1426 = vunpack.c.l.b16 %v228
  %v1427 = vunpack.c.h.b16 %v228
  %v1428 = vunpack.c.l.b16 %v229
  %v1429 = vunpack.c.h.b16 %v229
  %v1430 = vunpack.c.l.b16 %v230
  %v1431 = vunpack.c.h.b16 %v230
  %v1432 = vunpack.c.l.b16 %v231
  %v1433 = vunpack.c.h.b16 %v231
  %v1434 = vunpack.c.l.b16 %v232
  %v1435 = vunpack.c.h.b16 %v232
  %v1436 = vunpack.c.l.b16 %v233
  %v1437 = vunpack.c.h.b16 %v233
  %v1438 = vunpack.c.l.b16 %v234
  %v1439 = vunpack.c.h.b16 %v234
  %v1440 = vunpack.c.l.b16 %v235
  %v1441 = vunpack.c.h.b16 %v235
  %v1442 = vunpack.c.l.b16 %v236
  %v1443 = vunpack.c.h.b16 %v236
  %v1444 = vunpack.c.l.b16 %v237
  %v1445 = vunpack.c.h.b16 %v237
  %v1446 = vunpack.c.l.b16 %v238
  %v1447 = vunpack.c.h.b16 %v238
  %v1448 = vunpack.c.l.b16 %v239
  %v1449 = vunpack.c.h.b16 %v239
  %v1450 = vunpack.c.l.b16 %v240
  %v1451 = vunpack.c.h.b16 %v240
  %v1452 = vunpack.c.l.b16 %v241
  %v1453 = vunpack.c.h.b16 %v241
  %v1454 = vunpack.c.l.b16 %v242
  %v1455 = vunpack.c.h.b16 %v242
  %v1456 = vunpack.c.l.b16 %v243
  %v1457 = vunpack.c.h.b16 %v243
  %v1458 = vunpack.c.l.b16 %v244
  %v1459 = vunpack.c.h.b16 %v244
  %v1460 = vunpack.c.l.b16 %v245
  %v1461 = vunpack.c.h.b16 %v245
  %v1462 = vunpack.c.l.b16 %v246
  %v1463 = vunpack.c.h.b16 %v246
  %v1464 = vunpack.c.l.b16 %v247
  %v1465 = vunpack.c.h.b16 %v247
  %v1466 = vunpack.c.l.b16 %v248
  %v1467 = vunpack.c.h.b16 %v248
  %v1468 = vunpack.c.l.b16 %v249
  %v1469 = vunpack.c.h.b16 %v249
  %v1470 = vunpack.c.l.b16 %v250
  %v1471 = vunpack.c.h.b16 %v250
  %v1472 = vunpack.c.l.b16 %v251
  %v1473 = vunpack.c.h.b16 %v251
  %v1474 = vunpack.c.l.b16 %v252
  %v1475 = vunpack.c.h.b16 %v252
  %v1476 = vunpack.c.l.b16 %v253
  %v1477 = vunpack.c.h.b16 %v253
  %v1478 = vunpack.c.l.b16 %v254
  %v1479 = vunpack.c.h.b16 %v254
  %v1480 = vunpack.c.l.b16 %v255
  %v1481 = vunpack.c.h.b16 %v255
  %v1482 = vunpack.c.l.b16 %v256
  %v1483 = vunpack.c.h.b16 %v256
  %v1484 = vunpack.c.l.b16 %v257
  %v1485 = vunpack.c.h.b16 %v257
  %v1486 = vunpack.c.l.b16 %v258
  %v1487 = vunpack.c.h.b16 %v258
  %v1488 = vunpack.c.l.b16 %v259
  %v1489 = vunpack.c.h.b16 %v259
  %v1490 = vunpack.c.l.b16 %v260
  %v1491 = vunpack.c.h.b16 %v260
  %v1492 = vunpack.c.l.b16 %v261
  %v1493 = vunpack.c.h.b16 %v261
  %v1494 = vunpack.c.l.b16 %v262
  %v1495 = vunpack.c.h.b16 %v262
  %v1496 = vunpack.c.l.b16 %v263
  %v1497 = vunpack.c.h.b16 %v263
  %v1498 = vunpack.c.l.b16 %v264
  %v1499 = vunpack.c.h.b16 %v264
  %v1500 = vunpack.c.l.b16 %v265
  %v1501 = vunpack.c.h.b16 %v265
  %v1502 = vunpack.c.l.b16 %v266
  %v1503 = vunpack.c.h.b16 %v266
  %v1504 = vunpack.c.l.b16 %v267
  %v1505 = vunpack.c.h.b16 %v267
  %v1506 = vunpack.c.l.b16 %v268
  %v1507 = vunpack.c.h.b16 %v268
  %v1508 = vunpack.c.l.b16 %v269
  %v1509 = vunpack.c.h.b16 %v269
  %v1510 = vunpack.c.l.b16 %v270
  %v1511 = vunpack.c.h.b16 %v270
  %v1512 = vunpack.c.l.b16 %v271
  %v1513 = vunpack.c.h.b16 %v271
  %v1514 = vunpack.c.l.b16 %v272
  %v1515 = vunpack.c.h.b16 %v272
  %v1516 = vunpack.c.l.b16 %v273
  %v1517 = vunpack.c.h.b16 %v273
  %v1518 = vunpack.c.l.b16 %v274
  %v1519 = vunpack.c.h.b16 %v274
  %v1520 = vunpack.c.l.b16 %v275
  %v1521 = vunpack.c.h.b16 %v275
  %v1522 = vunpack.c.l.b16 %v276
  %v1523 = vunpack.c.h.b16 %v276
  %v1524 = vunpack.c.l.b16 %v277
  %v1525 = vunpack.c.h.b16 %v277
  %v1526 = vunpack.c.l.b16 %v278
  %v1527 = vunpack.c.h.b16 %v278
  %v1528 = vunpack.c.l.b16 %v279
  %v1529 = vunpack.c.h.b16 %v279
  %v1530 = vunpack.c.l.b16 %v280
  %v1531 = vunpack.c.h.b16 %v280
  %v1532 = vunpack.c.l.b16 %v281
  %v1533 = vunpack.c.h.b16 %v281
  %v1534 = vunpack.c.l.b16 %v282
  %v1535 = vunpack.c.h.b16 %v282
  %v1536 = vunpack.c.l.b16 %v283
  %v1537 = vunpack.c.h.b16 %v283
  %v1538 = vunpack.c.l.b16 %v284
  %v1539 = vunpack.c.h.b16 %v284
  %v1540 = vunpack.c.l.b16 %v285
  %v1541 = vunpack.c.h.b16 %v285
  %v1542 = vunpack.c.l.b16 %v286
  %v1543 = vunpack.c.h.b16 %v286
  %v1544 = vunpack.c.l.b16 %v287
  %v1545 = vunpack.c.h.b16 %v287
  %v1546 = vunpack.c.l.b16 %v288
  %v1547 = vunpack.c.h.b16 %v288
  %v1548 = vunpack.c.l.b16 %v289
  %v1549 = vunpack.c.h.b16 %v289
  %v1550 = vunpack.c.l.b16 %v290
  %v1551 = vunpack.c.h.b16 %v290
  %v1552 = vunpack.c.l.b16 %v291
  %v1553 = vunpack.c.h.b16 %v291
  %v1554 = vunpack.c.l.b16 %v292
  %v1555 = vunpack.c.h.b16 %v292
  %v1556 = vunpack.c.l.b16 %v293
  %v1557 = vunpack.c.h.b16 %v293
  %v1558 = vunpack.c.l.b16 %v294
  %v1559 = vunpack.c.h.b16 %v294
  %v1560 = vunpack.c.l.b16 %v295
  %v1561 = vunpack.c.h.b16 %v295
  %v1562 = vunpack.c.l.b16 %v296
  %v1563 = vunpack.c.h.b16 %v296
  %v1564 = vunpack.c.l.b16 %v297
  %v1565 = vunpack.c.h.b16 %v297
  %v1566 = vunpack.c.l.b16 %v298
  %v1567 = vunpack.c.h.b16 %v298
  %v1568 = vunpack.c.l.b16 %v299
  %v1569 = vunpack.c.h.b16 %v299
  %v1570 = vunpack.c.l.b16 %v300
  %v1571 = vunpack.c.h.b16 %v300
  %v1572 = vunpack.c.l.b16 %v301
  %v1573 = vunpack.c.h.b16 %v301
  %v1574 = vunpack.c.l.b16 %v302
  %v1575 = vunpack.c.h.b16 %v302
  %v1576 = vunpack.c.l.b16 %v303
  %v1577 = vunpack.c.h.b16 %v303
  %v1578 = vunpack.c.l.b16 %v304
  %v1579 = vunpack.c.h.b16 %v304
  %v1580 = vunpack.c.l.b16 %v305
  %v1581 = vunpack.c.h.b16 %v305
  %v1582 = vunpack.c.l.b16 %v306
  %v1583 = vunpack.c.h.b16 %v306
  %v1584 = vunpack.c.l.b16 %v307
  %v1585 = vunpack.c.h.b16 %v307
  %v1586 = vunpack.c.l.b16 %v308
  %v1587 = vunpack.c.h.b16 %v308
  %v1588 = vunpack.c.l.b16 %v309
  %v1589 = vunpack.c.h.b16 %v309
  %v1590 = vunpack.c.l.b16 %v310
  %v1591 = vunpack.c.h.b16 %v310
  %v1592 = vunpack.c.l.b16 %v311
  %v1593 = vunpack.c.h.b16 %v311
  %v1594 = vunpack.c.l.b16 %v312
  %v1595 = vunpack.c.h.b16 %v312
  %v1596 = vunpack.c.l.b16 %v313
  %v1597 = vunpack.c.h.b16 %v313
  %v1598 = vunpack.c.l.b16 %v314
  %v1599 = vunpack.c.h.b16 %v314
  %v1600 = vunpack.c.l.b16 %v315
  %v1601 = vunpack.c.h.b16 %v315
  %v1602 = vunpack.c.l.b16 %v316
  %v1603 = vunpack.c.h.b16 %v316
  %v1604 = vunpack.c.l.b16 %v317
  %v1605 = vunpack.c.h.b16 %v317
  %v1606 = vunpack.c.l.b16 %v318
  %v1607 = vunpack.c.h.b16 %v318
  %v1608 = vunpack.c.l.b16 %v319
  %v1609 = vunpack.c.h.b16 %v319
  %v1610 = vunpack.c.l.b16 %v320
  %v1611 = vunpack.c.h.b16 %v320
  %v1612 = vunpack.c.l.b16 %v321
  %v1613 = vunpack.c.h.b16 %v321
  %v1614 = vunpack.c.l.b16 %v322
  %v1615 = vunpack.c.h.b16 %v322
  %v1616 = vunpack.c.l.b16 %v323
  %v1617 = vunpack.c.h.b16 %v323
  %v1618 = vunpack.c.l.b16 %v324
  %v1619 = vunpack.c.h.b16 %v324
  %v1620 = vunpack.c.l.b16 %v325
  %v1621 = vunpack.c.h.b16 %v325
  %v1622 = vunpack.c.l.b16 %v326
  %v1623 = vunpack.c.h.b16 %v326
  %v1624 = vunpack.c.l.b16 %v327
  %v1625 = vunpack.c.h.b16 %v327
  %v1626 = vunpack.c.l.b16 %v328
  %v1627 = vunpack.c.h.b16 %v328
  %v1628 = vunpack.c.l.b16 %v329
  %v1629 = vunpack.c.h.b16 %v329
  %v1630 = vunpack.c.l.b16 %v330
  %v1631 = vunpack.c.h.b16 %v330
  %v1632 = vunpack.c.l.b16 %v331
  %v1633 = vunpack.c.h.b16 %v331
  %v1634 = vunpack.c.l.b16 %v332
  %v1635 = vunpack.c.h.b16 %v332
  %v1636 = vunpack.c.l.b16 %v333
  %v1637 = vunpack.c.h.b16 %v333
  %v1638 = vunpack.c.l.b16 %v334
  %v1639 = vunpack.c.h.b16 %v334
  %v1640 = vunpack.c.l.b16 %v335
  %v1641 = vunpack.c.h.b16 %v335
  %v1642 = vunpack.c.l.b16 %v336
  %v1643 = vunpack.c.h.b16 %v336
  %v1644 = vunpack.c.l.b16 %v337
  %v1645 = vunpack.c.h.b16 %v337
  %v1646 = vunpack.c.l.b16 %v338
  %v1647 = vunpack.c.h.b16 %v338
  %v1648 = vunpack.c.l.b16 %v339
  %v1649 = vunpack.c.h.b16 %v339
  %v1650 = vunpack.c.l.b16 %v340
  %v1651 = vunpack.c.h.b16 %v340
  %v1652 = vunpack.c.l.b16 %v341
  %v1653 = vunpack.c.h.b16 %v341
  %v1654 = vunpack.c.l.b16 %v342
  %v1655 = vunpack.c.h.b16 %v342
  %v1656 = vunpack.c.l.b16 %v343
  %v1657 = vunpack.c.h.b16 %v343
  %v1658 = vunpack.c.l.b16 %v344
  %v1659 = vunpack.c.h.b16 %v344
  %v1660 = vunpack.c.l.b16 %v345
  %v1661 = vunpack.c.h.b16 %v345
  %v1662 = vunpack.c.l.b16 %v346
  %v1663 = vunpack.c.h.b16 %v346
  %v1664 = vunpack.c.l.b16 %v347
  %v1665 = vunpack.c.h.b16 %v347
  %v1666 = vunpack.c.l.b16 %v348
  %v1667 = vunpack.c.h.b16 %v348
  %v1668 = vunpack.c.l.b16 %v349
  %v1669 = vunpack.c.h.b16 %v349
  %v1670 = vunpack.c.l.b16 %v350
  %v1671 = vunpack.c.h.b16 %v350
  %v1672 = vunpack.c.l.b16 %v351
  %v1673 = vunpack.c.h.b16 %v351
  %v1674 = vunpack.c.l.b16 %v352
  %v1675 = vunpack.c.h.b16 %v352
  %v1676 = vunpack.c.l.b16 %v353
  %v1677 = vunpack.c.h.b16 %v353
  %v1678 = vunpack.c.l.b16 %v354
  %v1679 = vunpack.c.h.b16 %v354
  %v1680 = vunpack.c.l.b16 %v355
  %v1681 = vunpack.c.h.b16 %v355
  %v1682 = vunpack.c.l.b16 %v356
  %v1683 = vunpack.c.h.b16 %v356
  %v1684 = vunpack.c.l.b16 %v357
  %v1685 = vunpack.c.h.b16 %v357
  %v1686 = vunpack.c.l.b16 %v358
  %v1687 = vunpack.c.h.b16 %v358
  %v1688 = vunpack.c.l.b16 %v359
  %v1689 = vunpack.c.h.b16 %v359
  %v1690 = vunpack.c.l.b16 %v360
  %v1691 = vunpack.c.h.b16 %v360
  %v1692 = vunpack.c.l.b16 %v361
  %v1693 = vunpack.c.h.b16 %v361
  %v1694 = vunpack.c.l.b16 %v362
  %v1695 = vunpack.c.h.b16 %v362
  %v1696 = vunpack.c.l.b16 %v363
  %v1697 = vunpack.c.h.b16 %v363
  %v1698 = vunpack.c.l.b16 %v364
  %v1699 = vunpack.c.h.b16 %v364
  %v1700 = vunpack.c.l.b16 %v365
  %v1701 = vunpack.c.h.b16 %v365
  %v1702 = vunpack.c.l.b16 %v366
  %v1703 = vunpack.c.h.b16 %v366
  %v1704 = vunpack.c.l.b16 %v367
  %v1705 = vunpack.c.h.b16 %v367
  %v1706 = vunpack.c.l.b16 %v368
  %v1707 = vunpack.c.h.b16 %v368
  %v1708 = vunpack.c.l.b16 %v369
  %v1709 = vunpack.c.h.b16 %v369
  %v1710 = vunpack.c.l.b16 %v370
  %v1711 = vunpack.c.h.b16 %v370
  %v1712 = vunpack.c.l.b16 %v371
  %v1713 = vunpack.c.h.b16 %v371
  %v1714 = vunpack.c.l.b16 %v372
  %v1715 = vunpack.c.h.b16 %v372
  %v1716 = vunpack.c.l.b16 %v373
  %v1717 = vunpack.c.h.b16 %v373
  %v1718 = vunpack.c.l.b16 %v374
  %v1719 = vunpack.c.h.b16 %v374
  %v1720 = vunpack.c.l.b16 %v375
  %v1721 = vunpack.c.h.b16 %v375
  %v1722 = vunpack.c.l.b16 %v376
  %v1723 = vunpack.c.h.b16 %v376
  %v1724 = vunpack.c.l.b16 %v377
  %v1725 = vunpack.c.h.b16 %v377
  %v1726 = vunpack.c.l.b16 %v378
  %v1727 = vunpack.c.h.b16 %v378
  %v1728 = vunpack.c.l.b16 %v379
  %v1729 = vunpack.c.h.b16 %v379
  %v1730 = vunpack.c.l.b16 %v380
  %v1731 = vunpack.c.h.b16 %v380
  %v1732 = vunpack.c.l.b16 %v381
  %v1733 = vunpack.c.h.b16 %v381
  %v1734 = vunpack.c.l.b16 %v382
  %v1735 = vunpack.c.h.b16 %v382
  %v1736 = vunpack.c.l.b16 %v383
  %v1737 = vunpack.c.h.b16 %v383
  %v1738 = vunpack.c.l.b16 %v384
  %v1739 = vunpack.c.h.b16 %v384
  %v1740 = vunpack.c.l.b16 %v385
  %v1741 = vunpack.c.h.b16 %v385
  %v1742 = vunpack.c.l.b16 %v386
  %v1743 = vunpack.c.h.b16 %v386
  %v1744 = vunpack.c.l.b16 %v387
  %v1745 = vunpack.c.h.b16 %v387
  %v1746 = vunpack.c.l.b16 %v388
  %v1747 = vunpack.c.h.b16 %v388
  %v1748 = vunpack.c.l.b16 %v389
  %v1749 = vunpack.c.h.b16 %v389
  %v1750 = vunpack.c.l.b16 %v390
  %v1751 = vunpack.c.h.b16 %v390
  %v1752 = vunpack.c.l.b16 %v391
  %v1753 = vunpack.c.h.b16 %v391
  %v1754 = vunpack.c.l.b16 %v392
  %v1755 = vunpack.c.h.b16 %v392
  %v1756 = vunpack.c.l.b16 %v393
  %v1757 = vunpack.c.h.b16 %v393
  %v1758 = vunpack.c.l.b16 %v394
  %v1759 = vunpack.c.h.b16 %v394
  %v1760 = vunpack.c.l.b16 %v395
  %v1761 = vunpack.c.h.b16 %v395
  %v1762 = vunpack.c.l.b16 %v396
  %v1763 = vunpack.c.h.b16 %v396
  %v1764 = vunpack.c.l.b16 %v397
  %v1765 = vunpack.c.h.b16 %v397
  %v1766 = vunpack.c.l.b16 %v398
  %v1767 = vunpack.c.h.b16 %v398
  %v1768 = vunpack.c.l.b16 %v399
  %v1769 = vunpack.c.h.b16 %v399
  %v1770 = vunpack.c.l.b16 %v400
  %v1771 = vunpack.c.h.b16 %v400
  %v1772 = vunpack.c.l.b16 %v401
  %v1773 = vunpack.c.h.b16 %v401
  %v1774 = vunpack.c.l.b16 %v402
  %v1775 = vunpack.c.h.b16 %v402
  %v1776 = vunpack.c.l.b16 %v403
  %v1777 = vunpack.c.h.b16 %v403
  %v1778 = vunpack.c.l.b16 %v404
  %v1779 = vunpack.c.h.b16 %v404
  %v1780 = vunpack.c.l.b16 %v405
  %v1781 = vunpack.c.h.b16 %v405
  %v1782 = vunpack.c.l.b16 %v406
  %v1783 = vunpack.c.h.b16 %v406
  %v1784 = vunpack.c.l.b16 %v407
  %v1785 = vunpack.c.h.b16 %v407
  %v1786 = vunpack.c.l.b16 %v408
  %v1787 = vunpack.c.h.b16 %v408
  %v1788 = vunpack.c.l.b16 %v409
  %v1789 = vunpack.c.h.b16 %v409
  %v1790 = vunpack.c.l.b16 %v410
  %v1791 = vunpack.c.h.b16 %v410
  %v1792 = vunpack.c.l.b16 %v411
  %v1793 = vunpack.c.h.b16 %v411
  %v1794 = vunpack.c.l.b16 %v412
  %v1795 = vunpack.c.h.b16 %v412
  %v1796 = vunpack.c.l.b16 %v413
  %v1797 = vunpack.c.h.b16 %v413
  %v1798 = vunpack.c.l.b16 %v414
  %v1799 = vunpack.c.h.b16 %v414
  %v1800 = vunpack.c.l.b16 %v415
  %v1801 = vunpack.c.h.b16 %v415
  %v1802 = vunpack.c.l.b16 %v416
  %v1803 = vunpack.c.h.b16 %v416
  %v1804 = vunpack.c.l.b16 %v417
  %v1805 = vunpack.c.h.b16 %v417
  %v1806 = vunpack.c.l.b16 %v418
  %v1807 = vunpack.c.h.b16 %v418
  %v1808 = vunpack.c.l.b16 %v419
  %v1809 = vunpack.c.h.b16 %v419
  %v1810 = vunpack.c.l.b16 %v420
  %v1811 = vunpack.c.h.b16 %v420
  %v1812 = vunpack.c.l.b16 %v421
  %v1813 = vunpack.c.h.b16 %v421
  %v1814 = vunpack.c.l.b16 %v422
  %v1815 = vunpack.c.h.b16 %v422
  %v1816 = vunpack.c.l.b16 %v423
  %v1817 = vunpack.c.h.b16 %v423
  %v1818 = vunpack.c.l.b16 %v424
  %v1819 = vunpack.c.h.b16 %v424
  %v1820 = vunpack.c.l.b16 %v425
  %v1821 = vunpack.c.h.b16 %v425
  %v1822 = vunpack.c.l.b16 %v426
  %v1823 = vunpack.c.h.b16 %v426
  %v1824 = vunpack.c.l.b16 %v427
  %v1825 = vunpack.c.h.b16 %v427
  %v1826 = vunpack.c.l.b16 %v428
  %v1827 = vunpack.c.h.b16 %v428
  %v1828 = vunpack.c.l.b16 %v429
  %v1829 = vunpack.c.h.b16 %v429
  %v1830 = vunpack.c.l.b16 %v430
  %v1831 = vunpack.c.h.b16 %v430
  %v1832 = vunpack.c.l.b16 %v431
  %v1833 = vunpack.c.h.b16 %v431
  %v1834 = vunpack.c.l.b16 %v432
  %v1835 = vunpack.c.h.b16 %v432
  %v1836 = vunpack.c.l.b16 %v433
  %v1837 = vunpack.c.h.b16 %v433
  %v1838 = vunpack.c.l.b16 %v434
  %v1839 = vunpack.c.h.b16 %v434
  %v1840 = vunpack.c.l.b16 %v435
  %v1841 = vunpack.c.h.b16 %v435
  %v1842 = vunpack.c.l.b16 %v436
  %v1843 = vunpack.c.h.b16 %v436
  %v1844 = vunpack.c.l.b16 %v437
  %v1845 = vunpack.c.h.b16 %v437
  %v1846 = vunpack.c.l.b16 %v438
  %v1847 = vunpack.c.h.b16 %v438
  %v1848 = vunpack.c.l.b16 %v439
  %v1849 = vunpack.c.h.b16 %v439
  %v1850 = vunpack.c.l.b16 %v440
  %v1851 = vunpack.c.h.b16 %v440
  %v1852 = vunpack.c.l.b16 %v441
  %v1853 = vunpack.c.h.b16 %v441
  %v1854 = vunpack.c.l.b16 %v442
  %v1855 = vunpack.c.h.b16 %v442
  %v1856 = vunpack.c.l.b16 %v443
  %v1857 = vunpack.c.h.b16 %v443
  %v1858 = vunpack.c.l.b16 %v444
  %v1859 = vunpack.c.h.b16 %v444
  %v1860 = vunpack.c.l.b16 %v445
  %v1861 = vunpack.c.h.b16 %v445
  %v1862 = vunpack.c.l.b16 %v446
  %v1863 = vunpack.c.h.b16 %v446
  %v1864 = vunpack.c.l.b16 %v447
  %v1865 = vunpack.c.h.b16 %v447
  %v1866 = vunpack.c.l.b16 %v448
  %v1867 = vunpack.c.h.b16 %v448
  %v1868 = vunpack.c.l.b16 %v449
  %v1869 = vunpack.c.h.b16 %v449
  %v1870 = vunpack.c.l.b16 %v450
  %v1871 = vunpack.c.h.b16 %v450
  %v1872 = vunpack.c.l.b16 %v451
  %v1873 = vunpack.c.h.b16 %v451
  %v1874 = vunpack.c.l.b16 %v452
  %v1875 = vunpack.c.h.b16 %v452
  %v1876 = vunpack.c.l.b16 %v453
  %v1877 = vunpack.c.h.b16 %v453
  %v1878 = vunpack.c.l.b16 %v454
  %v1879 = vunpack.c.h.b16 %v454
  %v1880 = vunpack.c.l.b16 %v455
  %v1881 = vunpack.c.h.b16 %v455
  %v1882 = vunpack.c.l.b16 %v456
  %v1883 = vunpack.c.h.b16 %v456
  %v1884 = vunpack.c.l.b16 %v457
  %v1885 = vunpack.c.h.b16 %v457
  %v1886 = vunpack.c.l.b16 %v458
  %v1887 = vunpack.c.h.b16 %v458
  %v1888 = vunpack.c.l.b16 %v459
  %v1889 = vunpack.c.h.b16 %v459
  %v1890 = vunpack.c.l.b16 %v460
  %v1891 = vunpack.c.h.b16 %v460
  %v1892 = vunpack.c.l.b16 %v461
  %v1893 = vunpack.c.h.b16 %v461
  %v1894 = vunpack.c.l.b16 %v462
  %v1895 = vunpack.c.h.b16 %v462
  %v1896 = vunpack.c.l.b16 %v463
  %v1897 = vunpack.c.h.b16 %v463
  %v1898 = vunpack.c.l.b16 %v464
  %v1899 = vunpack.c.h.b16 %v464
  %v1900 = vunpack.c.l.b16 %v465
  %v1901 = vunpack.c.h.b16 %v465
  %v1902 = vunpack.c.l.b16 %v466
  %v1903 = vunpack.c.h.b16 %v466
  %v1904 = vunpack.c.l.b16 %v467
  %v1905 = vunpack.c.h.b16 %v467
  %v1906 = vunpack.c.l.b16 %v468
  %v1907 = vunpack.c.h.b16 %v468
  %v1908 = vunpack.c.l.b16 %v469
  %v1909 = vunpack.c.h.b16 %v469
  %v1910 = vunpack.c.l.b16 %v470
  %v1911 = vunpack.c.h.b16 %v470
  %v1912 = vunpack.c.l.b16 %v471
  %v1913 = vunpack.c.h.b16 %v471
  %v1914 = vunpack.c.l.b16 %v472
  %v1915 = vunpack.c.h.b16 %v472
  %v1916 = vunpack.c.l.b16 %v473
  %v1917 = vunpack.c.h.b16 %v473
  %v1918 = vunpack.c.l.b16 %v474
  %v1919 = vunpack.c.h.b16 %v474
  %v1920 = vunpack.c.l.b16 %v475
  %v1921 = vunpack.c.h.b16 %v475
  %v1922 = vunpack.c.l.b16 %v476
  %v1923 = vunpack.c.h.b16 %v476
  %v1924 = vunpack.c.l.b16 %v477
  %v1925 = vunpack.c.h.b16 %v477
  %v1926 = vunpack.c.l.b16 %v478
  %v1927 = vunpack.c.h.b16 %v478
  %v1928 = vunpack.c.l.b16 %v479
  %v1929 = vunpack.c.h.b16 %v479
  %v1930 = vunpack.c.l.b16 %v480
  %v1931 = vunpack.c.h.b16 %v480
  %v1932 = vunpack.c.l.b16 %v481
  %v1933 = vunpack.c.h.b16 %v481
  %v1934 = vunpack.c.l.b16 %v482
  %v1935 = vunpack.c.h.b16 %v482
  %v1936 = vunpack.c.l.b16 %v483
  %v1937 = vunpack.c.h.b16 %v483
  %v1938 = vunpack.c.l.b16 %v484
  %v1939 = vunpack.c.h.b16 %v484
  %v1940 = vunpack.c.l.b16 %v485
  %v1941 = vunpack.c.h.b16 %v485
  %v1942 = vunpack.c.l.b16 %v486
  %v1943 = vunpack.c.h.b16 %v486
  %v1944 = vunpack.c.l.b16 %v487
  %v1945 = vunpack.c.h.b16 %v487
  %v1946 = vunpack.c.l.b16 %v488
  %v1947 = vunpack.c.h.b16 %v488
  %v1948 = vunpack.c.l.b16 %v489
  %v1949 = vunpack.c.h.b16 %v489
  %v1950 = vunpack.c.l.b16 %v490
  %v1951 = vunpack.c.h.b16 %v490
  %v1952 = vunpack.c.l.b16 %v491
  %v1953 = vunpack.c.h.b16 %v491
  %v1954 = vunpack.c.l.b16 %v492
  %v1955 = vunpack.c.h.b16 %v492
  %v1956 = vunpack.c.l.b16 %v493
  %v1957 = vunpack.c.h.b16 %v493
  %v1958 = vunpack.c.l.b16 %v494
  %v1959 = vunpack.c.h.b16 %v494
  %v1960 = vunpack.c.l.b16 %v495
  %v1961 = vunpack.c.h.b16 %v495
  %v1962 = vunpack.c.l.b16 %v496
  %v1963 = vunpack.c.h.b16 %v496
  %v1964 = vunpack.c.l.b16 %v497
  %v1965 = vunpack.c.h.b16 %v497
  %v1966 = vunpack.c.l.b16 %v498
  %v1967 = vunpack.c.h.b16 %v498
  %v1968 = vunpack.c.l.b16 %v499
  %v1969 = vunpack.c.h.b16 %v499
  %v1970 = vunpack.c.l.b16 %v500
  %v1971 = vunpack.c.h.b16 %v500
  %v1972 = vunpack.c.l.b16 %v501
  %v1973 = vunpack.c.h.b16 %v501
  %v1974 = vunpack.c.l.b16 %v502
  %v1975 = vunpack.c.h.b16 %v502
  %v1976 = vunpack.c.l.b16 %v503
  %v1977 = vunpack.c.h.b16 %v503
  %v1978 = vunpack.c.l.b16 %v504
  %v1979 = vunpack.c.h.b16 %v504
  %v1980 = vunpack.c.l.b16 %v505
  %v1981 = vunpack.c.h.b16 %v505
  %v1982 = vunpack.c.l.b16 %v506
  %v1983 = vunpack.c.h.b16 %v506
  %v1984 = vunpack.c.l.b16 %v507
  %v1985 = vunpack.c.h.b16 %v507
  %v1986 = vunpack.c.l.b16 %v508
  %v1987 = vunpack.c.h.b16 %v508
  %v1988 = vunpack.c.l.b16 %v509
  %v1989 = vunpack.c.h.b16 %v509
  %v1990 = vunpack.c.l.b16 %v510
  %v1991 = vunpack.c.h.b16 %v510
  %v1992 = vunpack.c.l.b16 %v511
  %v1993 = vunpack.c.h.b16 %v511
  %v1994 = vunpack.c.l.b16 %v512
  %v1995 = vunpack.c.h.b16 %v512
  %v1996 = vunpack.c.l.b16 %v513
  %v1997 = vunpack.c.h.b16 %v513
  %v1998 = vunpack.c.l.b16 %v514
  %v1999 = vunpack.c.h.b16 %v514
  %v2000 = vunpack.c.l.b16 %v515
  %v2001 = vunpack.c.h.b16 %v515
  %v2002 = vunpack.c.l.b16 %v516
  %v2003 = vunpack.c.h.b16 %v516
  %v2004 = vunpack.c.l.b16 %v517
  %v2005 = vunpack.c.h.b16 %v517
  %v2006 = vunpack.c.l.b16 %v518
  %v2007 = vunpack.c.h.b16 %v518
  %v2008 = vunpack.c.l.b16 %v519
  %v2009 = vunpack.c.h.b16 %v519
  %v2010 = vunpack.c.l.b16 %v520
  %v2011 = vunpack.c.h.b16 %v520
  %v2012 = vunpack.c.l.b16 %v521
  %v2013 = vunpack.c.h.b16 %v521
  %v2014 = vunpack.c.l.b16 %v522
  %v2015 = vunpack.c.h.b16 %v522
  %v2016 = vunpack.c.l.b16 %v523
  %v2017 = vunpack.c.h.b16 %v523
  %v2018 = vunpack.c.l.b16 %v524
  %v2019 = vunpack.c.h.b16 %v524
  %v2020 = vunpack.c.l.b16 %v525
  %v2021 = vunpack.c.h.b16 %v525
  %v2022 = vunpack.c.l.b16 %v526
  %v2023 = vunpack.c.h.b16 %v526
  %v2024 = vunpack.c.l.b16 %v527
  %v2025 = vunpack.c.h.b16 %v527
  %v2026 = vunpack.c.l.b16 %v528
  %v2027 = vunpack.c.h.b16 %v528
  %v2028 = vunpack.c.l.b16 %v529
  %v2029 = vunpack.c.h.b16 %v529
  %v2030 = vunpack.c.l.b16 %v530
  %v2031 = vunpack.c.h.b16 %v530
  %v2032 = vunpack.c.l.b16 %v531
  %v2033 = vunpack.c.h.b16 %v531
  %v2034 = vunpack.c.l.b16 %v532
  %v2035 = vunpack.c.h.b16 %v532
  %v2036 = vunpack.c.l.b16 %v533
  %v2037 = vunpack.c.h.b16 %v533
  %v2038 = vunpack.c.l.b16 %v534
  %v2039 = vunpack.c.h.b16 %v534
  %v2040 = vunpack.c.l.b16 %v535
  %v2041 = vunpack.c.h.b16 %v535
  %v2042 = vunpack.c.l.b16 %v536
  %v2043 = vunpack.c.h.b16 %v536
  %v2044 = vunpack.c.l.b16 %v537
  %v2045 = vunpack.c.h.b16 %v537
  %v2046 = vunpack.c.l.b16 %v538
  %v2047 = vunpack.c.h.b16 %v538
  %v2048 = vunpack.c.l.b16 %v539
  %v2049 = vunpack.c.h.b16 %v539
  %v2050 = vunpack.c.l.b16 %v540
  %v2051 = vunpack.c.h.b16 %v540
  %v2052 = vunpack.c.l.b16 %v541
  %v2053 = vunpack.c.h.b16 %v541
  %v2054 = vunpack.c.l.b16 %v542
  %v2055 = vunpack.c.h.b16 %v542
  %v2056 = vunpack.c.l.b16 %v543
  %v2057 = vunpack.c.h.b16 %v543
  %v2058 = vunpack.c.l.b16 %v544
  %v2059 = vunpack.c.h.b16 %v544
  %v2060 = vunpack.c.l.b16 %v545
  %v2061 = vunpack.c.h.b16 %v545
  %v2062 = vunpack.c.l.b16 %v546
  %v2063 = vunpack.c.h.b16 %v546
  %v2064 = vunpack.c.l.b16 %v547
  %v2065 = vunpack.c.h.b16 %v547
  %v2066 = vunpack.c.l.b16 %v548
  %v2067 = vunpack.c.h.b16 %v548
  %v2068 = vunpack.c.l.b16 %v549
  %v2069 = vunpack.c.h.b16 %v549
  %v2070 = vunpack.c.l.b16 %v550
  %v2071 = vunpack.c.h.b16 %v550
  %v2072 = vunpack.c.l.b16 %v551
  %v2073 = vunpack.c.h.b16 %v551
  %v2074 = vunpack.c.l.b16 %v552
  %v2075 = vunpack.c.h.b16 %v552
  %v2076 = vunpack.c.l.b16 %v553
  %v2077 = vunpack.c.h.b16 %v553
  %v2078 = vunpack.c.l.b16 %v554
  %v2079 = vunpack.c.h.b16 %v554
  %v2080 = vunpack.c.l.b16 %v555
  %v2081 = vunpack.c.h.b16 %v555
  %v2082 = vunpack.c.l.b16 %v556
  %v2083 = vunpack.c.h.b16 %v556
  %v2084 = vunpack.c.l.b16 %v557
  %v2085 = vunpack.c.h.b16 %v557
  %v2086 = vunpack.c.l.b16 %v558
  %v2087 = vunpack.c.h.b16 %v558
  %v2088 = vunpack.c.l.b16 %v559
  %v2089 = vunpack.c.h.b16 %v559
  %v2090 = vunpack.c.l.b16 %v560
  %v2091 = vunpack.c.h.b16 %v560
  %v2092 = vunpack.c.l.b16 %v561
  %v2093 = vunpack.c.h.b16 %v561
  %v2094 = vunpack.c.l.b16 %v562
  %v2095 = vunpack.c.h.b16 %v562
  %v2096 = vunpack.c.l.b16 %v563
  %v2097 = vunpack.c.h.b16 %v563
  %v2098 = vunpack.c.l.b16 %v564
  %v2099 = vunpack.c.h.b16 %v564
  %v2100 = vunpack.c.l.b16 %v565
  %v2101 = vunpack.c.h.b16 %v565
  %v2102 = vunpack.c.l.b16 %v566
  %v2103 = vunpack.c.h.b16 %v566
  %v2104 = vunpack.c.l.b16 %v567
  %v2105 = vunpack.c.h.b16 %v567
  %v2106 = vunpack.c.l.b16 %v568
  %v2107 = vunpack.c.h.b16 %v568
  %v2108 = vunpack.c.l.b16 %v569
  %v2109 = vunpack.c.h.b16 %v569
  %v2110 = vunpack.c.l.b16 %v570
  %v2111 = vunpack.c.h.b16 %v570
  %v2112 = vunpack.c.l.b16 %v571
  %v2113 = vunpack.c.h.b16 %v571
  %v2114 = vunpack.c.l.b16 %v572
  %v2115 = vunpack.c.h.b16 %v572
  %v2116 = vunpack.c.l.b16 %v573
  %v2117 = vunpack.c.h.b16 %v573
  %v2118 = vunpack.c.l.b16 %v574
  %v2119 = vunpack.c.h.b16 %v574
  %v2120 = vunpack.c.l.b16 %v575
  %v2121 = vunpack.c.h.b16 %v575
  %v2122 = vunpack.c.l.b16 %v576
  %v2123 = vunpack.c.h.b16 %v576
  %v2124 = vunpack.c.l.b16 %v577
  %v2125 = vunpack.c.h.b16 %v577
  %v2126 = vunpack.c.l.b16 %v578
  %v2127 = vunpack.c.h.b16 %v578
  %v2128 = vunpack.c.l.b16 %v579
  %v2129 = vunpack.c.h.b16 %v579
  %v2130 = vunpack.c.l.b16 %v580
  %v2131 = vunpack.c.h.b16 %v580
  %v2132 = vunpack.c.l.b16 %v581
  %v2133 = vunpack.c.h.b16 %v581
  %v2134 = vunpack.c.l.b16 %v582
  %v2135 = vunpack.c.h.b16 %v582
  %v2136 = vunpack.c.l.b16 %v583
  %v2137 = vunpack.c.h.b16 %v583
  %v2138 = vunpack.c.l.b16 %v584
  %v2139 = vunpack.c.h.b16 %v584
  %v2140 = vunpack.c.l.b16 %v585
  %v2141 = vunpack.c.h.b16 %v585
  %v2142 = vunpack.c.l.b16 %v586
  %v2143 = vunpack.c.h.b16 %v586
  %v2144 = vunpack.c.l.b16 %v587
  %v2145 = vunpack.c.h.b16 %v587
  %v2146 = vunpack.c.l.b16 %v588
  %v2147 = vunpack.c.h.b16 %v588
  %v2148 = vunpack.c.l.b16 %v589
  %v2149 = vunpack.c.h.b16 %v589
  %v2150 = vunpack.c.l.b16 %v590
  %v2151 = vunpack.c.h.b16 %v590
  %v2152 = vunpack.c.l.b16 %v591
  %v2153 = vunpack.c.h.b16 %v591
  %v2154 = vunpack.c.l.b16 %v592
  %v2155 = vunpack.c.h.b16 %v592
  %v2156 = vunpack.c.l.b16 %v593
  %v2157 = vunpack.c.h.b16 %v593
  %v2158 = vunpack.c.l.b16 %v594
  %v2159 = vunpack.c.h.b16 %v594
  %v2160 = vunpack.c.l.b16 %v595
  %v2161 = vunpack.c.h.b16 %v595
  %v2162 = vunpack.c.l.b16 %v596
  %v2163 = vunpack.c.h.b16 %v596
  %v2164 = vunpack.c.l.b16 %v597
  %v2165 = vunpack.c.h.b16 %v597
  %v2166 = vunpack.c.l.b16 %v598
  %v2167 = vunpack.c.h.b16 %v598
  %v2168 = vunpack.c.l.b16 %v599
  %v2169 = vunpack.c.h.b16 %v599
  %v2170 = vunpack.c.l.b16 %v600
  %v2171 = vunpack.c.h.b16 %v600
  %v2172 = vunpack.c.l.b16 %v601
  %v2173 = vunpack.c.h.b16 %v601
  %v2174 = vunpack.c.l.b16 %v602
  %v2175 = vunpack.c.h.b16 %v602
  %v2176 = vunpack.c.l.b16 %v603
  %v2177 = vunpack.c.h.b16 %v603
  %v2178 = vunpack.c.l.b16 %v604
  %v2179 = vunpack.c.h.b16 %v604
  %v2180 = vunpack.c.l.b16 %v605
  %v2181 = vunpack.c.h.b16 %v605
  %v2182 = vunpack.c.l.b16 %v606
  %v2183 = vunpack.c.h.b16 %v606
  %v2184 = vunpack.c.l.b16 %v607
  %v2185 = vunpack.c.h.b16 %v607
  %v2186 = vpack.c.b16 %v1170, %v1162
  %v2187 = vpack.c.b16 %v1171, %v1163
  %v2188 = vpack.c.b16 %v1172, %v1164
  %v2189 = vpack.c.b16 %v1173, %v1165
  %v2190 = vpack.c.b16 %v1174, %v1166
  %v2191 = vpack.c.b16 %v1175, %v1167
  %v2192 = vpack.c.b16 %v1176, %v1168
  %v2193 = vpack.c.b16 %v1177, %v1169
  %v2194 = vpack.c.b16 %v1186, %v1178
  %v2195 = vpack.c.b16 %v1187, %v1179
  %v2196 = vpack.c.b16 %v1188, %v1180
  %v2197 = vpack.c.b16 %v1189, %v1181
  %v2198 = vpack.c.b16 %v1190, %v1182
  %v2199 = vpack.c.b16 %v1191, %v1183
  %v2200 = vpack.c.b16 %v1192, %v1184
  %v2201 = vpack.c.b16 %v1193, %v1185
  %v2202 = vpack.c.b16 %v1202, %v1194
  %v2203 = vpack.c.b16 %v1203, %v1195
  %v2204 = vpack.c.b16 %v1204, %v1196
  %v2205 = vpack.c.b16 %v1205, %v1197
  %v2206 = vpack.c.b16 %v1206, %v1198
  %v2207 = vpack.c.b16 %v1207, %v1199
  %v2208 = vpack.c.b16 %v1208, %v1200
  %v2209 = vpack.c.b16 %v1209, %v1201
  %v2210 = vpack.c.b16 %v1218, %v1210
  %v2211 = vpack.c.b16 %v1219, %v1211
  %v2212 = vpack.c.b16 %v1220, %v1212
  %v2213 = vpack.c.b16 %v1221, %v1213
  %v2214 = vpack.c.b16 %v1222, %v1214
  %v2215 = vpack.c.b16 %v1223, %v1215
  %v2216 = vpack.c.b16 %v1224, %v1216
  %v2217 = vpack.c.b16 %v1225, %v1217
  %v2218 = vpack.c.b16 %v1234, %v1226
  %v2219 = vpack.c.b16 %v1235, %v1227
  %v2220 = vpack.c.b16 %v1236, %v1228
  %v2221 = vpack.c.b16 %v1237, %v1229
  %v2222 = vpack.c.b16 %v1238, %v1230
  %v2223 = vpack.c.b16 %v1239, %v1231
  %v2224 = vpack.c.b16 %v1240, %v1232
  %v2225 = vpack.c.b16 %v1241, %v1233
  %v2226 = vpack.c.b16 %v1250, %v1242
  %v2227 = vpack.c.b16 %v1251, %v1243
  %v2228 = vpack.c.b16 %v1252, %v1244
  %v2229 = vpack.c.b16 %v1253, %v1245
  %v2230 = vpack.c.b16 %v1254, %v1246
  %v2231 = vpack.c.b16 %v1255, %v1247
  %v2232 = vpack.c.b16 %v1256, %v1248
  %v2233 = vpack.c.b16 %v1257, %v1249
  %v2234 = vpack.c.b16 %v1266, %v1258
  %v2235 = vpack.c.b16 %v1267, %v1259
  %v2236 = vpack.c.b16 %v1268, %v1260
  %v2237 = vpack.c.b16 %v1269, %v1261
  %v2238 = vpack.c.b16 %v1270, %v1262
  %v2239 = vpack.c.b16 %v1271, %v1263
  %v2240 = vpack.c.b16 %v1272, %v1264
  %v2241 = vpack.c.b16 %v1273, %v1265
  %v2242 = vpack.c.b16 %v1282, %v1274
  %v2243 = vpack.c.b16 %v1283, %v1275
  %v2244 = vpack.c.b16 %v1284, %v1276
  %v2245 = vpack.c.b16 %v1285, %v1277
  %v2246 = vpack.c.b16 %v1286, %v1278
  %v2247 = vpack.c.b16 %v1287, %v1279
  %v2248 = vpack.c.b16 %v1288, %v1280
  %v2249 = vpack.c.b16 %v1289, %v1281
  %v2250 = vpack.c.b16 %v1298, %v1290
  %v2251 = vpack.c.b16 %v1299, %v1291
  %v2252 = vpack.c.b16 %v1300, %v1292
  %v2253 = vpack.c.b16 %v1301, %v1293
  %v2254 = vpack.c.b16 %v1302, %v1294
  %v2255 = vpack.c.b16 %v1303, %v1295
  %v2256 = vpack.c.b16 %v1304, %v1296
  %v2257 = vpack.c.b16 %v1305, %v1297
  %v2258 = vpack.c.b16 %v1314, %v1306
  %v2259 = vpack.c.b16 %v1315, %v1307
  %v2260 = vpack.c.b16 %v1316, %v1308
  %v2261 = vpack.c.b16 %v1317, %v1309
  %v2262 = vpack.c.b16 %v1318, %v1310
  %v2263 = vpack.c.b16 %v1319, %v1311
  %v2264 = vpack.c.b16 %v1320, %v1312
  %v2265 = vpack.c.b16 %v1321, %v1313
  %v2266 = vpack.c.b16 %v1330, %v1322
  %v2267 = vpack.c.b16 %v1331, %v1323
  %v2268 = vpack.c.b16 %v1332, %v1324
  %v2269 = vpack.c.b16 %v1333, %v1325
  %v2270 = vpack.c.b16 %v1334, %v1326
  %v2271 = vpack.c.b16 %v1335, %v1327
  %v2272 = vpack.c.b16 %v1336, %v1328
  %v2273 = vpack.c.b16 %v1337, %v1329
  %v2274 = vpack.c.b16 %v1346, %v1338
  %v2275 = vpack.c.b16 %v1347, %v1339
  %v2276 = vpack.c.b16 %v1348, %v1340
  %v2277 = vpack.c.b16 %v1349, %v1341
  %v2278 = vpack.c.b16 %v1350, %v1342
  %v2279 = vpack.c.b16 %v1351, %v1343
  %v2280 = vpack.c.b16 %v1352, %v1344
  %v2281 = vpack.c.b16 %v1353, %v1345
  %v2282 = vpack.c.b16 %v1362, %v1354
  %v2283 = vpack.c.b16 %v1363, %v1355
  %v2284 = vpack.c.b16 %v1364, %v1356
  %v2285 = vpack.c.b16 %v1365, %v1357
  %v2286 = vpack.c.b16 %v1366, %v1358
  %v2287 = vpack.c.b16 %v1367, %v1359
  %v2288 = vpack.c.b16 %v1368, %v1360
  %v2289 = vpack.c.b16 %v1369, %v1361
  %v2290 = vpack.c.b16 %v1378, %v1370
  %v2291 = vpack.c.b16 %v1379, %v1371
  %v2292 = vpack.c.b16 %v1380, %v1372
  %v2293 = vpack.c.b16 %v1381, %v1373
  %v2294 = vpack.c.b16 %v1382, %v1374
  %v2295 = vpack.c.b16 %v1383, %v1375
  %v2296 = vpack.c.b16 %v1384, %v1376
  %v2297 = vpack.c.b16 %v1385, %v1377
  %v2298 = vpack.c.b16 %v1394, %v1386
  %v2299 = vpack.c.b16 %v1395, %v1387
  %v2300 = vpack.c.b16 %v1396, %v1388
  %v2301 = vpack.c.b16 %v1397, %v1389
  %v2302 = vpack.c.b16 %v1398, %v1390
  %v2303 = vpack.c.b16 %v1399, %v1391
  %v2304 = vpack.c.b16 %v1400, %v1392
  %v2305 = vpack.c.b16 %v1401, %v1393
  %v2306 = vpack.c.b16 %v1410, %v1402
  %v2307 = vpack.c.b16 %v1411, %v1403
  %v2308 = vpack.c.b16 %v1412, %v1404
  %v2309 = vpack.c.b16 %v1413, %v1405
  %v2310 = vpack.c.b16 %v1414, %v1406
  %v2311 = vpack.c.b16 %v1415, %v1407
  %v2312 = vpack.c.b16 %v1416, %v1408
  %v2313 = vpack.c.b16 %v1417, %v1409
  %v2314 = vpack.c.b16 %v1426, %v1418
  %v2315 = vpack.c.b16 %v1427, %v1419
  %v2316 = vpack.c.b16 %v1428, %v1420
  %v2317 = vpack.c.b16 %v1429, %v1421
  %v2318 = vpack.c.b16 %v1430, %v1422
  %v2319 = vpack.c.b16 %v1431, %v1423
  %v2320 = vpack.c.b16 %v1432, %v1424
  %v2321 = vpack.c.b16 %v1433, %v1425
  %v2322 = vpack.c.b16 %v1442, %v1434
  %v2323 = vpack.c.b16 %v1443, %v1435
  %v2324 = vpack.c.b16 %v1444, %v1436
  %v2325 = vpack.c.b16 %v1445, %v1437
  %v2326 = vpack.c.b16 %v1446, %v1438
  %v2327 = vpack.c.b16 %v1447, %v1439
  %v2328 = vpack.c.b16 %v1448, %v1440
  %v2329 = vpack.c.b16 %v1449, %v1441
  %v2330 = vpack.c.b16 %v1458, %v1450
  %v2331 = vpack.c.b16 %v1459, %v1451
  %v2332 = vpack.c.b16 %v1460, %v1452
  %v2333 = vpack.c.b16 %v1461, %v1453
  %v2334 = vpack.c.b16 %v1462, %v1454
  %v2335 = vpack.c.b16 %v1463, %v1455
  %v2336 = vpack.c.b16 %v1464, %v1456
  %v2337 = vpack.c.b16 %v1465, %v1457
  %v2338 = vpack.c.b16 %v1474, %v1466
  %v2339 = vpack.c.b16 %v1475, %v1467
  %v2340 = vpack.c.b16 %v1476, %v1468
  %v2341 = vpack.c.b16 %v1477, %v1469
  %v2342 = vpack.c.b16 %v1478, %v1470
  %v2343 = vpack.c.b16 %v1479, %v1471
  %v2344 = vpack.c.b16 %v1480, %v1472
  %v2345 = vpack.c.b16 %v1481, %v1473
  %v2346 = vpack.c.b16 %v1490, %v1482
  %v2347 = vpack.c.b16 %v1491, %v1483
  %v2348 = vpack.c.b16 %v1492, %v1484
  %v2349 = vpack.c.b16 %v1493, %v1485
  %v2350 = vpack.c.b16 %v1494, %v1486
  %v2351 = vpack.c.b16 %v1495, %v1487
  %v2352 = vpack.c.b16 %v1496, %v1488
  %v2353 = vpack.c.b16 %v1497, %v1489
  %v2354 = vpack.c.b16 %v1506, %v1498
  %v2355 = vpack.c.b16 %v1507, %v1499
  %v2356 = vpack.c.b16 %v1508, %v1500
  %v2357 = vpack.c.b16 %v1509, %v1501
  %v2358 = vpack.c.b16 %v1510, %v1502
  %v2359 = vpack.c.b16 %v1511, %v1503
  %v2360 = vpack.c.b16 %v1512, %v1504
  %v2361 = vpack.c.b16 %v1513, %v1505
  %v2362 = vpack.c.b16 %v1522, %v1514
  %v2363 = vpack.c.b16 %v1523, %v1515
  %v2364 = vpack.c.b16 %v1524, %v1516
  %v2365 = vpack.c.b16 %v1525, %v1517
  %v2366 = vpack.c.b16 %v1526, %v1518
  %v2367 = vpack.c.b16 %v1527, %v1519
  %v2368 = vpack.c.b16 %v1528, %v1520
  %v2369 = vpack.c.b16 %v1529, %v1521
  %v2370 = vpack.c.b16 %v1538, %v1530
  %v2371 = vpack.c.b16 %v1539, %v1531
  %v2372 = vpack.c.b16 %v1540, %v1532
  %v2373 = vpack.c.b16 %v1541, %v1533
  %v2374 = vpack.c.b16 %v1542, %v1534
  %v2375 = vpack.c.b16 %v1543, %v1535
  %v2376 = vpack.c.b16 %v1544, %v1536
  %v2377 = vpack.c.b16 %v1545, %v1537
  %v2378 = vpack.c.b16 %v1554, %v1546
  %v2379 = vpack.c.b16 %v1555, %v1547
  %v2380 = vpack.c.b16 %v1556, %v1548
  %v2381 = vpack.c.b16 %v1557, %v1549
  %v2382 = vpack.c.b16 %v1558, %v1550
  %v2383 = vpack.c.b16 %v1559, %v1551
  %v2384 = vpack.c.b16 %v1560, %v1552
  %v2385 = vpack.c.b16 %v1561, %v1553
  %v2386 = vpack.c.b16 %v1570, %v1562
  %v2387 = vpack.c.b16 %v1571, %v1563
  %v2388 = vpack.c.b16 %v1572, %v1564
  %v2389 = vpack.c.b16 %v1573, %v1565
  %v2390 = vpack.c.b16 %v1574, %v1566
  %v2391 = vpack.c.b16 %v1575, %v1567
  %v2392 = vpack.c.b16 %v1576, %v1568
  %v2393 = vpack.c.b16 %v1577, %v1569
  %v2394 = vpack.c.b16 %v1586, %v1578
  %v2395 = vpack.c.b16 %v1587, %v1579
  %v2396 = vpack.c.b16 %v1588, %v1580
  %v2397 = vpack.c.b16 %v1589, %v1581
  %v2398 = vpack.c.b16 %v1590, %v1582
  %v2399 = vpack.c.b16 %v1591, %v1583
  %v2400 = vpack.c.b16 %v1592, %v1584
  %v2401 = vpack.c.b16 %v1593, %v1585
  %v2402 = vpack.c.b16 %v1602, %v1594
  %v2403 = vpack.c.b16 %v1603, %v1595
  %v2404 = vpack.c.b16 %v1604, %v1596
  %v2405 = vpack.c.b16 %v1605, %v1597
  %v2406 = vpack.c.b16 %v1606, %v1598
  %v2407 = vpack.c.b16 %v1607, %v1599
  %v2408 = vpack.c.b16 %v1608, %v1600
  %v2409 = vpack.c.b16 %v1609, %v1601
  %v2410 = vpack.c.b16 %v1618, %v1610
  %v2411 = vpack.c.b16 %v1619, %v1611
  %v2412 = vpack.c.b16 %v1620, %v1612
  %v2413 = vpack.c.b16 %v1621, %v1613
  %v2414 = vpack.c.b16 %v1622, %v1614
  %v2415 = vpack.c.b16 %v1623, %v1615
  %v2416 = vpack.c.b16 %v1624, %v1616
  %v2417 = vpack.c.b16 %v1625, %v1617
  %v2418 = vpack.c.b16 %v1634, %v1626
  %v2419 = vpack.c.b16 %v1635, %v1627
  %v2420 = vpack.c.b16 %v1636, %v1628
  %v2421 = vpack.c.b16 %v1637, %v1629
  %v2422 = vpack.c.b16 %v1638, %v1630
  %v2423 = vpack.c.b16 %v1639, %v1631
  %v2424 = vpack.c.b16 %v1640, %v1632
  %v2425 = vpack.c.b16 %v1641, %v1633
  %v2426 = vpack.c.b16 %v1650, %v1642
  %v2427 = vpack.c.b16 %v1651, %v1643
  %v2428 = vpack.c.b16 %v1652, %v1644
  %v2429 = vpack.c.b16 %v1653, %v1645
  %v2430 = vpack.c.b16 %v1654, %v1646
  %v2431 = vpack.c.b16 %v1655, %v1647
  %v2432 = vpack.c.b16 %v1656, %v1648
  %v2433 = vpack.c.b16 %v1657, %v1649
  %v2434 = vpack.c.b16 %v1666, %v1658
  %v2435 = vpack.c.b16 %v1667, %v1659
  %v2436 = vpack.c.b16 %v1668, %v1660
  %v2437 = vpack.c.b16 %v1669, %v1661
  %v2438 = vpack.c.b16 %v1670, %v1662
  %v2439 = vpack.c.b16 %v1671, %v1663
  %v2440 = vpack.c.b16 %v1672, %v1664
  %v2441 = vpack.c.b16 %v1673, %v1665
  %v2442 = vpack.c.b16 %v1682, %v1674
  %v2443 = vpack.c.b16 %v1683, %v1675
  %v2444 = vpack.c.b16 %v1684, %v1676
  %v2445 = vpack.c.b16 %v1685, %v1677
  %v2446 = vpack.c.b16 %v1686, %v1678
  %v2447 = vpack.c.b16 %v1687, %v1679
  %v2448 = vpack.c.b16 %v1688, %v1680
  %v2449 = vpack.c.b16 %v1689, %v1681
  %v2450 = vpack.c.b16 %v1698, %v1690
  %v2451 = vpack.c.b16 %v1699, %v1691
  %v2452 = vpack.c.b16 %v1700, %v1692
  %v2453 = vpack.c.b16 %v1701, %v1693
  %v2454 = vpack.c.b16 %v1702, %v1694
  %v2455 = vpack.c.b16 %v1703, %v1695
  %v2456 = vpack.c.b16 %v1704, %v1696
  %v2457 = vpack.c.b16 %v1705, %v1697
  %v2458 = vpack.c.b16 %v1714, %v1706
  %v2459 = vpack.c.b16 %v1715, %v1707
  %v2460 = vpack.c.b16 %v1716, %v1708
  %v2461 = vpack.c.b16 %v1717, %v1709
  %v2462 = vpack.c.b16 %v1718, %v1710
  %v2463 = vpack.c.b16 %v1719, %v1711
  %v2464 = vpack.c.b16 %v1720, %v1712
  %v2465 = vpack.c.b16 %v1721, %v1713
  %v2466 = vpack.c.b16 %v1730, %v1722
  %v2467 = vpack.c.b16 %v1731, %v1723
  %v2468 = vpack.c.b16 %v1732, %v1724
  %v2469 = vpack.c.b16 %v1733, %v1725
  %v2470 = vpack.c.b16 %v1734, %v1726
  %v2471 = vpack.c.b16 %v1735, %v1727
  %v2472 = vpack.c.b16 %v1736, %v1728
  %v2473 = vpack.c.b16 %v1737, %v1729
  %v2474 = vpack.c.b16 %v1746, %v1738
  %v2475 = vpack.c.b16 %v1747, %v1739
  %v2476 = vpack.c.b16 %v1748, %v1740
  %v2477 = vpack.c.b16 %v1749, %v1741
  %v2478 = vpack.c.b16 %v1750, %v1742
  %v2479 = vpack.c.b16 %v1751, %v1743
  %v2480 = vpack.c.b16 %v1752, %v1744
  %v2481 = vpack.c.b16 %v1753, %v1745
  %v2482 = vpack.c.b16 %v1762, %v1754
  %v2483 = vpack.c.b16 %v1763, %v1755
  %v2484 = vpack.c.b16 %v1764, %v1756
  %v2485 = vpack.c.b16 %v1765, %v1757
  %v2486 = vpack.c.b16 %v1766, %v1758
  %v2487 = vpack.c.b16 %v1767, %v1759
  %v2488 = vpack.c.b16 %v1768, %v1760
  %v2489 = vpack.c.b16 %v1769, %v1761
  %v2490 = vpack.c.b16 %v1778, %v1770
  %v2491 = vpack.c.b16 %v1779, %v1771
  %v2492 = vpack.c.b16 %v1780, %v1772
  %v2493 = vpack.c.b16 %v1781, %v1773
  %v2494 = vpack.c.b16 %v1782, %v1774
  %v2495 = vpack.c.b16 %v1783, %v1775
  %v2496 = vpack.c.b16 %v1784, %v1776
  %v2497 = vpack.c.b16 %v1785, %v1777
  %v2498 = vpack.c.b16 %v1794, %v1786
  %v2499 = vpack.c.b16 %v1795, %v1787
  %v2500 = vpack.c.b16 %v1796, %v1788
  %v2501 = vpack.c.b16 %v1797, %v1789
  %v2502 = vpack.c.b16 %v1798, %v1790
  %v2503 = vpack.c.b16 %v1799, %v1791
  %v2504 = vpack.c.b16 %v1800, %v1792
  %v2505 = vpack.c.b16 %v1801, %v1793
  %v2506 = vpack.c.b16 %v1810, %v1802
  %v2507 = vpack.c.b16 %v1811, %v1803
  %v2508 = vpack.c.b16 %v1812, %v1804
  %v2509 = vpack.c.b16 %v1813, %v1805
  %v2510 = vpack.c.b16 %v1814, %v1806
  %v2511 = vpack.c.b16 %v1815, %v1807
  %v2512 = vpack.c.b16 %v1816, %v1808
  %v2513 = vpack.c.b16 %v1817, %v1809
  %v2514 = vpack.c.b16 %v1826, %v1818
  %v2515 = vpack.c.b16 %v1827, %v1819
  %v2516 = vpack.c.b16 %v1828, %v1820
  %v2517 = vpack.c.b16 %v1829, %v1821
  %v2518 = vpack.c.b16 %v1830, %v1822
  %v2519 = vpack.c.b16 %v1831, %v1823
  %v2520 = vpack.c.b16 %v1832, %v1824
  %v2521 = vpack.c.b16 %v1833, %v1825
  %v2522 = vpack.c.b16 %v1842, %v1834
  %v2523 = vpack.c.b16 %v1843, %v1835
  %v2524 = vpack.c.b16 %v1844, %v1836
  %v2525 = vpack.c.b16 %v1845, %v1837
  %v2526 = vpack.c.b16 %v1846, %v1838
  %v2527 = vpack.c.b16 %v1847, %v1839
  %v2528 = vpack.c.b16 %v1848, %v1840
  %v2529 = vpack.c.b16 %v1849, %v1841
  %v2530 = vpack.c.b16 %v1858, %v1850
  %v2531 = vpack.c.b16 %v1859, %v1851
  %v2532 = vpack.c.b16 %v1860, %v1852
  %v2533 = vpack.c.b16 %v1861, %v1853
  %v2534 = vpack.c.b16 %v1862, %v1854
  %v2535 = vpack.c.b16 %v1863, %v1855
  %v2536 = vpack.c.b16 %v1864, %v1856
  %v2537 = vpack.c.b16 %v1865, %v1857
  %v2538 = vpack.c.b16 %v1874, %v1866
  %v2539 = vpack.c.b16 %v1875, %v1867
  %v2540 = vpack.c.b16 %v1876, %v1868
  %v2541 = vpack.c.b16 %v1877, %v1869
  %v2542 = vpack.c.b16 %v1878, %v1870
  %v2543 = vpack.c.b16 %v1879, %v1871
  %v2544 = vpack.c.b16 %v1880, %v1872
  %v2545 = vpack.c.b16 %v1881, %v1873
  %v2546 = vpack.c.b16 %v1890, %v1882
  %v2547 = vpack.c.b16 %v1891, %v1883
  %v2548 = vpack.c.b16 %v1892, %v1884
  %v2549 = vpack.c.b16 %v1893, %v1885
  %v2550 = vpack.c.b16 %v1894, %v1886
  %v2551 = vpack.c.b16 %v1895, %v1887
  %v2552 = vpack.c.b16 %v1896, %v1888
  %v2553 = vpack.c.b16 %v1897, %v1889
  %v2554 = vpack.c.b16 %v1906, %v1898
  %v2555 = vpack.c.b16 %v1907, %v1899
  %v2556 = vpack.c.b16 %v1908, %v1900
  %v2557 = vpack.c.b16 %v1909, %v1901
  %v2558 = vpack.c.b16 %v1910, %v1902
  %v2559 = vpack.c.b16 %v1911, %v1903
  %v2560 = vpack.c.b16 %v1912, %v1904
  %v2561 = vpack.c.b16 %v1913, %v1905
  %v2562 = vpack.c.b16 %v1922, %v1914
  %v2563 = vpack.c.b16 %v1923, %v1915
  %v2564 = vpack.c.b16 %v1924, %v1916
  %v2565 = vpack.c.b16 %v1925, %v1917
  %v2566 = vpack.c.b16 %v1926, %v1918
  %v2567 = vpack.c.b16 %v1927, %v1919
  %v2568 = vpack.c.b16 %v1928, %v1920
  %v2569 = vpack.c.b16 %v1929, %v1921
  %v2570 = vpack.c.b16 %v1938, %v1930
  %v2571 = vpack.c.b16 %v1939, %v1931
  %v2572 = vpack.c.b16 %v1940, %v1932
  %v2573 = vpack.c.b16 %v1941, %v1933
  %v2574 = vpack.c.b16 %v1942, %v1934
  %v2575 = vpack.c.b16 %v1943, %v1935
  %v2576 = vpack.c.b16 %v1944, %v1936
  %v2577 = vpack.c.b16 %v1945, %v1937
  %v2578 = vpack.c.b16 %v1954, %v1946
  %v2579 = vpack.c.b16 %v1955, %v1947
  %v2580 = vpack.c.b16 %v1956, %v1948
  %v2581 = vpack.c.b16 %v1957, %v1949
  %v2582 = vpack.c.b16 %v1958, %v1950
  %v2583 = vpack.c.b16 %v1959, %v1951
  %v2584 = vpack.c.b16 %v1960, %v1952
  %v2585 = vpack.c.b16 %v1961, %v1953
  %v2586 = vpack.c.b16 %v1970, %v1962
  %v2587 = vpack.c.b16 %v1971, %v1963
  %v2588 = vpack.c.b16 %v1972, %v1964
  %v2589 = vpack.c.b16 %v1973, %v1965
  %v2590 = vpack.c.b16 %v1974, %v1966
  %v2591 = vpack.c.b16 %v1975, %v1967
  %v2592 = vpack.c.b16 %v1976, %v1968
  %v2593 = vpack.c.b16 %v1977, %v1969
  %v2594 = vpack.c.b16 %v1986, %v1978
  %v2595 = vpack.c.b16 %v1987, %v1979
  %v2596 = vpack.c.b16 %v1988, %v1980
  %v2597 = vpack.c.b16 %v1989, %v1981
  %v2598 = vpack.c.b16 %v1990, %v1982
  %v2599 = vpack.c.b16 %v1991, %v1983
  %v2600 = vpack.c.b16 %v1992, %v1984
  %v2601 = vpack.c.b16 %v1993, %v1985
  %v2602 = vpack.c.b16 %v2002, %v1994
  %v2603 = vpack.c.b16 %v2003, %v1995
  %v2604 = vpack.c.b16 %v2004, %v1996
  %v2605 = vpack.c.b16 %v2005, %v1997
  %v2606 = vpack.c.b16 %v2006, %v1998
  %v2607 = vpack.c.b16 %v2007, %v1999
  %v2608 = vpack.c.b16 %v2008, %v2000
  %v2609 = vpack.c.b16 %v2009, %v2001
  %v2610 = vpack.c.b16 %v2018, %v2010
  %v2611 = vpack.c.b16 %v2019, %v2011
  %v2612 = vpack.c.b16 %v2020, %v2012
  %v2613 = vpack.c.b16 %v2021, %v2013
  %v2614 = vpack.c.b16 %v2022, %v2014
  %v2615 = vpack.c.b16 %v2023, %v2015
  %v2616 = vpack.c.b16 %v2024, %v2016
  %v2617 = vpack.c.b16 %v2025, %v2017
  %v2618 = vpack.c.b16 %v2034, %v2026
  %v2619 = vpack.c.b16 %v2035, %v2027
  %v2620 = vpack.c.b16 %v2036, %v2028
  %v2621 = vpack.c.b16 %v2037, %v2029
  %v2622 = vpack.c.b16 %v2038, %v2030
  %v2623 = vpack.c.b16 %v2039, %v2031
  %v2624 = vpack.c.b16 %v2040, %v2032
  %v2625 = vpack.c.b16 %v2041, %v2033
  %v2626 = vpack.c.b16 %v2050, %v2042
  %v2627 = vpack.c.b16 %v2051, %v2043
  %v2628 = vpack.c.b16 %v2052, %v2044
  %v2629 = vpack.c.b16 %v2053, %v2045
  %v2630 = vpack.c.b16 %v2054, %v2046
  %v2631 = vpack.c.b16 %v2055, %v2047
  %v2632 = vpack.c.b16 %v2056, %v2048
  %v2633 = vpack.c.b16 %v2057, %v2049
  %v2634 = vpack.c.b16 %v2066, %v2058
  %v2635 = vpack.c.b16 %v2067, %v2059
  %v2636 = vpack.c.b16 %v2068, %v2060
  %v2637 = vpack.c.b16 %v2069, %v2061
  %v2638 = vpack.c.b16 %v2070, %v2062
  %v2639 = vpack.c.b16 %v2071, %v2063
  %v2640 = vpack.c.b16 %v2072, %v2064
  %v2641 = vpack.c.b16 %v2073, %v2065
  %v2642 = vpack.c.b16 %v2082, %v2074
  %v2643 = vpack.c.b16 %v2083, %v2075
  %v2644 = vpack.c.b16 %v2084, %v2076
  %v2645 = vpack.c.b16 %v2085, %v2077
  %v2646 = vpack.c.b16 %v2086, %v2078
  %v2647 = vpack.c.b16 %v2087, %v2079
  %v2648 = vpack.c.b16 %v2088, %v2080
  %v2649 = vpack.c.b16 %v2089, %v2081
  %v2650 = vpack.c.b16 %v2098, %v2090
  %v2651 = vpack.c.b16 %v2099, %v2091
  %v2652 = vpack.c.b16 %v2100, %v2092
  %v2653 = vpack.c.b16 %v2101, %v2093
  %v2654 = vpack.c.b16 %v2102, %v2094
  %v2655 = vpack.c.b16 %v2103, %v2095
  %v2656 = vpack.c.b16 %v2104, %v2096
  %v2657 = vpack.c.b16 %v2105, %v2097
  %v2658 = vpack.c.b16 %v2114, %v2106
  %v2659 = vpack.c.b16 %v2115, %v2107
  %v2660 = vpack.c.b16 %v2116, %v2108
  %v2661 = vpack.c.b16 %v2117, %v2109
  %v2662 = vpack.c.b16 %v2118, %v2110
  %v2663 = vpack.c.b16 %v2119, %v2111
  %v2664 = vpack.c.b16 %v2120, %v2112
  %v2665 = vpack.c.b16 %v2121, %v2113
  %v2666 = vpack.c.b16 %v2130, %v2122
  %v2667 = vpack.c.b16 %v2131, %v2123
  %v2668 = vpack.c.b16 %v2132, %v2124
  %v2669 = vpack.c.b16 %v2133, %v2125
  %v2670 = vpack.c.b16 %v2134, %v2126
  %v2671 = vpack.c.b16 %v2135, %v2127
  %v2672 = vpack.c.b16 %v2136, %v2128
  %v2673 = vpack.c.b16 %v2137, %v2129
  %v2674 = vpack.c.b16 %v2146, %v2138
  %v2675 = vpack.c.b16 %v2147, %v2139
  %v2676 = vpack.c.b16 %v2148, %v2140
  %v2677 = vpack.c.b16 %v2149, %v2141
  %v2678 = vpack.c.b16 %v2150, %v2142
  %v2679 = vpack.c.b16 %v2151, %v2143
  %v2680 = vpack.c.b16 %v2152, %v2144
  %v2681 = vpack.c.b16 %v2153, %v2145
  %v2682 = vpack.c.b16 %v2162, %v2154
  %v2683 = vpack.c.b16 %v2163, %v2155
  %v2684 = vpack.c.b16 %v2164, %v2156
  %v2685 = vpack.c.b16 %v2165, %v2157
  %v2686 = vpack.c.b16 %v2166, %v2158
  %v2687 = vpack.c.b16 %v2167, %v2159
  %v2688 = vpack.c.b16 %v2168, %v2160
  %v2689 = vpack.c.b16 %v2169, %v2161
  %v2690 = vpack.c.b16 %v2178, %v2170
  %v2691 = vpack.c.b16 %v2179, %v2171
  %v2692 = vpack.c.b16 %v2180, %v2172
  %v2693 = vpack.c.b16 %v2181, %v2173
  %v2694 = vpack.c.b16 %v2182, %v2174
  %v2695 = vpack.c.b16 %v2183, %v2175
  %v2696 = vpack.c.b16 %v2184, %v2176
  %v2697 = vpack.c.b16 %v2185, %v2177
  %3210 = vmatprep.subr.bf16.mxu0 %v2187
  %3211 = vmatpush1.bf16.msra.mxu0 %v2186
  %3212 = vmatprep.subr.bf16.mxu0 %v2195
  %3213 = vmatpush1.bf16.msra.mxu0 %v2194
  %3214 = vmatprep.subr.bf16.mxu0 %v2203
  %3215 = vmatpush1.bf16.msra.mxu0 %v2202
  %3216 = vmatprep.subr.bf16.mxu0 %v2211
  %3217 = vmatpush1.bf16.msra.mxu0 %v2210
  %3218 = vmatprep.subr.bf16.mxu0 %v2219
  %3219 = vmatpush1.bf16.msra.mxu0 %v2218
  %3220 = vmatprep.subr.bf16.mxu0 %v2227
  %3221 = vmatpush1.bf16.msra.mxu0 %v2226
  %3222 = vmatprep.subr.bf16.mxu0 %v2235
  %3223 = vmatpush1.bf16.msra.mxu0 %v2234
  %3224 = vmatprep.subr.bf16.mxu0 %v2243
  %3225 = vmatpush1.bf16.msra.mxu0 %v2242
  %3226 = vmatprep.subr.bf16.mxu0 %v2251
  %3227 = vmatpush1.bf16.msra.mxu0 %v2250
  %3228 = vmatprep.subr.bf16.mxu0 %v2259
  %3229 = vmatpush1.bf16.msra.mxu0 %v2258
  %3230 = vmatprep.subr.bf16.mxu0 %v2267
  %3231 = vmatpush1.bf16.msra.mxu0 %v2266
  %3232 = vmatprep.subr.bf16.mxu0 %v2275
  %3233 = vmatpush1.bf16.msra.mxu0 %v2274
  %3234 = vmatprep.subr.bf16.mxu0 %v2283
  %3235 = vmatpush1.bf16.msra.mxu0 %v2282
  %3236 = vmatprep.subr.bf16.mxu0 %v2291
  %3237 = vmatpush1.bf16.msra.mxu0 %v2290
  %3238 = vmatprep.subr.bf16.mxu0 %v2299
  %3239 = vmatpush1.bf16.msra.mxu0 %v2298
  %3240 = vmatprep.subr.bf16.mxu0 %v2307
  %3241 = vmatpush1.bf16.msra.mxu0 %v2306
  %3242 = vmatprep.mubr.bf16.mxu0 %v89
  %3243 = vmatmul.mubr.bf16.gmra.mrb[0].mxu0 %v88
  %v3244 = vpop.f32.mrb[0].mxu0
  %v3245 = vadd.f32 %v613, %v3244
  %v3246 = vpop.f32.mrb[0].mxu0
  %v3247 = vadd.f32 %v617, %v3246
  %v3248 = vpop.f32.mrb[0].mxu0
  %v3249 = vpop.f32.mrb[0].mxu0
  %3250 = vdwg.mxu0
  %3251 = vmatprep.subr.bf16.mxu0 %v2315
  %3252 = vmatpush1.bf16.msra.mxu0 %v2314
  %3253 = vmatprep.subr.bf16.mxu0 %v2323
  %3254 = vmatpush1.bf16.msra.mxu0 %v2322
  %3255 = vmatprep.subr.bf16.mxu0 %v2331
  %3256 = vmatpush1.bf16.msra.mxu0 %v2330
  %3257 = vmatprep.subr.bf16.mxu0 %v2339
  %3258 = vmatpush1.bf16.msra.mxu0 %v2338
  %3259 = vmatprep.subr.bf16.mxu0 %v2347
  %3260 = vmatpush1.bf16.msra.mxu0 %v2346
  %3261 = vmatprep.subr.bf16.mxu0 %v2355
  %3262 = vmatpush1.bf16.msra.mxu0 %v2354
  %3263 = vmatprep.subr.bf16.mxu0 %v2363
  %3264 = vmatpush1.bf16.msra.mxu0 %v2362
  %3265 = vmatprep.subr.bf16.mxu0 %v2371
  %3266 = vmatpush1.bf16.msra.mxu0 %v2370
  %3267 = vmatprep.subr.bf16.mxu0 %v2379
  %3268 = vmatpush1.bf16.msra.mxu0 %v2378
  %3269 = vmatprep.subr.bf16.mxu0 %v2387
  %3270 = vmatpush1.bf16.msra.mxu0 %v2386
  %3271 = vmatprep.subr.bf16.mxu0 %v2395
  %3272 = vmatpush1.bf16.msra.mxu0 %v2394
  %3273 = vmatprep.subr.bf16.mxu0 %v2403
  %3274 = vmatpush1.bf16.msra.mxu0 %v2402
  %3275 = vmatprep.subr.bf16.mxu0 %v2411
  %3276 = vmatpush1.bf16.msra.mxu0 %v2410
  %3277 = vmatprep.subr.bf16.mxu0 %v2419
  %3278 = vmatpush1.bf16.msra.mxu0 %v2418
  %3279 = vmatprep.subr.bf16.mxu0 %v2427
  %3280 = vmatpush1.bf16.msra.mxu0 %v2426
  %3281 = vmatprep.subr.bf16.mxu0 %v2435
  %3282 = vmatpush1.bf16.msra.mxu0 %v2434
  %3283 = vmatprep.mubr.bf16.mxu0 %v91
  %3284 = vmatmul.mubr.bf16.gmra.mrb[0].mxu0 %v90
  %v3285 = vpop.f32.mrb[0].mxu0
  %v3286 = vadd.f32 %v3245, %v3285
  %v3287 = vpop.f32.mrb[0].mxu0
  %v3288 = vadd.f32 %v3247, %v3287
  %v3289 = vpop.f32.mrb[0].mxu0
  %v3290 = vpop.f32.mrb[0].mxu0
  %3291 = vdwg.mxu0
  %3292 = vmatprep.subr.bf16.mxu0 %v2443
  %3293 = vmatpush1.bf16.msra.mxu0 %v2442
  %3294 = vmatprep.subr.bf16.mxu0 %v2451
  %3295 = vmatpush1.bf16.msra.mxu0 %v2450
  %3296 = vmatprep.subr.bf16.mxu0 %v2459
  %3297 = vmatpush1.bf16.msra.mxu0 %v2458
  %3298 = vmatprep.subr.bf16.mxu0 %v2467
  %3299 = vmatpush1.bf16.msra.mxu0 %v2466
  %3300 = vmatprep.subr.bf16.mxu0 %v2475
  %3301 = vmatpush1.bf16.msra.mxu0 %v2474
  %3302 = vmatprep.subr.bf16.mxu0 %v2483
  %3303 = vmatpush1.bf16.msra.mxu0 %v2482
  %3304 = vmatprep.subr.bf16.mxu0 %v2491
  %3305 = vmatpush1.bf16.msra.mxu0 %v2490
  %3306 = vmatprep.subr.bf16.mxu0 %v2499
  %3307 = vmatpush1.bf16.msra.mxu0 %v2498
  %3308 = vmatprep.subr.bf16.mxu0 %v2507
  %3309 = vmatpush1.bf16.msra.mxu0 %v2506
  %3310 = vmatprep.subr.bf16.mxu0 %v2515
  %3311 = vmatpush1.bf16.msra.mxu0 %v2514
  %3312 = vmatprep.subr.bf16.mxu0 %v2523
  %3313 = vmatpush1.bf16.msra.mxu0 %v2522
  %3314 = vmatprep.subr.bf16.mxu0 %v2531
  %3315 = vmatpush1.bf16.msra.mxu0 %v2530
  %3316 = vmatprep.subr.bf16.mxu0 %v2539
  %3317 = vmatpush1.bf16.msra.mxu0 %v2538
  %3318 = vmatprep.subr.bf16.mxu0 %v2547
  %3319 = vmatpush1.bf16.msra.mxu0 %v2546
  %3320 = vmatprep.subr.bf16.mxu0 %v2555
  %3321 = vmatpush1.bf16.msra.mxu0 %v2554
  %3322 = vmatprep.subr.bf16.mxu0 %v2563
  %3323 = vmatpush1.bf16.msra.mxu0 %v2562
  %3324 = vmatprep.mubr.bf16.mxu0 %v93
  %3325 = vmatmul.mubr.bf16.gmra.mrb[0].mxu0 %v92
  %v3326 = vpop.f32.mrb[0].mxu0
  %v3327 = vadd.f32 %v3286, %v3326
  %v3328 = vpop.f32.mrb[0].mxu0
  %v3329 = vadd.f32 %v3288, %v3328
  %v3330 = vpop.f32.mrb[0].mxu0
  %v3331 = vpop.f32.mrb[0].mxu0
  %3332 = vdwg.mxu0
  %3333 = vmatprep.subr.bf16.mxu0 %v2571
  %3334 = vmatpush1.bf16.msra.mxu0 %v2570
  %3335 = vmatprep.subr.bf16.mxu0 %v2579
  %3336 = vmatpush1.bf16.msra.mxu0 %v2578
  %3337 = vmatprep.subr.bf16.mxu0 %v2587
  %3338 = vmatpush1.bf16.msra.mxu0 %v2586
  %3339 = vmatprep.subr.bf16.mxu0 %v2595
  %3340 = vmatpush1.bf16.msra.mxu0 %v2594
  %3341 = vmatprep.subr.bf16.mxu0 %v2603
  %3342 = vmatpush1.bf16.msra.mxu0 %v2602
  %3343 = vmatprep.subr.bf16.mxu0 %v2611
  %3344 = vmatpush1.bf16.msra.mxu0 %v2610
  %3345 = vmatprep.subr.bf16.mxu0 %v2619
  %3346 = vmatpush1.bf16.msra.mxu0 %v2618
  %3347 = vmatprep.subr.bf16.mxu0 %v2627
  %3348 = vmatpush1.bf16.msra.mxu0 %v2626
  %3349 = vmatprep.subr.bf16.mxu0 %v2635
  %3350 = vmatpush1.bf16.msra.mxu0 %v2634
  %3351 = vmatprep.subr.bf16.mxu0 %v2643
  %3352 = vmatpush1.bf16.msra.mxu0 %v2642
  %3353 = vmatprep.subr.bf16.mxu0 %v2651
  %3354 = vmatpush1.bf16.msra.mxu0 %v2650
  %3355 = vmatprep.subr.bf16.mxu0 %v2659
  %3356 = vmatpush1.bf16.msra.mxu0 %v2658
  %3357 = vmatprep.subr.bf16.mxu0 %v2667
  %3358 = vmatpush1.bf16.msra.mxu0 %v2666
  %3359 = vmatprep.subr.bf16.mxu0 %v2675
  %3360 = vmatpush1.bf16.msra.mxu0 %v2674
  %3361 = vmatprep.subr.bf16.mxu0 %v2683
  %3362 = vmatpush1.bf16.msra.mxu0 %v2682
  %3363 = vmatprep.subr.bf16.mxu0 %v2691
  %3364 = vmatpush1.bf16.msra.mxu0 %v2690
  %3365 = vmatprep.mubr.bf16.mxu0 %v95
  %3366 = vmatmul.mubr.bf16.gmra.mrb[0].mxu0 %v94
  %v3367 = vpop.f32.mrb[0].mxu0
  %v3368 = vadd.f32 %v3327, %v3367
  %v3369 = vpop.f32.mrb[0].mxu0
  %v3370 = vadd.f32 %v3329, %v3369
  %v3371 = vpop.f32.mrb[0].mxu0
  %v3372 = vpop.f32.mrb[0].mxu0
  %3373 = vdwg.mxu0
  %3374 = vmatprep.subr.bf16.mxu0 %v2189
  %3375 = vmatpush1.bf16.msra.mxu0 %v2188
  %3376 = vmatprep.subr.bf16.mxu0 %v2197
  %3377 = vmatpush1.bf16.msra.mxu0 %v2196
  %3378 = vmatprep.subr.bf16.mxu0 %v2205
  %3379 = vmatpush1.bf16.msra.mxu0 %v2204
  %3380 = vmatprep.subr.bf16.mxu0 %v2213
  %3381 = vmatpush1.bf16.msra.mxu0 %v2212
  %3382 = vmatprep.subr.bf16.mxu0 %v2221
  %3383 = vmatpush1.bf16.msra.mxu0 %v2220
  %3384 = vmatprep.subr.bf16.mxu0 %v2229
  %3385 = vmatpush1.bf16.msra.mxu0 %v2228
  %3386 = vmatprep.subr.bf16.mxu0 %v2237
  %3387 = vmatpush1.bf16.msra.mxu0 %v2236
  %3388 = vmatprep.subr.bf16.mxu0 %v2245
  %3389 = vmatpush1.bf16.msra.mxu0 %v2244
  %3390 = vmatprep.subr.bf16.mxu0 %v2253
  %3391 = vmatpush1.bf16.msra.mxu0 %v2252
  %3392 = vmatprep.subr.bf16.mxu0 %v2261
  %3393 = vmatpush1.bf16.msra.mxu0 %v2260
  %3394 = vmatprep.subr.bf16.mxu0 %v2269
  %3395 = vmatpush1.bf16.msra.mxu0 %v2268
  %3396 = vmatprep.subr.bf16.mxu0 %v2277
  %3397 = vmatpush1.bf16.msra.mxu0 %v2276
  %3398 = vmatprep.subr.bf16.mxu0 %v2285
  %3399 = vmatpush1.bf16.msra.mxu0 %v2284
  %3400 = vmatprep.subr.bf16.mxu0 %v2293
  %3401 = vmatpush1.bf16.msra.mxu0 %v2292
  %3402 = vmatprep.subr.bf16.mxu0 %v2301
  %3403 = vmatpush1.bf16.msra.mxu0 %v2300
  %3404 = vmatprep.subr.bf16.mxu0 %v2309
  %3405 = vmatpush1.bf16.msra.mxu0 %v2308
  %3406 = vmatprep.mubr.bf16.mxu0 %v89
  %3407 = vmatmul.mubr.bf16.gmra.mrb[0].mxu0 %v88
  %v3408 = vpop.f32.mrb[0].mxu0
  %v3409 = vadd.f32 %v621, %v3408
  %v3410 = vpop.f32.mrb[0].mxu0
  %v3411 = vadd.f32 %v625, %v3410
  %v3412 = vpop.f32.mrb[0].mxu0
  %v3413 = vpop.f32.mrb[0].mxu0
  %3414 = vdwg.mxu0
  %3415 = vmatprep.subr.bf16.mxu0 %v2317
  %3416 = vmatpush1.bf16.msra.mxu0 %v2316
  %3417 = vmatprep.subr.bf16.mxu0 %v2325
  %3418 = vmatpush1.bf16.msra.mxu0 %v2324
  %3419 = vmatprep.subr.bf16.mxu0 %v2333
  %3420 = vmatpush1.bf16.msra.mxu0 %v2332
  %3421 = vmatprep.subr.bf16.mxu0 %v2341
  %3422 = vmatpush1.bf16.msra.mxu0 %v2340
  %3423 = vmatprep.subr.bf16.mxu0 %v2349
  %3424 = vmatpush1.bf16.msra.mxu0 %v2348
  %3425 = vmatprep.subr.bf16.mxu0 %v2357
  %3426 = vmatpush1.bf16.msra.mxu0 %v2356
  %3427 = vmatprep.subr.bf16.mxu0 %v2365
  %3428 = vmatpush1.bf16.msra.mxu0 %v2364
  %3429 = vmatprep.subr.bf16.mxu0 %v2373
  %3430 = vmatpush1.bf16.msra.mxu0 %v2372
  %3431 = vmatprep.subr.bf16.mxu0 %v2381
  %3432 = vmatpush1.bf16.msra.mxu0 %v2380
  %3433 = vmatprep.subr.bf16.mxu0 %v2389
  %3434 = vmatpush1.bf16.msra.mxu0 %v2388
  %3435 = vmatprep.subr.bf16.mxu0 %v2397
  %3436 = vmatpush1.bf16.msra.mxu0 %v2396
  %3437 = vmatprep.subr.bf16.mxu0 %v2405
  %3438 = vmatpush1.bf16.msra.mxu0 %v2404
  %3439 = vmatprep.subr.bf16.mxu0 %v2413
  %3440 = vmatpush1.bf16.msra.mxu0 %v2412
  %3441 = vmatprep.subr.bf16.mxu0 %v2421
  %3442 = vmatpush1.bf16.msra.mxu0 %v2420
  %3443 = vmatprep.subr.bf16.mxu0 %v2429
  %3444 = vmatpush1.bf16.msra.mxu0 %v2428
  %3445 = vmatprep.subr.bf16.mxu0 %v2437
  %3446 = vmatpush1.bf16.msra.mxu0 %v2436
  %3447 = vmatprep.mubr.bf16.mxu0 %v91
  %3448 = vmatmul.mubr.bf16.gmra.mrb[0].mxu0 %v90
  %v3449 = vpop.f32.mrb[0].mxu0
  %v3450 = vadd.f32 %v3409, %v3449
  %v3451 = vpop.f32.mrb[0].mxu0
  %v3452 = vadd.f32 %v3411, %v3451
  %v3453 = vpop.f32.mrb[0].mxu0
  %v3454 = vpop.f32.mrb[0].mxu0
  %3455 = vdwg.mxu0
  %3456 = vmatprep.subr.bf16.mxu0 %v2445
  %3457 = vmatpush1.bf16.msra.mxu0 %v2444
  %3458 = vmatprep.subr.bf16.mxu0 %v2453
  %3459 = vmatpush1.bf16.msra.mxu0 %v2452
  %3460 = vmatprep.subr.bf16.mxu0 %v2461
  %3461 = vmatpush1.bf16.msra.mxu0 %v2460
  %3462 = vmatprep.subr.bf16.mxu0 %v2469
  %3463 = vmatpush1.bf16.msra.mxu0 %v2468
  %3464 = vmatprep.subr.bf16.mxu0 %v2477
  %3465 = vmatpush1.bf16.msra.mxu0 %v2476
  %3466 = vmatprep.subr.bf16.mxu0 %v2485
  %3467 = vmatpush1.bf16.msra.mxu0 %v2484
  %3468 = vmatprep.subr.bf16.mxu0 %v2493
  %3469 = vmatpush1.bf16.msra.mxu0 %v2492
  %3470 = vmatprep.subr.bf16.mxu0 %v2501
  %3471 = vmatpush1.bf16.msra.mxu0 %v2500
  %3472 = vmatprep.subr.bf16.mxu0 %v2509
  %3473 = vmatpush1.bf16.msra.mxu0 %v2508
  %3474 = vmatprep.subr.bf16.mxu0 %v2517
  %3475 = vmatpush1.bf16.msra.mxu0 %v2516
  %3476 = vmatprep.subr.bf16.mxu0 %v2525
  %3477 = vmatpush1.bf16.msra.mxu0 %v2524
  %3478 = vmatprep.subr.bf16.mxu0 %v2533
  %3479 = vmatpush1.bf16.msra.mxu0 %v2532
  %3480 = vmatprep.subr.bf16.mxu0 %v2541
  %3481 = vmatpush1.bf16.msra.mxu0 %v2540
  %3482 = vmatprep.subr.bf16.mxu0 %v2549
  %3483 = vmatpush1.bf16.msra.mxu0 %v2548
  %3484 = vmatprep.subr.bf16.mxu0 %v2557
  %3485 = vmatpush1.bf16.msra.mxu0 %v2556
  %3486 = vmatprep.subr.bf16.mxu0 %v2565
  %3487 = vmatpush1.bf16.msra.mxu0 %v2564
  %3488 = vmatprep.mubr.bf16.mxu0 %v93
  %3489 = vmatmul.mubr.bf16.gmra.mrb[0].mxu0 %v92
  %v3490 = vpop.f32.mrb[0].mxu0
  %v3491 = vadd.f32 %v3450, %v3490
  %v3492 = vpop.f32.mrb[0].mxu0
  %v3493 = vadd.f32 %v3452, %v3492
  %v3494 = vpop.f32.mrb[0].mxu0
  %v3495 = vpop.f32.mrb[0].mxu0
  %3496 = vdwg.mxu0
  %3497 = vmatprep.subr.bf16.mxu0 %v2573
  %3498 = vmatpush1.bf16.msra.mxu0 %v2572
  %3499 = vmatprep.subr.bf16.mxu0 %v2581
  %3500 = vmatpush1.bf16.msra.mxu0 %v2580
  %3501 = vmatprep.subr.bf16.mxu0 %v2589
  %3502 = vmatpush1.bf16.msra.mxu0 %v2588
  %3503 = vmatprep.subr.bf16.mxu0 %v2597
  %3504 = vmatpush1.bf16.msra.mxu0 %v2596
  %3505 = vmatprep.subr.bf16.mxu0 %v2605
  %3506 = vmatpush1.bf16.msra.mxu0 %v2604
  %3507 = vmatprep.subr.bf16.mxu0 %v2613
  %3508 = vmatpush1.bf16.msra.mxu0 %v2612
  %3509 = vmatprep.subr.bf16.mxu0 %v2621
  %3510 = vmatpush1.bf16.msra.mxu0 %v2620
  %3511 = vmatprep.subr.bf16.mxu0 %v2629
  %3512 = vmatpush1.bf16.msra.mxu0 %v2628
  %3513 = vmatprep.subr.bf16.mxu0 %v2637
  %3514 = vmatpush1.bf16.msra.mxu0 %v2636
  %3515 = vmatprep.subr.bf16.mxu0 %v2645
  %3516 = vmatpush1.bf16.msra.mxu0 %v2644
  %3517 = vmatprep.subr.bf16.mxu0 %v2653
  %3518 = vmatpush1.bf16.msra.mxu0 %v2652
  %3519 = vmatprep.subr.bf16.mxu0 %v2661
  %3520 = vmatpush1.bf16.msra.mxu0 %v2660
  %3521 = vmatprep.subr.bf16.mxu0 %v2669
  %3522 = vmatpush1.bf16.msra.mxu0 %v2668
  %3523 = vmatprep.subr.bf16.mxu0 %v2677
  %3524 = vmatpush1.bf16.msra.mxu0 %v2676
  %3525 = vmatprep.subr.bf16.mxu0 %v2685
  %3526 = vmatpush1.bf16.msra.mxu0 %v2684
  %3527 = vmatprep.subr.bf16.mxu0 %v2693
  %3528 = vmatpush1.bf16.msra.mxu0 %v2692
  %3529 = vmatprep.mubr.bf16.mxu0 %v95
  %3530 = vmatmul.mubr.bf16.gmra.mrb[0].mxu0 %v94
  %v3531 = vpop.f32.mrb[0].mxu0
  %v3532 = vadd.f32 %v3491, %v3531
  %v3533 = vpop.f32.mrb[0].mxu0
  %v3534 = vadd.f32 %v3493, %v3533
  %v3535 = vpop.f32.mrb[0].mxu0
  %v3536 = vpop.f32.mrb[0].mxu0
  %3537 = vdwg.mxu0
  %3538 = vmatprep.subr.bf16.mxu0 %v2191
  %3539 = vmatpush1.bf16.msra.mxu0 %v2190
  %3540 = vmatprep.subr.bf16.mxu0 %v2199
  %3541 = vmatpush1.bf16.msra.mxu0 %v2198
  %3542 = vmatprep.subr.bf16.mxu0 %v2207
  %3543 = vmatpush1.bf16.msra.mxu0 %v2206
  %3544 = vmatprep.subr.bf16.mxu0 %v2215
  %3545 = vmatpush1.bf16.msra.mxu0 %v2214
  %3546 = vmatprep.subr.bf16.mxu0 %v2223
  %3547 = vmatpush1.bf16.msra.mxu0 %v2222
  %3548 = vmatprep.subr.bf16.mxu0 %v2231
  %3549 = vmatpush1.bf16.msra.mxu0 %v2230
  %3550 = vmatprep.subr.bf16.mxu0 %v2239
  %3551 = vmatpush1.bf16.msra.mxu0 %v2238
  %3552 = vmatprep.subr.bf16.mxu0 %v2247
  %3553 = vmatpush1.bf16.msra.mxu0 %v2246
  %3554 = vmatprep.subr.bf16.mxu0 %v2255
  %3555 = vmatpush1.bf16.msra.mxu0 %v2254
  %3556 = vmatprep.subr.bf16.mxu0 %v2263
  %3557 = vmatpush1.bf16.msra.mxu0 %v2262
  %3558 = vmatprep.subr.bf16.mxu0 %v2271
  %3559 = vmatpush1.bf16.msra.mxu0 %v2270
  %3560 = vmatprep.subr.bf16.mxu0 %v2279
  %3561 = vmatpush1.bf16.msra.mxu0 %v2278
  %3562 = vmatprep.subr.bf16.mxu0 %v2287
  %3563 = vmatpush1.bf16.msra.mxu0 %v2286
  %3564 = vmatprep.subr.bf16.mxu0 %v2295
  %3565 = vmatpush1.bf16.msra.mxu0 %v2294
  %3566 = vmatprep.subr.bf16.mxu0 %v2303
  %3567 = vmatpush1.bf16.msra.mxu0 %v2302
  %3568 = vmatprep.subr.bf16.mxu0 %v2311
  %3569 = vmatpush1.bf16.msra.mxu0 %v2310
  %3570 = vmatprep.mubr.bf16.mxu0 %v89
  %3571 = vmatmul.mubr.bf16.gmra.mrb[0].mxu0 %v88
  %v3572 = vpop.f32.mrb[0].mxu0
  %v3573 = vadd.f32 %v629, %v3572
  %v3574 = vpop.f32.mrb[0].mxu0
  %v3575 = vadd.f32 %v633, %v3574
  %v3576 = vpop.f32.mrb[0].mxu0
  %v3577 = vpop.f32.mrb[0].mxu0
  %3578 = vdwg.mxu0
  %3579 = vmatprep.subr.bf16.mxu0 %v2319
  %3580 = vmatpush1.bf16.msra.mxu0 %v2318
  %3581 = vmatprep.subr.bf16.mxu0 %v2327
  %3582 = vmatpush1.bf16.msra.mxu0 %v2326
  %3583 = vmatprep.subr.bf16.mxu0 %v2335
  %3584 = vmatpush1.bf16.msra.mxu0 %v2334
  %3585 = vmatprep.subr.bf16.mxu0 %v2343
  %3586 = vmatpush1.bf16.msra.mxu0 %v2342
  %3587 = vmatprep.subr.bf16.mxu0 %v2351
  %3588 = vmatpush1.bf16.msra.mxu0 %v2350
  %3589 = vmatprep.subr.bf16.mxu0 %v2359
  %3590 = vmatpush1.bf16.msra.mxu0 %v2358
  %3591 = vmatprep.subr.bf16.mxu0 %v2367
  %3592 = vmatpush1.bf16.msra.mxu0 %v2366
  %3593 = vmatprep.subr.bf16.mxu0 %v2375
  %3594 = vmatpush1.bf16.msra.mxu0 %v2374
  %3595 = vmatprep.subr.bf16.mxu0 %v2383
  %3596 = vmatpush1.bf16.msra.mxu0 %v2382
  %3597 = vmatprep.subr.bf16.mxu0 %v2391
  %3598 = vmatpush1.bf16.msra.mxu0 %v2390
  %3599 = vmatprep.subr.bf16.mxu0 %v2399
  %3600 = vmatpush1.bf16.msra.mxu0 %v2398
  %3601 = vmatprep.subr.bf16.mxu0 %v2407
  %3602 = vmatpush1.bf16.msra.mxu0 %v2406
  %3603 = vmatprep.subr.bf16.mxu0 %v2415
  %3604 = vmatpush1.bf16.msra.mxu0 %v2414
  %3605 = vmatprep.subr.bf16.mxu0 %v2423
  %3606 = vmatpush1.bf16.msra.mxu0 %v2422
  %3607 = vmatprep.subr.bf16.mxu0 %v2431
  %3608 = vmatpush1.bf16.msra.mxu0 %v2430
  %3609 = vmatprep.subr.bf16.mxu0 %v2439
  %3610 = vmatpush1.bf16.msra.mxu0 %v2438
  %3611 = vmatprep.mubr.bf16.mxu0 %v91
  %3612 = vmatmul.mubr.bf16.gmra.mrb[0].mxu0 %v90
  %v3613 = vpop.f32.mrb[0].mxu0
  %v3614 = vadd.f32 %v3573, %v3613
  %v3615 = vpop.f32.mrb[0].mxu0
  %v3616 = vadd.f32 %v3575, %v3615
  %v3617 = vpop.f32.mrb[0].mxu0
  %v3618 = vpop.f32.mrb[0].mxu0
  %3619 = vdwg.mxu0
  %3620 = vmatprep.subr.bf16.mxu0 %v2447
  %3621 = vmatpush1.bf16.msra.mxu0 %v2446
  %3622 = vmatprep.subr.bf16.mxu0 %v2455
  %3623 = vmatpush1.bf16.msra.mxu0 %v2454
  %3624 = vmatprep.subr.bf16.mxu0 %v2463
  %3625 = vmatpush1.bf16.msra.mxu0 %v2462
  %3626 = vmatprep.subr.bf16.mxu0 %v2471
  %3627 = vmatpush1.bf16.msra.mxu0 %v2470
  %3628 = vmatprep.subr.bf16.mxu0 %v2479
  %3629 = vmatpush1.bf16.msra.mxu0 %v2478
  %3630 = vmatprep.subr.bf16.mxu0 %v2487
  %3631 = vmatpush1.bf16.msra.mxu0 %v2486
  %3632 = vmatprep.subr.bf16.mxu0 %v2495
  %3633 = vmatpush1.bf16.msra.mxu0 %v2494
  %3634 = vmatprep.subr.bf16.mxu0 %v2503
  %3635 = vmatpush1.bf16.msra.mxu0 %v2502
  %3636 = vmatprep.subr.bf16.mxu0 %v2511
  %3637 = vmatpush1.bf16.msra.mxu0 %v2510
  %3638 = vmatprep.subr.bf16.mxu0 %v2519
  %3639 = vmatpush1.bf16.msra.mxu0 %v2518
  %3640 = vmatprep.subr.bf16.mxu0 %v2527
  %3641 = vmatpush1.bf16.msra.mxu0 %v2526
  %3642 = vmatprep.subr.bf16.mxu0 %v2535
  %3643 = vmatpush1.bf16.msra.mxu0 %v2534
  %3644 = vmatprep.subr.bf16.mxu0 %v2543
  %3645 = vmatpush1.bf16.msra.mxu0 %v2542
  %3646 = vmatprep.subr.bf16.mxu0 %v2551
  %3647 = vmatpush1.bf16.msra.mxu0 %v2550
  %3648 = vmatprep.subr.bf16.mxu0 %v2559
  %3649 = vmatpush1.bf16.msra.mxu0 %v2558
  %3650 = vmatprep.subr.bf16.mxu0 %v2567
  %3651 = vmatpush1.bf16.msra.mxu0 %v2566
  %3652 = vmatprep.mubr.bf16.mxu0 %v93
  %3653 = vmatmul.mubr.bf16.gmra.mrb[0].mxu0 %v92
  %v3654 = vpop.f32.mrb[0].mxu0
  %v3655 = vadd.f32 %v3614, %v3654
  %v3656 = vpop.f32.mrb[0].mxu0
  %v3657 = vadd.f32 %v3616, %v3656
  %v3658 = vpop.f32.mrb[0].mxu0
  %v3659 = vpop.f32.mrb[0].mxu0
  %3660 = vdwg.mxu0
  %3661 = vmatprep.subr.bf16.mxu0 %v2575
  %3662 = vmatpush1.bf16.msra.mxu0 %v2574
  %3663 = vmatprep.subr.bf16.mxu0 %v2583
  %3664 = vmatpush1.bf16.msra.mxu0 %v2582
  %3665 = vmatprep.subr.bf16.mxu0 %v2591
  %3666 = vmatpush1.bf16.msra.mxu0 %v2590
  %3667 = vmatprep.subr.bf16.mxu0 %v2599
  %3668 = vmatpush1.bf16.msra.mxu0 %v2598
  %3669 = vmatprep.subr.bf16.mxu0 %v2607
  %3670 = vmatpush1.bf16.msra.mxu0 %v2606
  %3671 = vmatprep.subr.bf16.mxu0 %v2615
  %3672 = vmatpush1.bf16.msra.mxu0 %v2614
  %3673 = vmatprep.subr.bf16.mxu0 %v2623
  %3674 = vmatpush1.bf16.msra.mxu0 %v2622
  %3675 = vmatprep.subr.bf16.mxu0 %v2631
  %3676 = vmatpush1.bf16.msra.mxu0 %v2630
  %3677 = vmatprep.subr.bf16.mxu0 %v2639
  %3678 = vmatpush1.bf16.msra.mxu0 %v2638
  %3679 = vmatprep.subr.bf16.mxu0 %v2647
  %3680 = vmatpush1.bf16.msra.mxu0 %v2646
  %3681 = vmatprep.subr.bf16.mxu0 %v2655
  %3682 = vmatpush1.bf16.msra.mxu0 %v2654
  %3683 = vmatprep.subr.bf16.mxu0 %v2663
  %3684 = vmatpush1.bf16.msra.mxu0 %v2662
  %3685 = vmatprep.subr.bf16.mxu0 %v2671
  %3686 = vmatpush1.bf16.msra.mxu0 %v2670
  %3687 = vmatprep.subr.bf16.mxu0 %v2679
  %3688 = vmatpush1.bf16.msra.mxu0 %v2678
  %3689 = vmatprep.subr.bf16.mxu0 %v2687
  %3690 = vmatpush1.bf16.msra.mxu0 %v2686
  %3691 = vmatprep.subr.bf16.mxu0 %v2695
  %3692 = vmatpush1.bf16.msra.mxu0 %v2694
  %3693 = vmatprep.mubr.bf16.mxu0 %v95
  %3694 = vmatmul.mubr.bf16.gmra.mrb[0].mxu0 %v94
  %v3695 = vpop.f32.mrb[0].mxu0
  %v3696 = vadd.f32 %v3655, %v3695
  %v3697 = vpop.f32.mrb[0].mxu0
  %v3698 = vadd.f32 %v3657, %v3697
  %v3699 = vpop.f32.mrb[0].mxu0
  %v3700 = vpop.f32.mrb[0].mxu0
  %3701 = vdwg.mxu0
  %3702 = vmatprep.subr.bf16.mxu0 %v2193
  %3703 = vmatpush1.bf16.msra.mxu0 %v2192
  %3704 = vmatprep.subr.bf16.mxu0 %v2201
  %3705 = vmatpush1.bf16.msra.mxu0 %v2200
  %3706 = vmatprep.subr.bf16.mxu0 %v2209
  %3707 = vmatpush1.bf16.msra.mxu0 %v2208
  %3708 = vmatprep.subr.bf16.mxu0 %v2217
  %3709 = vmatpush1.bf16.msra.mxu0 %v2216
  %3710 = vmatprep.subr.bf16.mxu0 %v2225
  %3711 = vmatpush1.bf16.msra.mxu0 %v2224
  %3712 = vmatprep.subr.bf16.mxu0 %v2233
  %3713 = vmatpush1.bf16.msra.mxu0 %v2232
  %3714 = vmatprep.subr.bf16.mxu0 %v2241
  %3715 = vmatpush1.bf16.msra.mxu0 %v2240
  %3716 = vmatprep.subr.bf16.mxu0 %v2249
  %3717 = vmatpush1.bf16.msra.mxu0 %v2248
  %3718 = vmatprep.subr.bf16.mxu0 %v2257
  %3719 = vmatpush1.bf16.msra.mxu0 %v2256
  %3720 = vmatprep.subr.bf16.mxu0 %v2265
  %3721 = vmatpush1.bf16.msra.mxu0 %v2264
  %3722 = vmatprep.subr.bf16.mxu0 %v2273
  %3723 = vmatpush1.bf16.msra.mxu0 %v2272
  %3724 = vmatprep.subr.bf16.mxu0 %v2281
  %3725 = vmatpush1.bf16.msra.mxu0 %v2280
  %3726 = vmatprep.subr.bf16.mxu0 %v2289
  %3727 = vmatpush1.bf16.msra.mxu0 %v2288
  %3728 = vmatprep.subr.bf16.mxu0 %v2297
  %3729 = vmatpush1.bf16.msra.mxu0 %v2296
  %3730 = vmatprep.subr.bf16.mxu0 %v2305
  %3731 = vmatpush1.bf16.msra.mxu0 %v2304
  %3732 = vmatprep.subr.bf16.mxu0 %v2313
  %3733 = vmatpush1.bf16.msra.mxu0 %v2312
  %3734 = vmatprep.mubr.bf16.mxu0 %v89
  %3735 = vmatmul.mubr.bf16.gmra.mrb[0].mxu0 %v88
  %v3736 = vpop.f32.mrb[0].mxu0
  %v3737 = vadd.f32 %v637, %v3736
  %v3738 = vpop.f32.mrb[0].mxu0
  %v3739 = vadd.f32 %v641, %v3738
  %v3740 = vpop.f32.mrb[0].mxu0
  %v3741 = vpop.f32.mrb[0].mxu0
  %3742 = vdwg.mxu0
  %3743 = vmatprep.subr.bf16.mxu0 %v2321
  %3744 = vmatpush1.bf16.msra.mxu0 %v2320
  %3745 = vmatprep.subr.bf16.mxu0 %v2329
  %3746 = vmatpush1.bf16.msra.mxu0 %v2328
  %3747 = vmatprep.subr.bf16.mxu0 %v2337
  %3748 = vmatpush1.bf16.msra.mxu0 %v2336
  %3749 = vmatprep.subr.bf16.mxu0 %v2345
  %3750 = vmatpush1.bf16.msra.mxu0 %v2344
  %3751 = vmatprep.subr.bf16.mxu0 %v2353
  %3752 = vmatpush1.bf16.msra.mxu0 %v2352
  %3753 = vmatprep.subr.bf16.mxu0 %v2361
  %3754 = vmatpush1.bf16.msra.mxu0 %v2360
  %3755 = vmatprep.subr.bf16.mxu0 %v2369
  %3756 = vmatpush1.bf16.msra.mxu0 %v2368
  %3757 = vmatprep.subr.bf16.mxu0 %v2377
  %3758 = vmatpush1.bf16.msra.mxu0 %v2376
  %3759 = vmatprep.subr.bf16.mxu0 %v2385
  %3760 = vmatpush1.bf16.msra.mxu0 %v2384
  %3761 = vmatprep.subr.bf16.mxu0 %v2393
  %3762 = vmatpush1.bf16.msra.mxu0 %v2392
  %3763 = vmatprep.subr.bf16.mxu0 %v2401
  %3764 = vmatpush1.bf16.msra.mxu0 %v2400
  %3765 = vmatprep.subr.bf16.mxu0 %v2409
  %3766 = vmatpush1.bf16.msra.mxu0 %v2408
  %3767 = vmatprep.subr.bf16.mxu0 %v2417
  %3768 = vmatpush1.bf16.msra.mxu0 %v2416
  %3769 = vmatprep.subr.bf16.mxu0 %v2425
  %3770 = vmatpush1.bf16.msra.mxu0 %v2424
  %3771 = vmatprep.subr.bf16.mxu0 %v2433
  %3772 = vmatpush1.bf16.msra.mxu0 %v2432
  %3773 = vmatprep.subr.bf16.mxu0 %v2441
  %3774 = vmatpush1.bf16.msra.mxu0 %v2440
  %3775 = vmatprep.mubr.bf16.mxu0 %v91
  %3776 = vmatmul.mubr.bf16.gmra.mrb[0].mxu0 %v90
  %v3777 = vpop.f32.mrb[0].mxu0
  %v3778 = vadd.f32 %v3737, %v3777
  %v3779 = vpop.f32.mrb[0].mxu0
  %v3780 = vadd.f32 %v3739, %v3779
  %v3781 = vpop.f32.mrb[0].mxu0
  %v3782 = vpop.f32.mrb[0].mxu0
  %3783 = vdwg.mxu0
  %3784 = vmatprep.subr.bf16.mxu0 %v2449
  %3785 = vmatpush1.bf16.msra.mxu0 %v2448
  %3786 = vmatprep.subr.bf16.mxu0 %v2457
  %3787 = vmatpush1.bf16.msra.mxu0 %v2456
  %3788 = vmatprep.subr.bf16.mxu0 %v2465
  %3789 = vmatpush1.bf16.msra.mxu0 %v2464
  %3790 = vmatprep.subr.bf16.mxu0 %v2473
  %3791 = vmatpush1.bf16.msra.mxu0 %v2472
  %3792 = vmatprep.subr.bf16.mxu0 %v2481
  %3793 = vmatpush1.bf16.msra.mxu0 %v2480
  %3794 = vmatprep.subr.bf16.mxu0 %v2489
  %3795 = vmatpush1.bf16.msra.mxu0 %v2488
  %3796 = vmatprep.subr.bf16.mxu0 %v2497
  %3797 = vmatpush1.bf16.msra.mxu0 %v2496
  %3798 = vmatprep.subr.bf16.mxu0 %v2505
  %3799 = vmatpush1.bf16.msra.mxu0 %v2504
  %3800 = vmatprep.subr.bf16.mxu0 %v2513
  %3801 = vmatpush1.bf16.msra.mxu0 %v2512
  %3802 = vmatprep.subr.bf16.mxu0 %v2521
  %3803 = vmatpush1.bf16.msra.mxu0 %v2520
  %3804 = vmatprep.subr.bf16.mxu0 %v2529
  %3805 = vmatpush1.bf16.msra.mxu0 %v2528
  %3806 = vmatprep.subr.bf16.mxu0 %v2537
  %3807 = vmatpush1.bf16.msra.mxu0 %v2536
  %3808 = vmatprep.subr.bf16.mxu0 %v2545
  %3809 = vmatpush1.bf16.msra.mxu0 %v2544
  %3810 = vmatprep.subr.bf16.mxu0 %v2553
  %3811 = vmatpush1.bf16.msra.mxu0 %v2552
  %3812 = vmatprep.subr.bf16.mxu0 %v2561
  %3813 = vmatpush1.bf16.msra.mxu0 %v2560
  %3814 = vmatprep.subr.bf16.mxu0 %v2569
  %3815 = vmatpush1.bf16.msra.mxu0 %v2568
  %3816 = vmatprep.mubr.bf16.mxu0 %v93
  %3817 = vmatmul.mubr.bf16.gmra.mrb[0].mxu0 %v92
  %v3818 = vpop.f32.mrb[0].mxu0
  %v3819 = vadd.f32 %v3778, %v3818
  %v3820 = vpop.f32.mrb[0].mxu0
  %v3821 = vadd.f32 %v3780, %v3820
  %v3822 = vpop.f32.mrb[0].mxu0
  %v3823 = vpop.f32.mrb[0].mxu0
  %3824 = vdwg.mxu0
  %3825 = vmatprep.subr.bf16.mxu0 %v2577
  %3826 = vmatpush1.bf16.msra.mxu0 %v2576
  %3827 = vmatprep.subr.bf16.mxu0 %v2585
  %3828 = vmatpush1.bf16.msra.mxu0 %v2584
  %3829 = vmatprep.subr.bf16.mxu0 %v2593
  %3830 = vmatpush1.bf16.msra.mxu0 %v2592
  %3831 = vmatprep.subr.bf16.mxu0 %v2601
  %3832 = vmatpush1.bf16.msra.mxu0 %v2600
  %3833 = vmatprep.subr.bf16.mxu0 %v2609
  %3834 = vmatpush1.bf16.msra.mxu0 %v2608
  %3835 = vmatprep.subr.bf16.mxu0 %v2617
  %3836 = vmatpush1.bf16.msra.mxu0 %v2616
  %3837 = vmatprep.subr.bf16.mxu0 %v2625
  %3838 = vmatpush1.bf16.msra.mxu0 %v2624
  %3839 = vmatprep.subr.bf16.mxu0 %v2633
  %3840 = vmatpush1.bf16.msra.mxu0 %v2632
  %3841 = vmatprep.subr.bf16.mxu0 %v2641
  %3842 = vmatpush1.bf16.msra.mxu0 %v2640
  %3843 = vmatprep.subr.bf16.mxu0 %v2649
  %3844 = vmatpush1.bf16.msra.mxu0 %v2648
  %3845 = vmatprep.subr.bf16.mxu0 %v2657
  %3846 = vmatpush1.bf16.msra.mxu0 %v2656
  %3847 = vmatprep.subr.bf16.mxu0 %v2665
  %3848 = vmatpush1.bf16.msra.mxu0 %v2664
  %3849 = vmatprep.subr.bf16.mxu0 %v2673
  %3850 = vmatpush1.bf16.msra.mxu0 %v2672
  %3851 = vmatprep.subr.bf16.mxu0 %v2681
  %3852 = vmatpush1.bf16.msra.mxu0 %v2680
  %3853 = vmatprep.subr.bf16.mxu0 %v2689
  %3854 = vmatpush1.bf16.msra.mxu0 %v2688
  %3855 = vmatprep.subr.bf16.mxu0 %v2697
  %3856 = vmatpush1.bf16.msra.mxu0 %v2696
  %3857 = vmatprep.mubr.bf16.mxu0 %v95
  %3858 = vmatmul.mubr.bf16.gmra.mrb[0].mxu0 %v94
  %v3859 = vpop.f32.mrb[0].mxu0
  %v3860 = vadd.f32 %v3819, %v3859
  %v3861 = vpop.f32.mrb[0].mxu0
  %v3862 = vadd.f32 %v3821, %v3861
  %v3863 = vpop.f32.mrb[0].mxu0
  %v3864 = vpop.f32.mrb[0].mxu0
  %3865 = vdwg.mxu0
  %v3866 = vmax.f32 %v3368, 0.0
  %v3867 = vmax.f32 %v3370, 0.0
  %v3868 = vmax.f32 %v3532, 0.0
  %v3869 = vmax.f32 %v3534, 0.0
  %v3870 = vmax.f32 %v3696, 0.0
  %v3871 = vmax.f32 %v3698, 0.0
  %v3872 = vmax.f32 %v3860, 0.0
  %v3873 = vmax.f32 %v3862, 0.0
  %v3874 = vpack.c.bf16 %v3866, %v3866
  %v3875 = vpack.c.bf16 %v3867, %v3867
  %v3876 = vpack.c.bf16 %v3868, %v3868
  %v3877 = vpack.c.bf16 %v3869, %v3869
  %v3878 = vpack.c.bf16 %v3870, %v3870
  %v3879 = vpack.c.bf16 %v3871, %v3871
  %v3880 = vpack.c.bf16 %v3872, %v3872
  %v3881 = vpack.c.bf16 %v3873, %v3873
  %v3882 = vld [vmem:[%s4] sm:$0xff]
  %v3883 = vld [vmem:[%s4 + $0x8] sm:$0xff]
  %v3884 = vld [vmem:[%s4 + $0x10] sm:$0xff]
  %v3885 = vld [vmem:[%s4 + $0x18] sm:$0xff]
  %v3886 = vld [vmem:[%s4 + $0x20] sm:$0xff]
  %v3887 = vld [vmem:[%s4 + $0x28] sm:$0xff]
  %v3888 = vld [vmem:[%s4 + $0x30] sm:$0xff]
  %v3889 = vld [vmem:[%s4 + $0x38] sm:$0xff]
  %v3890 = vld [vmem:[%s4 + $0x40] sm:$0xff]
  %v3891 = vld [vmem:[%s4 + $0x48] sm:$0xff]
  %v3892 = vld [vmem:[%s4 + $0x50] sm:$0xff]
  %v3893 = vld [vmem:[%s4 + $0x58] sm:$0xff]
  %v3894 = vld [vmem:[%s4 + $0x60] sm:$0xff]
  %v3895 = vld [vmem:[%s4 + $0x68] sm:$0xff]
  %v3896 = vld [vmem:[%s4 + $0x70] sm:$0xff]
  %v3897 = vld [vmem:[%s4 + $0x78] sm:$0xff]
  %v3898 = vld [vmem:[%s4 + $0x80] sm:$0xff]
  %v3899 = vld [vmem:[%s4 + $0x88] sm:$0xff]
  %v3900 = vld [vmem:[%s4 + $0x90] sm:$0xff]
  %v3901 = vld [vmem:[%s4 + $0x98] sm:$0xff]
  %v3902 = vld [vmem:[%s4 + $0xa0] sm:$0xff]
  %v3903 = vld [vmem:[%s4 + $0xa8] sm:$0xff]
  %v3904 = vld [vmem:[%s4 + $0xb0] sm:$0xff]
  %v3905 = vld [vmem:[%s4 + $0xb8] sm:$0xff]
  %v3906 = vld [vmem:[%s4 + $0xc0] sm:$0xff]
  %v3907 = vld [vmem:[%s4 + $0xc8] sm:$0xff]
  %v3908 = vld [vmem:[%s4 + $0xd0] sm:$0xff]
  %v3909 = vld [vmem:[%s4 + $0xd8] sm:$0xff]
  %v3910 = vld [vmem:[%s4 + $0xe0] sm:$0xff]
  %v3911 = vld [vmem:[%s4 + $0xe8] sm:$0xff]
  %v3912 = vld [vmem:[%s4 + $0xf0] sm:$0xff]
  %v3913 = vld [vmem:[%s4 + $0xf8] sm:$0xff]
  %v3914 = vld [vmem:[%s4 + $0x100] sm:$0xff]
  %v3915 = vld [vmem:[%s4 + $0x108] sm:$0xff]
  %v3916 = vld [vmem:[%s4 + $0x110] sm:$0xff]
  %v3917 = vld [vmem:[%s4 + $0x118] sm:$0xff]
  %v3918 = vld [vmem:[%s4 + $0x120] sm:$0xff]
  %v3919 = vld [vmem:[%s4 + $0x128] sm:$0xff]
  %v3920 = vld [vmem:[%s4 + $0x130] sm:$0xff]
  %v3921 = vld [vmem:[%s4 + $0x138] sm:$0xff]
  %v3922 = vld [vmem:[%s4 + $0x140] sm:$0xff]
  %v3923 = vld [vmem:[%s4 + $0x148] sm:$0xff]
  %v3924 = vld [vmem:[%s4 + $0x150] sm:$0xff]
  %v3925 = vld [vmem:[%s4 + $0x158] sm:$0xff]
  %v3926 = vld [vmem:[%s4 + $0x160] sm:$0xff]
  %v3927 = vld [vmem:[%s4 + $0x168] sm:$0xff]
  %v3928 = vld [vmem:[%s4 + $0x170] sm:$0xff]
  %v3929 = vld [vmem:[%s4 + $0x178] sm:$0xff]
  %v3930 = vld [vmem:[%s4 + $0x180] sm:$0xff]
  %v3931 = vld [vmem:[%s4 + $0x188] sm:$0xff]
  %v3932 = vld [vmem:[%s4 + $0x190] sm:$0xff]
  %v3933 = vld [vmem:[%s4 + $0x198] sm:$0xff]
  %v3934 = vld [vmem:[%s4 + $0x1a0] sm:$0xff]
  %v3935 = vld [vmem:[%s4 + $0x1a8] sm:$0xff]
  %v3936 = vld [vmem:[%s4 + $0x1b0] sm:$0xff]
  %v3937 = vld [vmem:[%s4 + $0x1b8] sm:$0xff]
  %v3938 = vld [vmem:[%s4 + $0x1c0] sm:$0xff]
  %v3939 = vld [vmem:[%s4 + $0x1c8] sm:$0xff]
  %v3940 = vld [vmem:[%s4 + $0x1d0] sm:$0xff]
  %v3941 = vld [vmem:[%s4 + $0x1d8] sm:$0xff]
  %v3942 = vld [vmem:[%s4 + $0x1e0] sm:$0xff]
  %v3943 = vld [vmem:[%s4 + $0x1e8] sm:$0xff]
  %v3944 = vld [vmem:[%s4 + $0x1f0] sm:$0xff]
  %v3945 = vld [vmem:[%s4 + $0x1f8] sm:$0xff]
  %v3946 = vld [vmem:[%s4 + $0x200] sm:$0xff]
  %v3947 = vld [vmem:[%s4 + $0x208] sm:$0xff]
  %v3948 = vld [vmem:[%s4 + $0x210] sm:$0xff]
  %v3949 = vld [vmem:[%s4 + $0x218] sm:$0xff]
  %v3950 = vld [vmem:[%s4 + $0x220] sm:$0xff]
  %v3951 = vld [vmem:[%s4 + $0x228] sm:$0xff]
  %v3952 = vld [vmem:[%s4 + $0x230] sm:$0xff]
  %v3953 = vld [vmem:[%s4 + $0x238] sm:$0xff]
  %v3954 = vld [vmem:[%s4 + $0x240] sm:$0xff]
  %v3955 = vld [vmem:[%s4 + $0x248] sm:$0xff]
  %v3956 = vld [vmem:[%s4 + $0x250] sm:$0xff]
  %v3957 = vld [vmem:[%s4 + $0x258] sm:$0xff]
  %v3958 = vld [vmem:[%s4 + $0x260] sm:$0xff]
  %v3959 = vld [vmem:[%s4 + $0x268] sm:$0xff]
  %v3960 = vld [vmem:[%s4 + $0x270] sm:$0xff]
  %v3961 = vld [vmem:[%s4 + $0x278] sm:$0xff]
  %v3962 = vld [vmem:[%s4 + $0x280] sm:$0xff]
  %v3963 = vld [vmem:[%s4 + $0x288] sm:$0xff]
  %v3964 = vld [vmem:[%s4 + $0x290] sm:$0xff]
  %v3965 = vld [vmem:[%s4 + $0x298] sm:$0xff]
  %v3966 = vld [vmem:[%s4 + $0x2a0] sm:$0xff]
  %v3967 = vld [vmem:[%s4 + $0x2a8] sm:$0xff]
  %v3968 = vld [vmem:[%s4 + $0x2b0] sm:$0xff]
  %v3969 = vld [vmem:[%s4 + $0x2b8] sm:$0xff]
  %v3970 = vld [vmem:[%s4 + $0x2c0] sm:$0xff]
  %v3971 = vld [vmem:[%s4 + $0x2c8] sm:$0xff]
  %v3972 = vld [vmem:[%s4 + $0x2d0] sm:$0xff]
  %v3973 = vld [vmem:[%s4 + $0x2d8] sm:$0xff]
  %v3974 = vld [vmem:[%s4 + $0x2e0] sm:$0xff]
  %v3975 = vld [vmem:[%s4 + $0x2e8] sm:$0xff]
  %v3976 = vld [vmem:[%s4 + $0x2f0] sm:$0xff]
  %v3977 = vld [vmem:[%s4 + $0x2f8] sm:$0xff]
  %v3978 = vld [vmem:[%s4 + $0x300] sm:$0xff]
  %v3979 = vld [vmem:[%s4 + $0x308] sm:$0xff]
  %v3980 = vld [vmem:[%s4 + $0x310] sm:$0xff]
  %v3981 = vld [vmem:[%s4 + $0x318] sm:$0xff]
  %v3982 = vld [vmem:[%s4 + $0x320] sm:$0xff]
  %v3983 = vld [vmem:[%s4 + $0x328] sm:$0xff]
  %v3984 = vld [vmem:[%s4 + $0x330] sm:$0xff]
  %v3985 = vld [vmem:[%s4 + $0x338] sm:$0xff]
  %v3986 = vld [vmem:[%s4 + $0x340] sm:$0xff]
  %v3987 = vld [vmem:[%s4 + $0x348] sm:$0xff]
  %v3988 = vld [vmem:[%s4 + $0x350] sm:$0xff]
  %v3989 = vld [vmem:[%s4 + $0x358] sm:$0xff]
  %v3990 = vld [vmem:[%s4 + $0x360] sm:$0xff]
  %v3991 = vld [vmem:[%s4 + $0x368] sm:$0xff]
  %v3992 = vld [vmem:[%s4 + $0x370] sm:$0xff]
  %v3993 = vld [vmem:[%s4 + $0x378] sm:$0xff]
  %v3994 = vld [vmem:[%s4 + $0x380] sm:$0xff]
  %v3995 = vld [vmem:[%s4 + $0x388] sm:$0xff]
  %v3996 = vld [vmem:[%s4 + $0x390] sm:$0xff]
  %v3997 = vld [vmem:[%s4 + $0x398] sm:$0xff]
  %v3998 = vld [vmem:[%s4 + $0x3a0] sm:$0xff]
  %v3999 = vld [vmem:[%s4 + $0x3a8] sm:$0xff]
  %v4000 = vld [vmem:[%s4 + $0x3b0] sm:$0xff]
  %v4001 = vld [vmem:[%s4 + $0x3b8] sm:$0xff]
  %v4002 = vld [vmem:[%s4 + $0x3c0] sm:$0xff]
  %v4003 = vld [vmem:[%s4 + $0x3c8] sm:$0xff]
  %v4004 = vld [vmem:[%s4 + $0x3d0] sm:$0xff]
  %v4005 = vld [vmem:[%s4 + $0x3d8] sm:$0xff]
  %v4006 = vld [vmem:[%s4 + $0x3e0] sm:$0xff]
  %v4007 = vld [vmem:[%s4 + $0x3e8] sm:$0xff]
  %v4008 = vld [vmem:[%s4 + $0x3f0] sm:$0xff]
  %v4009 = vld [vmem:[%s4 + $0x3f8] sm:$0xff]
  %v4010 = vld [vmem:[%s4 + $0x400] sm:$0xff]
  %v4011 = vld [vmem:[%s4 + $0x408] sm:$0xff]
  %v4012 = vld [vmem:[%s4 + $0x410] sm:$0xff]
  %v4013 = vld [vmem:[%s4 + $0x418] sm:$0xff]
  %v4014 = vld [vmem:[%s4 + $0x420] sm:$0xff]
  %v4015 = vld [vmem:[%s4 + $0x428] sm:$0xff]
  %v4016 = vld [vmem:[%s4 + $0x430] sm:$0xff]
  %v4017 = vld [vmem:[%s4 + $0x438] sm:$0xff]
  %v4018 = vld [vmem:[%s4 + $0x440] sm:$0xff]
  %v4019 = vld [vmem:[%s4 + $0x448] sm:$0xff]
  %v4020 = vld [vmem:[%s4 + $0x450] sm:$0xff]
  %v4021 = vld [vmem:[%s4 + $0x458] sm:$0xff]
  %v4022 = vld [vmem:[%s4 + $0x460] sm:$0xff]
  %v4023 = vld [vmem:[%s4 + $0x468] sm:$0xff]
  %v4024 = vld [vmem:[%s4 + $0x470] sm:$0xff]
  %v4025 = vld [vmem:[%s4 + $0x478] sm:$0xff]
  %v4026 = vld [vmem:[%s4 + $0x480] sm:$0xff]
  %v4027 = vld [vmem:[%s4 + $0x488] sm:$0xff]
  %v4028 = vld [vmem:[%s4 + $0x490] sm:$0xff]
  %v4029 = vld [vmem:[%s4 + $0x498] sm:$0xff]
  %v4030 = vld [vmem:[%s4 + $0x4a0] sm:$0xff]
  %v4031 = vld [vmem:[%s4 + $0x4a8] sm:$0xff]
  %v4032 = vld [vmem:[%s4 + $0x4b0] sm:$0xff]
  %v4033 = vld [vmem:[%s4 + $0x4b8] sm:$0xff]
  %v4034 = vld [vmem:[%s4 + $0x4c0] sm:$0xff]
  %v4035 = vld [vmem:[%s4 + $0x4c8] sm:$0xff]
  %v4036 = vld [vmem:[%s4 + $0x4d0] sm:$0xff]
  %v4037 = vld [vmem:[%s4 + $0x4d8] sm:$0xff]
  %v4038 = vld [vmem:[%s4 + $0x4e0] sm:$0xff]
  %v4039 = vld [vmem:[%s4 + $0x4e8] sm:$0xff]
  %v4040 = vld [vmem:[%s4 + $0x4f0] sm:$0xff]
  %v4041 = vld [vmem:[%s4 + $0x4f8] sm:$0xff]
  %v4042 = vld [vmem:[%s4 + $0x500] sm:$0xff]
  %v4043 = vld [vmem:[%s4 + $0x508] sm:$0xff]
  %v4044 = vld [vmem:[%s4 + $0x510] sm:$0xff]
  %v4045 = vld [vmem:[%s4 + $0x518] sm:$0xff]
  %v4046 = vld [vmem:[%s4 + $0x520] sm:$0xff]
  %v4047 = vld [vmem:[%s4 + $0x528] sm:$0xff]
  %v4048 = vld [vmem:[%s4 + $0x530] sm:$0xff]
  %v4049 = vld [vmem:[%s4 + $0x538] sm:$0xff]
  %v4050 = vld [vmem:[%s4 + $0x540] sm:$0xff]
  %v4051 = vld [vmem:[%s4 + $0x548] sm:$0xff]
  %v4052 = vld [vmem:[%s4 + $0x550] sm:$0xff]
  %v4053 = vld [vmem:[%s4 + $0x558] sm:$0xff]
  %v4054 = vld [vmem:[%s4 + $0x560] sm:$0xff]
  %v4055 = vld [vmem:[%s4 + $0x568] sm:$0xff]
  %v4056 = vld [vmem:[%s4 + $0x570] sm:$0xff]
  %v4057 = vld [vmem:[%s4 + $0x578] sm:$0xff]
  %v4058 = vld [vmem:[%s4 + $0x580] sm:$0xff]
  %v4059 = vld [vmem:[%s4 + $0x588] sm:$0xff]
  %v4060 = vld [vmem:[%s4 + $0x590] sm:$0xff]
  %v4061 = vld [vmem:[%s4 + $0x598] sm:$0xff]
  %v4062 = vld [vmem:[%s4 + $0x5a0] sm:$0xff]
  %v4063 = vld [vmem:[%s4 + $0x5a8] sm:$0xff]
  %v4064 = vld [vmem:[%s4 + $0x5b0] sm:$0xff]
  %v4065 = vld [vmem:[%s4 + $0x5b8] sm:$0xff]
  %v4066 = vld [vmem:[%s4 + $0x5c0] sm:$0xff]
  %v4067 = vld [vmem:[%s4 + $0x5c8] sm:$0xff]
  %v4068 = vld [vmem:[%s4 + $0x5d0] sm:$0xff]
  %v4069 = vld [vmem:[%s4 + $0x5d8] sm:$0xff]
  %v4070 = vld [vmem:[%s4 + $0x5e0] sm:$0xff]
  %v4071 = vld [vmem:[%s4 + $0x5e8] sm:$0xff]
  %v4072 = vld [vmem:[%s4 + $0x5f0] sm:$0xff]
  %v4073 = vld [vmem:[%s4 + $0x5f8] sm:$0xff]
  %v4074 = vld [vmem:[%s4 + $0x600] sm:$0xff]
  %v4075 = vld [vmem:[%s4 + $0x608] sm:$0xff]
  %v4076 = vld [vmem:[%s4 + $0x610] sm:$0xff]
  %v4077 = vld [vmem:[%s4 + $0x618] sm:$0xff]
  %v4078 = vld [vmem:[%s4 + $0x620] sm:$0xff]
  %v4079 = vld [vmem:[%s4 + $0x628] sm:$0xff]
  %v4080 = vld [vmem:[%s4 + $0x630] sm:$0xff]
  %v4081 = vld [vmem:[%s4 + $0x638] sm:$0xff]
  %v4082 = vld [vmem:[%s4 + $0x640] sm:$0xff]
  %v4083 = vld [vmem:[%s4 + $0x648] sm:$0xff]
  %v4084 = vld [vmem:[%s4 + $0x650] sm:$0xff]
  %v4085 = vld [vmem:[%s4 + $0x658] sm:$0xff]
  %v4086 = vld [vmem:[%s4 + $0x660] sm:$0xff]
  %v4087 = vld [vmem:[%s4 + $0x668] sm:$0xff]
  %v4088 = vld [vmem:[%s4 + $0x670] sm:$0xff]
  %v4089 = vld [vmem:[%s4 + $0x678] sm:$0xff]
  %v4090 = vld [vmem:[%s4 + $0x680] sm:$0xff]
  %v4091 = vld [vmem:[%s4 + $0x688] sm:$0xff]
  %v4092 = vld [vmem:[%s4 + $0x690] sm:$0xff]
  %v4093 = vld [vmem:[%s4 + $0x698] sm:$0xff]
  %v4094 = vld [vmem:[%s4 + $0x6a0] sm:$0xff]
  %v4095 = vld [vmem:[%s4 + $0x6a8] sm:$0xff]
  %v4096 = vld [vmem:[%s4 + $0x6b0] sm:$0xff]
  %v4097 = vld [vmem:[%s4 + $0x6b8] sm:$0xff]
  %v4098 = vld [vmem:[%s4 + $0x6c0] sm:$0xff]
  %v4099 = vld [vmem:[%s4 + $0x6c8] sm:$0xff]
  %v4100 = vld [vmem:[%s4 + $0x6d0] sm:$0xff]
  %v4101 = vld [vmem:[%s4 + $0x6d8] sm:$0xff]
  %v4102 = vld [vmem:[%s4 + $0x6e0] sm:$0xff]
  %v4103 = vld [vmem:[%s4 + $0x6e8] sm:$0xff]
  %v4104 = vld [vmem:[%s4 + $0x6f0] sm:$0xff]
  %v4105 = vld [vmem:[%s4 + $0x6f8] sm:$0xff]
  %v4106 = vld [vmem:[%s4 + $0x700] sm:$0xff]
  %v4107 = vld [vmem:[%s4 + $0x708] sm:$0xff]
  %v4108 = vld [vmem:[%s4 + $0x710] sm:$0xff]
  %v4109 = vld [vmem:[%s4 + $0x718] sm:$0xff]
  %v4110 = vld [vmem:[%s4 + $0x720] sm:$0xff]
  %v4111 = vld [vmem:[%s4 + $0x728] sm:$0xff]
  %v4112 = vld [vmem:[%s4 + $0x730] sm:$0xff]
  %v4113 = vld [vmem:[%s4 + $0x738] sm:$0xff]
  %v4114 = vld [vmem:[%s4 + $0x740] sm:$0xff]
  %v4115 = vld [vmem:[%s4 + $0x748] sm:$0xff]
  %v4116 = vld [vmem:[%s4 + $0x750] sm:$0xff]
  %v4117 = vld [vmem:[%s4 + $0x758] sm:$0xff]
  %v4118 = vld [vmem:[%s4 + $0x760] sm:$0xff]
  %v4119 = vld [vmem:[%s4 + $0x768] sm:$0xff]
  %v4120 = vld [vmem:[%s4 + $0x770] sm:$0xff]
  %v4121 = vld [vmem:[%s4 + $0x778] sm:$0xff]
  %v4122 = vld [vmem:[%s4 + $0x780] sm:$0xff]
  %v4123 = vld [vmem:[%s4 + $0x788] sm:$0xff]
  %v4124 = vld [vmem:[%s4 + $0x790] sm:$0xff]
  %v4125 = vld [vmem:[%s4 + $0x798] sm:$0xff]
  %v4126 = vld [vmem:[%s4 + $0x7a0] sm:$0xff]
  %v4127 = vld [vmem:[%s4 + $0x7a8] sm:$0xff]
  %v4128 = vld [vmem:[%s4 + $0x7b0] sm:$0xff]
  %v4129 = vld [vmem:[%s4 + $0x7b8] sm:$0xff]
  %v4130 = vld [vmem:[%s4 + $0x7c0] sm:$0xff]
  %v4131 = vld [vmem:[%s4 + $0x7c8] sm:$0xff]
  %v4132 = vld [vmem:[%s4 + $0x7d0] sm:$0xff]
  %v4133 = vld [vmem:[%s4 + $0x7d8] sm:$0xff]
  %v4134 = vld [vmem:[%s4 + $0x7e0] sm:$0xff]
  %v4135 = vld [vmem:[%s4 + $0x7e8] sm:$0xff]
  %v4136 = vld [vmem:[%s4 + $0x7f0] sm:$0xff]
  %v4137 = vld [vmem:[%s4 + $0x7f8] sm:$0xff]
  %v4138 = vld [vmem:[%s5] sm:$0xf]
  %v4140 = vlaneseq
  %v4141 = vshrl.u32 %v4140, 7
  %v4142 = vsub.s32 0, %v4141
  %v4143 = vrot.slane %v4138, %v4142
  %v4144 = vlaneseq
  %v4145 = vshrl.u32 %v4144, 7
  %v4146 = vsub.s32 1, %v4145
  %v4147 = vrot.slane %v4138, %v4146
  %v4148 = vlaneseq
  %v4149 = vshrl.u32 %v4148, 7
  %v4150 = vsub.s32 2, %v4149
  %v4151 = vrot.slane %v4138, %v4150
  %v4152 = vlaneseq
  %v4153 = vshrl.u32 %v4152, 7
  %v4154 = vsub.s32 3, %v4153
  %v4155 = vrot.slane %v4138, %v4154
  %v4416 = vunpack.c.l.b16 %v3882
  %v4417 = vunpack.c.h.b16 %v3882
  %v4418 = vunpack.c.l.b16 %v3883
  %v4419 = vunpack.c.h.b16 %v3883
  %v4420 = vunpack.c.l.b16 %v3884
  %v4421 = vunpack.c.h.b16 %v3884
  %v4422 = vunpack.c.l.b16 %v3885
  %v4423 = vunpack.c.h.b16 %v3885
  %v4424 = vunpack.c.l.b16 %v3886
  %v4425 = vunpack.c.h.b16 %v3886
  %v4426 = vunpack.c.l.b16 %v3887
  %v4427 = vunpack.c.h.b16 %v3887
  %v4428 = vunpack.c.l.b16 %v3888
  %v4429 = vunpack.c.h.b16 %v3888
  %v4430 = vunpack.c.l.b16 %v3889
  %v4431 = vunpack.c.h.b16 %v3889
  %v4432 = vunpack.c.l.b16 %v3890
  %v4433 = vunpack.c.h.b16 %v3890
  %v4434 = vunpack.c.l.b16 %v3891
  %v4435 = vunpack.c.h.b16 %v3891
  %v4436 = vunpack.c.l.b16 %v3892
  %v4437 = vunpack.c.h.b16 %v3892
  %v4438 = vunpack.c.l.b16 %v3893
  %v4439 = vunpack.c.h.b16 %v3893
  %v4440 = vunpack.c.l.b16 %v3894
  %v4441 = vunpack.c.h.b16 %v3894
  %v4442 = vunpack.c.l.b16 %v3895
  %v4443 = vunpack.c.h.b16 %v3895
  %v4444 = vunpack.c.l.b16 %v3896
  %v4445 = vunpack.c.h.b16 %v3896
  %v4446 = vunpack.c.l.b16 %v3897
  %v4447 = vunpack.c.h.b16 %v3897
  %v4448 = vunpack.c.l.b16 %v3898
  %v4449 = vunpack.c.h.b16 %v3898
  %v4450 = vunpack.c.l.b16 %v3899
  %v4451 = vunpack.c.h.b16 %v3899
  %v4452 = vunpack.c.l.b16 %v3900
  %v4453 = vunpack.c.h.b16 %v3900
  %v4454 = vunpack.c.l.b16 %v3901
  %v4455 = vunpack.c.h.b16 %v3901
  %v4456 = vunpack.c.l.b16 %v3902
  %v4457 = vunpack.c.h.b16 %v3902
  %v4458 = vunpack.c.l.b16 %v3903
  %v4459 = vunpack.c.h.b16 %v3903
  %v4460 = vunpack.c.l.b16 %v3904
  %v4461 = vunpack.c.h.b16 %v3904
  %v4462 = vunpack.c.l.b16 %v3905
  %v4463 = vunpack.c.h.b16 %v3905
  %v4464 = vunpack.c.l.b16 %v3906
  %v4465 = vunpack.c.h.b16 %v3906
  %v4466 = vunpack.c.l.b16 %v3907
  %v4467 = vunpack.c.h.b16 %v3907
  %v4468 = vunpack.c.l.b16 %v3908
  %v4469 = vunpack.c.h.b16 %v3908
  %v4470 = vunpack.c.l.b16 %v3909
  %v4471 = vunpack.c.h.b16 %v3909
  %v4472 = vunpack.c.l.b16 %v3910
  %v4473 = vunpack.c.h.b16 %v3910
  %v4474 = vunpack.c.l.b16 %v3911
  %v4475 = vunpack.c.h.b16 %v3911
  %v4476 = vunpack.c.l.b16 %v3912
  %v4477 = vunpack.c.h.b16 %v3912
  %v4478 = vunpack.c.l.b16 %v3913
  %v4479 = vunpack.c.h.b16 %v3913
  %v4480 = vunpack.c.l.b16 %v3914
  %v4481 = vunpack.c.h.b16 %v3914
  %v4482 = vunpack.c.l.b16 %v3915
  %v4483 = vunpack.c.h.b16 %v3915
  %v4484 = vunpack.c.l.b16 %v3916
  %v4485 = vunpack.c.h.b16 %v3916
  %v4486 = vunpack.c.l.b16 %v3917
  %v4487 = vunpack.c.h.b16 %v3917
  %v4488 = vunpack.c.l.b16 %v3918
  %v4489 = vunpack.c.h.b16 %v3918
  %v4490 = vunpack.c.l.b16 %v3919
  %v4491 = vunpack.c.h.b16 %v3919
  %v4492 = vunpack.c.l.b16 %v3920
  %v4493 = vunpack.c.h.b16 %v3920
  %v4494 = vunpack.c.l.b16 %v3921
  %v4495 = vunpack.c.h.b16 %v3921
  %v4496 = vunpack.c.l.b16 %v3922
  %v4497 = vunpack.c.h.b16 %v3922
  %v4498 = vunpack.c.l.b16 %v3923
  %v4499 = vunpack.c.h.b16 %v3923
  %v4500 = vunpack.c.l.b16 %v3924
  %v4501 = vunpack.c.h.b16 %v3924
  %v4502 = vunpack.c.l.b16 %v3925
  %v4503 = vunpack.c.h.b16 %v3925
  %v4504 = vunpack.c.l.b16 %v3926
  %v4505 = vunpack.c.h.b16 %v3926
  %v4506 = vunpack.c.l.b16 %v3927
  %v4507 = vunpack.c.h.b16 %v3927
  %v4508 = vunpack.c.l.b16 %v3928
  %v4509 = vunpack.c.h.b16 %v3928
  %v4510 = vunpack.c.l.b16 %v3929
  %v4511 = vunpack.c.h.b16 %v3929
  %v4512 = vunpack.c.l.b16 %v3930
  %v4513 = vunpack.c.h.b16 %v3930
  %v4514 = vunpack.c.l.b16 %v3931
  %v4515 = vunpack.c.h.b16 %v3931
  %v4516 = vunpack.c.l.b16 %v3932
  %v4517 = vunpack.c.h.b16 %v3932
  %v4518 = vunpack.c.l.b16 %v3933
  %v4519 = vunpack.c.h.b16 %v3933
  %v4520 = vunpack.c.l.b16 %v3934
  %v4521 = vunpack.c.h.b16 %v3934
  %v4522 = vunpack.c.l.b16 %v3935
  %v4523 = vunpack.c.h.b16 %v3935
  %v4524 = vunpack.c.l.b16 %v3936
  %v4525 = vunpack.c.h.b16 %v3936
  %v4526 = vunpack.c.l.b16 %v3937
  %v4527 = vunpack.c.h.b16 %v3937
  %v4528 = vunpack.c.l.b16 %v3938
  %v4529 = vunpack.c.h.b16 %v3938
  %v4530 = vunpack.c.l.b16 %v3939
  %v4531 = vunpack.c.h.b16 %v3939
  %v4532 = vunpack.c.l.b16 %v3940
  %v4533 = vunpack.c.h.b16 %v3940
  %v4534 = vunpack.c.l.b16 %v3941
  %v4535 = vunpack.c.h.b16 %v3941
  %v4536 = vunpack.c.l.b16 %v3942
  %v4537 = vunpack.c.h.b16 %v3942
  %v4538 = vunpack.c.l.b16 %v3943
  %v4539 = vunpack.c.h.b16 %v3943
  %v4540 = vunpack.c.l.b16 %v3944
  %v4541 = vunpack.c.h.b16 %v3944
  %v4542 = vunpack.c.l.b16 %v3945
  %v4543 = vunpack.c.h.b16 %v3945
  %v4544 = vunpack.c.l.b16 %v3946
  %v4545 = vunpack.c.h.b16 %v3946
  %v4546 = vunpack.c.l.b16 %v3947
  %v4547 = vunpack.c.h.b16 %v3947
  %v4548 = vunpack.c.l.b16 %v3948
  %v4549 = vunpack.c.h.b16 %v3948
  %v4550 = vunpack.c.l.b16 %v3949
  %v4551 = vunpack.c.h.b16 %v3949
  %v4552 = vunpack.c.l.b16 %v3950
  %v4553 = vunpack.c.h.b16 %v3950
  %v4554 = vunpack.c.l.b16 %v3951
  %v4555 = vunpack.c.h.b16 %v3951
  %v4556 = vunpack.c.l.b16 %v3952
  %v4557 = vunpack.c.h.b16 %v3952
  %v4558 = vunpack.c.l.b16 %v3953
  %v4559 = vunpack.c.h.b16 %v3953
  %v4560 = vunpack.c.l.b16 %v3954
  %v4561 = vunpack.c.h.b16 %v3954
  %v4562 = vunpack.c.l.b16 %v3955
  %v4563 = vunpack.c.h.b16 %v3955
  %v4564 = vunpack.c.l.b16 %v3956
  %v4565 = vunpack.c.h.b16 %v3956
  %v4566 = vunpack.c.l.b16 %v3957
  %v4567 = vunpack.c.h.b16 %v3957
  %v4568 = vunpack.c.l.b16 %v3958
  %v4569 = vunpack.c.h.b16 %v3958
  %v4570 = vunpack.c.l.b16 %v3959
  %v4571 = vunpack.c.h.b16 %v3959
  %v4572 = vunpack.c.l.b16 %v3960
  %v4573 = vunpack.c.h.b16 %v3960
  %v4574 = vunpack.c.l.b16 %v3961
  %v4575 = vunpack.c.h.b16 %v3961
  %v4576 = vunpack.c.l.b16 %v3962
  %v4577 = vunpack.c.h.b16 %v3962
  %v4578 = vunpack.c.l.b16 %v3963
  %v4579 = vunpack.c.h.b16 %v3963
  %v4580 = vunpack.c.l.b16 %v3964
  %v4581 = vunpack.c.h.b16 %v3964
  %v4582 = vunpack.c.l.b16 %v3965
  %v4583 = vunpack.c.h.b16 %v3965
  %v4584 = vunpack.c.l.b16 %v3966
  %v4585 = vunpack.c.h.b16 %v3966
  %v4586 = vunpack.c.l.b16 %v3967
  %v4587 = vunpack.c.h.b16 %v3967
  %v4588 = vunpack.c.l.b16 %v3968
  %v4589 = vunpack.c.h.b16 %v3968
  %v4590 = vunpack.c.l.b16 %v3969
  %v4591 = vunpack.c.h.b16 %v3969
  %v4592 = vunpack.c.l.b16 %v3970
  %v4593 = vunpack.c.h.b16 %v3970
  %v4594 = vunpack.c.l.b16 %v3971
  %v4595 = vunpack.c.h.b16 %v3971
  %v4596 = vunpack.c.l.b16 %v3972
  %v4597 = vunpack.c.h.b16 %v3972
  %v4598 = vunpack.c.l.b16 %v3973
  %v4599 = vunpack.c.h.b16 %v3973
  %v4600 = vunpack.c.l.b16 %v3974
  %v4601 = vunpack.c.h.b16 %v3974
  %v4602 = vunpack.c.l.b16 %v3975
  %v4603 = vunpack.c.h.b16 %v3975
  %v4604 = vunpack.c.l.b16 %v3976
  %v4605 = vunpack.c.h.b16 %v3976
  %v4606 = vunpack.c.l.b16 %v3977
  %v4607 = vunpack.c.h.b16 %v3977
  %v4608 = vunpack.c.l.b16 %v3978
  %v4609 = vunpack.c.h.b16 %v3978
  %v4610 = vunpack.c.l.b16 %v3979
  %v4611 = vunpack.c.h.b16 %v3979
  %v4612 = vunpack.c.l.b16 %v3980
  %v4613 = vunpack.c.h.b16 %v3980
  %v4614 = vunpack.c.l.b16 %v3981
  %v4615 = vunpack.c.h.b16 %v3981
  %v4616 = vunpack.c.l.b16 %v3982
  %v4617 = vunpack.c.h.b16 %v3982
  %v4618 = vunpack.c.l.b16 %v3983
  %v4619 = vunpack.c.h.b16 %v3983
  %v4620 = vunpack.c.l.b16 %v3984
  %v4621 = vunpack.c.h.b16 %v3984
  %v4622 = vunpack.c.l.b16 %v3985
  %v4623 = vunpack.c.h.b16 %v3985
  %v4624 = vunpack.c.l.b16 %v3986
  %v4625 = vunpack.c.h.b16 %v3986
  %v4626 = vunpack.c.l.b16 %v3987
  %v4627 = vunpack.c.h.b16 %v3987
  %v4628 = vunpack.c.l.b16 %v3988
  %v4629 = vunpack.c.h.b16 %v3988
  %v4630 = vunpack.c.l.b16 %v3989
  %v4631 = vunpack.c.h.b16 %v3989
  %v4632 = vunpack.c.l.b16 %v3990
  %v4633 = vunpack.c.h.b16 %v3990
  %v4634 = vunpack.c.l.b16 %v3991
  %v4635 = vunpack.c.h.b16 %v3991
  %v4636 = vunpack.c.l.b16 %v3992
  %v4637 = vunpack.c.h.b16 %v3992
  %v4638 = vunpack.c.l.b16 %v3993
  %v4639 = vunpack.c.h.b16 %v3993
  %v4640 = vunpack.c.l.b16 %v3994
  %v4641 = vunpack.c.h.b16 %v3994
  %v4642 = vunpack.c.l.b16 %v3995
  %v4643 = vunpack.c.h.b16 %v3995
  %v4644 = vunpack.c.l.b16 %v3996
  %v4645 = vunpack.c.h.b16 %v3996
  %v4646 = vunpack.c.l.b16 %v3997
  %v4647 = vunpack.c.h.b16 %v3997
  %v4648 = vunpack.c.l.b16 %v3998
  %v4649 = vunpack.c.h.b16 %v3998
  %v4650 = vunpack.c.l.b16 %v3999
  %v4651 = vunpack.c.h.b16 %v3999
  %v4652 = vunpack.c.l.b16 %v4000
  %v4653 = vunpack.c.h.b16 %v4000
  %v4654 = vunpack.c.l.b16 %v4001
  %v4655 = vunpack.c.h.b16 %v4001
  %v4656 = vunpack.c.l.b16 %v4002
  %v4657 = vunpack.c.h.b16 %v4002
  %v4658 = vunpack.c.l.b16 %v4003
  %v4659 = vunpack.c.h.b16 %v4003
  %v4660 = vunpack.c.l.b16 %v4004
  %v4661 = vunpack.c.h.b16 %v4004
  %v4662 = vunpack.c.l.b16 %v4005
  %v4663 = vunpack.c.h.b16 %v4005
  %v4664 = vunpack.c.l.b16 %v4006
  %v4665 = vunpack.c.h.b16 %v4006
  %v4666 = vunpack.c.l.b16 %v4007
  %v4667 = vunpack.c.h.b16 %v4007
  %v4668 = vunpack.c.l.b16 %v4008
  %v4669 = vunpack.c.h.b16 %v4008
  %v4670 = vunpack.c.l.b16 %v4009
  %v4671 = vunpack.c.h.b16 %v4009
  %v4672 = vunpack.c.l.b16 %v4010
  %v4673 = vunpack.c.h.b16 %v4010
  %v4674 = vunpack.c.l.b16 %v4011
  %v4675 = vunpack.c.h.b16 %v4011
  %v4676 = vunpack.c.l.b16 %v4012
  %v4677 = vunpack.c.h.b16 %v4012
  %v4678 = vunpack.c.l.b16 %v4013
  %v4679 = vunpack.c.h.b16 %v4013
  %v4680 = vunpack.c.l.b16 %v4014
  %v4681 = vunpack.c.h.b16 %v4014
  %v4682 = vunpack.c.l.b16 %v4015
  %v4683 = vunpack.c.h.b16 %v4015
  %v4684 = vunpack.c.l.b16 %v4016
  %v4685 = vunpack.c.h.b16 %v4016
  %v4686 = vunpack.c.l.b16 %v4017
  %v4687 = vunpack.c.h.b16 %v4017
  %v4688 = vunpack.c.l.b16 %v4018
  %v4689 = vunpack.c.h.b16 %v4018
  %v4690 = vunpack.c.l.b16 %v4019
  %v4691 = vunpack.c.h.b16 %v4019
  %v4692 = vunpack.c.l.b16 %v4020
  %v4693 = vunpack.c.h.b16 %v4020
  %v4694 = vunpack.c.l.b16 %v4021
  %v4695 = vunpack.c.h.b16 %v4021
  %v4696 = vunpack.c.l.b16 %v4022
  %v4697 = vunpack.c.h.b16 %v4022
  %v4698 = vunpack.c.l.b16 %v4023
  %v4699 = vunpack.c.h.b16 %v4023
  %v4700 = vunpack.c.l.b16 %v4024
  %v4701 = vunpack.c.h.b16 %v4024
  %v4702 = vunpack.c.l.b16 %v4025
  %v4703 = vunpack.c.h.b16 %v4025
  %v4704 = vunpack.c.l.b16 %v4026
  %v4705 = vunpack.c.h.b16 %v4026
  %v4706 = vunpack.c.l.b16 %v4027
  %v4707 = vunpack.c.h.b16 %v4027
  %v4708 = vunpack.c.l.b16 %v4028
  %v4709 = vunpack.c.h.b16 %v4028
  %v4710 = vunpack.c.l.b16 %v4029
  %v4711 = vunpack.c.h.b16 %v4029
  %v4712 = vunpack.c.l.b16 %v4030
  %v4713 = vunpack.c.h.b16 %v4030
  %v4714 = vunpack.c.l.b16 %v4031
  %v4715 = vunpack.c.h.b16 %v4031
  %v4716 = vunpack.c.l.b16 %v4032
  %v4717 = vunpack.c.h.b16 %v4032
  %v4718 = vunpack.c.l.b16 %v4033
  %v4719 = vunpack.c.h.b16 %v4033
  %v4720 = vunpack.c.l.b16 %v4034
  %v4721 = vunpack.c.h.b16 %v4034
  %v4722 = vunpack.c.l.b16 %v4035
  %v4723 = vunpack.c.h.b16 %v4035
  %v4724 = vunpack.c.l.b16 %v4036
  %v4725 = vunpack.c.h.b16 %v4036
  %v4726 = vunpack.c.l.b16 %v4037
  %v4727 = vunpack.c.h.b16 %v4037
  %v4728 = vunpack.c.l.b16 %v4038
  %v4729 = vunpack.c.h.b16 %v4038
  %v4730 = vunpack.c.l.b16 %v4039
  %v4731 = vunpack.c.h.b16 %v4039
  %v4732 = vunpack.c.l.b16 %v4040
  %v4733 = vunpack.c.h.b16 %v4040
  %v4734 = vunpack.c.l.b16 %v4041
  %v4735 = vunpack.c.h.b16 %v4041
  %v4736 = vunpack.c.l.b16 %v4042
  %v4737 = vunpack.c.h.b16 %v4042
  %v4738 = vunpack.c.l.b16 %v4043
  %v4739 = vunpack.c.h.b16 %v4043
  %v4740 = vunpack.c.l.b16 %v4044
  %v4741 = vunpack.c.h.b16 %v4044
  %v4742 = vunpack.c.l.b16 %v4045
  %v4743 = vunpack.c.h.b16 %v4045
  %v4744 = vunpack.c.l.b16 %v4046
  %v4745 = vunpack.c.h.b16 %v4046
  %v4746 = vunpack.c.l.b16 %v4047
  %v4747 = vunpack.c.h.b16 %v4047
  %v4748 = vunpack.c.l.b16 %v4048
  %v4749 = vunpack.c.h.b16 %v4048
  %v4750 = vunpack.c.l.b16 %v4049
  %v4751 = vunpack.c.h.b16 %v4049
  %v4752 = vunpack.c.l.b16 %v4050
  %v4753 = vunpack.c.h.b16 %v4050
  %v4754 = vunpack.c.l.b16 %v4051
  %v4755 = vunpack.c.h.b16 %v4051
  %v4756 = vunpack.c.l.b16 %v4052
  %v4757 = vunpack.c.h.b16 %v4052
  %v4758 = vunpack.c.l.b16 %v4053
  %v4759 = vunpack.c.h.b16 %v4053
  %v4760 = vunpack.c.l.b16 %v4054
  %v4761 = vunpack.c.h.b16 %v4054
  %v4762 = vunpack.c.l.b16 %v4055
  %v4763 = vunpack.c.h.b16 %v4055
  %v4764 = vunpack.c.l.b16 %v4056
  %v4765 = vunpack.c.h.b16 %v4056
  %v4766 = vunpack.c.l.b16 %v4057
  %v4767 = vunpack.c.h.b16 %v4057
  %v4768 = vunpack.c.l.b16 %v4058
  %v4769 = vunpack.c.h.b16 %v4058
  %v4770 = vunpack.c.l.b16 %v4059
  %v4771 = vunpack.c.h.b16 %v4059
  %v4772 = vunpack.c.l.b16 %v4060
  %v4773 = vunpack.c.h.b16 %v4060
  %v4774 = vunpack.c.l.b16 %v4061
  %v4775 = vunpack.c.h.b16 %v4061
  %v4776 = vunpack.c.l.b16 %v4062
  %v4777 = vunpack.c.h.b16 %v4062
  %v4778 = vunpack.c.l.b16 %v4063
  %v4779 = vunpack.c.h.b16 %v4063
  %v4780 = vunpack.c.l.b16 %v4064
  %v4781 = vunpack.c.h.b16 %v4064
  %v4782 = vunpack.c.l.b16 %v4065
  %v4783 = vunpack.c.h.b16 %v4065
  %v4784 = vunpack.c.l.b16 %v4066
  %v4785 = vunpack.c.h.b16 %v4066
  %v4786 = vunpack.c.l.b16 %v4067
  %v4787 = vunpack.c.h.b16 %v4067
  %v4788 = vunpack.c.l.b16 %v4068
  %v4789 = vunpack.c.h.b16 %v4068
  %v4790 = vunpack.c.l.b16 %v4069
  %v4791 = vunpack.c.h.b16 %v4069
  %v4792 = vunpack.c.l.b16 %v4070
  %v4793 = vunpack.c.h.b16 %v4070
  %v4794 = vunpack.c.l.b16 %v4071
  %v4795 = vunpack.c.h.b16 %v4071
  %v4796 = vunpack.c.l.b16 %v4072
  %v4797 = vunpack.c.h.b16 %v4072
  %v4798 = vunpack.c.l.b16 %v4073
  %v4799 = vunpack.c.h.b16 %v4073
  %v4800 = vunpack.c.l.b16 %v4074
  %v4801 = vunpack.c.h.b16 %v4074
  %v4802 = vunpack.c.l.b16 %v4075
  %v4803 = vunpack.c.h.b16 %v4075
  %v4804 = vunpack.c.l.b16 %v4076
  %v4805 = vunpack.c.h.b16 %v4076
  %v4806 = vunpack.c.l.b16 %v4077
  %v4807 = vunpack.c.h.b16 %v4077
  %v4808 = vunpack.c.l.b16 %v4078
  %v4809 = vunpack.c.h.b16 %v4078
  %v4810 = vunpack.c.l.b16 %v4079
  %v4811 = vunpack.c.h.b16 %v4079
  %v4812 = vunpack.c.l.b16 %v4080
  %v4813 = vunpack.c.h.b16 %v4080
  %v4814 = vunpack.c.l.b16 %v4081
  %v4815 = vunpack.c.h.b16 %v4081
  %v4816 = vunpack.c.l.b16 %v4082
  %v4817 = vunpack.c.h.b16 %v4082
  %v4818 = vunpack.c.l.b16 %v4083
  %v4819 = vunpack.c.h.b16 %v4083
  %v4820 = vunpack.c.l.b16 %v4084
  %v4821 = vunpack.c.h.b16 %v4084
  %v4822 = vunpack.c.l.b16 %v4085
  %v4823 = vunpack.c.h.b16 %v4085
  %v4824 = vunpack.c.l.b16 %v4086
  %v4825 = vunpack.c.h.b16 %v4086
  %v4826 = vunpack.c.l.b16 %v4087
  %v4827 = vunpack.c.h.b16 %v4087
  %v4828 = vunpack.c.l.b16 %v4088
  %v4829 = vunpack.c.h.b16 %v4088
  %v4830 = vunpack.c.l.b16 %v4089
  %v4831 = vunpack.c.h.b16 %v4089
  %v4832 = vunpack.c.l.b16 %v4090
  %v4833 = vunpack.c.h.b16 %v4090
  %v4834 = vunpack.c.l.b16 %v4091
  %v4835 = vunpack.c.h.b16 %v4091
  %v4836 = vunpack.c.l.b16 %v4092
  %v4837 = vunpack.c.h.b16 %v4092
  %v4838 = vunpack.c.l.b16 %v4093
  %v4839 = vunpack.c.h.b16 %v4093
  %v4840 = vunpack.c.l.b16 %v4094
  %v4841 = vunpack.c.h.b16 %v4094
  %v4842 = vunpack.c.l.b16 %v4095
  %v4843 = vunpack.c.h.b16 %v4095
  %v4844 = vunpack.c.l.b16 %v4096
  %v4845 = vunpack.c.h.b16 %v4096
  %v4846 = vunpack.c.l.b16 %v4097
  %v4847 = vunpack.c.h.b16 %v4097
  %v4848 = vunpack.c.l.b16 %v4098
  %v4849 = vunpack.c.h.b16 %v4098
  %v4850 = vunpack.c.l.b16 %v4099
  %v4851 = vunpack.c.h.b16 %v4099
  %v4852 = vunpack.c.l.b16 %v4100
  %v4853 = vunpack.c.h.b16 %v4100
  %v4854 = vunpack.c.l.b16 %v4101
  %v4855 = vunpack.c.h.b16 %v4101
  %v4856 = vunpack.c.l.b16 %v4102
  %v4857 = vunpack.c.h.b16 %v4102
  %v4858 = vunpack.c.l.b16 %v4103
  %v4859 = vunpack.c.h.b16 %v4103
  %v4860 = vunpack.c.l.b16 %v4104
  %v4861 = vunpack.c.h.b16 %v4104
  %v4862 = vunpack.c.l.b16 %v4105
  %v4863 = vunpack.c.h.b16 %v4105
  %v4864 = vunpack.c.l.b16 %v4106
  %v4865 = vunpack.c.h.b16 %v4106
  %v4866 = vunpack.c.l.b16 %v4107
  %v4867 = vunpack.c.h.b16 %v4107
  %v4868 = vunpack.c.l.b16 %v4108
  %v4869 = vunpack.c.h.b16 %v4108
  %v4870 = vunpack.c.l.b16 %v4109
  %v4871 = vunpack.c.h.b16 %v4109
  %v4872 = vunpack.c.l.b16 %v4110
  %v4873 = vunpack.c.h.b16 %v4110
  %v4874 = vunpack.c.l.b16 %v4111
  %v4875 = vunpack.c.h.b16 %v4111
  %v4876 = vunpack.c.l.b16 %v4112
  %v4877 = vunpack.c.h.b16 %v4112
  %v4878 = vunpack.c.l.b16 %v4113
  %v4879 = vunpack.c.h.b16 %v4113
  %v4880 = vunpack.c.l.b16 %v4114
  %v4881 = vunpack.c.h.b16 %v4114
  %v4882 = vunpack.c.l.b16 %v4115
  %v4883 = vunpack.c.h.b16 %v4115
  %v4884 = vunpack.c.l.b16 %v4116
  %v4885 = vunpack.c.h.b16 %v4116
  %v4886 = vunpack.c.l.b16 %v4117
  %v4887 = vunpack.c.h.b16 %v4117
  %v4888 = vunpack.c.l.b16 %v4118
  %v4889 = vunpack.c.h.b16 %v4118
  %v4890 = vunpack.c.l.b16 %v4119
  %v4891 = vunpack.c.h.b16 %v4119
  %v4892 = vunpack.c.l.b16 %v4120
  %v4893 = vunpack.c.h.b16 %v4120
  %v4894 = vunpack.c.l.b16 %v4121
  %v4895 = vunpack.c.h.b16 %v4121
  %v4896 = vunpack.c.l.b16 %v4122
  %v4897 = vunpack.c.h.b16 %v4122
  %v4898 = vunpack.c.l.b16 %v4123
  %v4899 = vunpack.c.h.b16 %v4123
  %v4900 = vunpack.c.l.b16 %v4124
  %v4901 = vunpack.c.h.b16 %v4124
  %v4902 = vunpack.c.l.b16 %v4125
  %v4903 = vunpack.c.h.b16 %v4125
  %v4904 = vunpack.c.l.b16 %v4126
  %v4905 = vunpack.c.h.b16 %v4126
  %v4906 = vunpack.c.l.b16 %v4127
  %v4907 = vunpack.c.h.b16 %v4127
  %v4908 = vunpack.c.l.b16 %v4128
  %v4909 = vunpack.c.h.b16 %v4128
  %v4910 = vunpack.c.l.b16 %v4129
  %v4911 = vunpack.c.h.b16 %v4129
  %v4912 = vunpack.c.l.b16 %v4130
  %v4913 = vunpack.c.h.b16 %v4130
  %v4914 = vunpack.c.l.b16 %v4131
  %v4915 = vunpack.c.h.b16 %v4131
  %v4916 = vunpack.c.l.b16 %v4132
  %v4917 = vunpack.c.h.b16 %v4132
  %v4918 = vunpack.c.l.b16 %v4133
  %v4919 = vunpack.c.h.b16 %v4133
  %v4920 = vunpack.c.l.b16 %v4134
  %v4921 = vunpack.c.h.b16 %v4134
  %v4922 = vunpack.c.l.b16 %v4135
  %v4923 = vunpack.c.h.b16 %v4135
  %v4924 = vunpack.c.l.b16 %v4136
  %v4925 = vunpack.c.h.b16 %v4136
  %v4926 = vunpack.c.l.b16 %v4137
  %v4927 = vunpack.c.h.b16 %v4137
  %v4928 = vpack.c.b16 %v4420, %v4416
  %v4929 = vpack.c.b16 %v4421, %v4417
  %v4930 = vpack.c.b16 %v4422, %v4418
  %v4931 = vpack.c.b16 %v4423, %v4419
  %v4932 = vpack.c.b16 %v4428, %v4424
  %v4933 = vpack.c.b16 %v4429, %v4425
  %v4934 = vpack.c.b16 %v4430, %v4426
  %v4935 = vpack.c.b16 %v4431, %v4427
  %v4936 = vpack.c.b16 %v4436, %v4432
  %v4937 = vpack.c.b16 %v4437, %v4433
  %v4938 = vpack.c.b16 %v4438, %v4434
  %v4939 = vpack.c.b16 %v4439, %v4435
  %v4940 = vpack.c.b16 %v4444, %v4440
  %v4941 = vpack.c.b16 %v4445, %v4441
  %v4942 = vpack.c.b16 %v4446, %v4442
  %v4943 = vpack.c.b16 %v4447, %v4443
  %v4944 = vpack.c.b16 %v4452, %v4448
  %v4945 = vpack.c.b16 %v4453, %v4449
  %v4946 = vpack.c.b16 %v4454, %v4450
  %v4947 = vpack.c.b16 %v4455, %v4451
  %v4948 = vpack.c.b16 %v4460, %v4456
  %v4949 = vpack.c.b16 %v4461, %v4457
  %v4950 = vpack.c.b16 %v4462, %v4458
  %v4951 = vpack.c.b16 %v4463, %v4459
  %v4952 = vpack.c.b16 %v4468, %v4464
  %v4953 = vpack.c.b16 %v4469, %v4465
  %v4954 = vpack.c.b16 %v4470, %v4466
  %v4955 = vpack.c.b16 %v4471, %v4467
  %v4956 = vpack.c.b16 %v4476, %v4472
  %v4957 = vpack.c.b16 %v4477, %v4473
  %v4958 = vpack.c.b16 %v4478, %v4474
  %v4959 = vpack.c.b16 %v4479, %v4475
  %v4960 = vpack.c.b16 %v4484, %v4480
  %v4961 = vpack.c.b16 %v4485, %v4481
  %v4962 = vpack.c.b16 %v4486, %v4482
  %v4963 = vpack.c.b16 %v4487, %v4483
  %v4964 = vpack.c.b16 %v4492, %v4488
  %v4965 = vpack.c.b16 %v4493, %v4489
  %v4966 = vpack.c.b16 %v4494, %v4490
  %v4967 = vpack.c.b16 %v4495, %v4491
  %v4968 = vpack.c.b16 %v4500, %v4496
  %v4969 = vpack.c.b16 %v4501, %v4497
  %v4970 = vpack.c.b16 %v4502, %v4498
  %v4971 = vpack.c.b16 %v4503, %v4499
  %v4972 = vpack.c.b16 %v4508, %v4504
  %v4973 = vpack.c.b16 %v4509, %v4505
  %v4974 = vpack.c.b16 %v4510, %v4506
  %v4975 = vpack.c.b16 %v4511, %v4507
  %v4976 = vpack.c.b16 %v4516, %v4512
  %v4977 = vpack.c.b16 %v4517, %v4513
  %v4978 = vpack.c.b16 %v4518, %v4514
  %v4979 = vpack.c.b16 %v4519, %v4515
  %v4980 = vpack.c.b16 %v4524, %v4520
  %v4981 = vpack.c.b16 %v4525, %v4521
  %v4982 = vpack.c.b16 %v4526, %v4522
  %v4983 = vpack.c.b16 %v4527, %v4523
  %v4984 = vpack.c.b16 %v4532, %v4528
  %v4985 = vpack.c.b16 %v4533, %v4529
  %v4986 = vpack.c.b16 %v4534, %v4530
  %v4987 = vpack.c.b16 %v4535, %v4531
  %v4988 = vpack.c.b16 %v4540, %v4536
  %v4989 = vpack.c.b16 %v4541, %v4537
  %v4990 = vpack.c.b16 %v4542, %v4538
  %v4991 = vpack.c.b16 %v4543, %v4539
  %v4992 = vpack.c.b16 %v4548, %v4544
  %v4993 = vpack.c.b16 %v4549, %v4545
  %v4994 = vpack.c.b16 %v4550, %v4546
  %v4995 = vpack.c.b16 %v4551, %v4547
  %v4996 = vpack.c.b16 %v4556, %v4552
  %v4997 = vpack.c.b16 %v4557, %v4553
  %v4998 = vpack.c.b16 %v4558, %v4554
  %v4999 = vpack.c.b16 %v4559, %v4555
  %v5000 = vpack.c.b16 %v4564, %v4560
  %v5001 = vpack.c.b16 %v4565, %v4561
  %v5002 = vpack.c.b16 %v4566, %v4562
  %v5003 = vpack.c.b16 %v4567, %v4563
  %v5004 = vpack.c.b16 %v4572, %v4568
  %v5005 = vpack.c.b16 %v4573, %v4569
  %v5006 = vpack.c.b16 %v4574, %v4570
  %v5007 = vpack.c.b16 %v4575, %v4571
  %v5008 = vpack.c.b16 %v4580, %v4576
  %v5009 = vpack.c.b16 %v4581, %v4577
  %v5010 = vpack.c.b16 %v4582, %v4578
  %v5011 = vpack.c.b16 %v4583, %v4579
  %v5012 = vpack.c.b16 %v4588, %v4584
  %v5013 = vpack.c.b16 %v4589, %v4585
  %v5014 = vpack.c.b16 %v4590, %v4586
  %v5015 = vpack.c.b16 %v4591, %v4587
  %v5016 = vpack.c.b16 %v4596, %v4592
  %v5017 = vpack.c.b16 %v4597, %v4593
  %v5018 = vpack.c.b16 %v4598, %v4594
  %v5019 = vpack.c.b16 %v4599, %v4595
  %v5020 = vpack.c.b16 %v4604, %v4600
  %v5021 = vpack.c.b16 %v4605, %v4601
  %v5022 = vpack.c.b16 %v4606, %v4602
  %v5023 = vpack.c.b16 %v4607, %v4603
  %v5024 = vpack.c.b16 %v4612, %v4608
  %v5025 = vpack.c.b16 %v4613, %v4609
  %v5026 = vpack.c.b16 %v4614, %v4610
  %v5027 = vpack.c.b16 %v4615, %v4611
  %v5028 = vpack.c.b16 %v4620, %v4616
  %v5029 = vpack.c.b16 %v4621, %v4617
  %v5030 = vpack.c.b16 %v4622, %v4618
  %v5031 = vpack.c.b16 %v4623, %v4619
  %v5032 = vpack.c.b16 %v4628, %v4624
  %v5033 = vpack.c.b16 %v4629, %v4625
  %v5034 = vpack.c.b16 %v4630, %v4626
  %v5035 = vpack.c.b16 %v4631, %v4627
  %v5036 = vpack.c.b16 %v4636, %v4632
  %v5037 = vpack.c.b16 %v4637, %v4633
  %v5038 = vpack.c.b16 %v4638, %v4634
  %v5039 = vpack.c.b16 %v4639, %v4635
  %v5040 = vpack.c.b16 %v4644, %v4640
  %v5041 = vpack.c.b16 %v4645, %v4641
  %v5042 = vpack.c.b16 %v4646, %v4642
  %v5043 = vpack.c.b16 %v4647, %v4643
  %v5044 = vpack.c.b16 %v4652, %v4648
  %v5045 = vpack.c.b16 %v4653, %v4649
  %v5046 = vpack.c.b16 %v4654, %v4650
  %v5047 = vpack.c.b16 %v4655, %v4651
  %v5048 = vpack.c.b16 %v4660, %v4656
  %v5049 = vpack.c.b16 %v4661, %v4657
  %v5050 = vpack.c.b16 %v4662, %v4658
  %v5051 = vpack.c.b16 %v4663, %v4659
  %v5052 = vpack.c.b16 %v4668, %v4664
  %v5053 = vpack.c.b16 %v4669, %v4665
  %v5054 = vpack.c.b16 %v4670, %v4666
  %v5055 = vpack.c.b16 %v4671, %v4667
  %v5056 = vpack.c.b16 %v4676, %v4672
  %v5057 = vpack.c.b16 %v4677, %v4673
  %v5058 = vpack.c.b16 %v4678, %v4674
  %v5059 = vpack.c.b16 %v4679, %v4675
  %v5060 = vpack.c.b16 %v4684, %v4680
  %v5061 = vpack.c.b16 %v4685, %v4681
  %v5062 = vpack.c.b16 %v4686, %v4682
  %v5063 = vpack.c.b16 %v4687, %v4683
  %v5064 = vpack.c.b16 %v4692, %v4688
  %v5065 = vpack.c.b16 %v4693, %v4689
  %v5066 = vpack.c.b16 %v4694, %v4690
  %v5067 = vpack.c.b16 %v4695, %v4691
  %v5068 = vpack.c.b16 %v4700, %v4696
  %v5069 = vpack.c.b16 %v4701, %v4697
  %v5070 = vpack.c.b16 %v4702, %v4698
  %v5071 = vpack.c.b16 %v4703, %v4699
  %v5072 = vpack.c.b16 %v4708, %v4704
  %v5073 = vpack.c.b16 %v4709, %v4705
  %v5074 = vpack.c.b16 %v4710, %v4706
  %v5075 = vpack.c.b16 %v4711, %v4707
  %v5076 = vpack.c.b16 %v4716, %v4712
  %v5077 = vpack.c.b16 %v4717, %v4713
  %v5078 = vpack.c.b16 %v4718, %v4714
  %v5079 = vpack.c.b16 %v4719, %v4715
  %v5080 = vpack.c.b16 %v4724, %v4720
  %v5081 = vpack.c.b16 %v4725, %v4721
  %v5082 = vpack.c.b16 %v4726, %v4722
  %v5083 = vpack.c.b16 %v4727, %v4723
  %v5084 = vpack.c.b16 %v4732, %v4728
  %v5085 = vpack.c.b16 %v4733, %v4729
  %v5086 = vpack.c.b16 %v4734, %v4730
  %v5087 = vpack.c.b16 %v4735, %v4731
  %v5088 = vpack.c.b16 %v4740, %v4736
  %v5089 = vpack.c.b16 %v4741, %v4737
  %v5090 = vpack.c.b16 %v4742, %v4738
  %v5091 = vpack.c.b16 %v4743, %v4739
  %v5092 = vpack.c.b16 %v4748, %v4744
  %v5093 = vpack.c.b16 %v4749, %v4745
  %v5094 = vpack.c.b16 %v4750, %v4746
  %v5095 = vpack.c.b16 %v4751, %v4747
  %v5096 = vpack.c.b16 %v4756, %v4752
  %v5097 = vpack.c.b16 %v4757, %v4753
  %v5098 = vpack.c.b16 %v4758, %v4754
  %v5099 = vpack.c.b16 %v4759, %v4755
  %v5100 = vpack.c.b16 %v4764, %v4760
  %v5101 = vpack.c.b16 %v4765, %v4761
  %v5102 = vpack.c.b16 %v4766, %v4762
  %v5103 = vpack.c.b16 %v4767, %v4763
  %v5104 = vpack.c.b16 %v4772, %v4768
  %v5105 = vpack.c.b16 %v4773, %v4769
  %v5106 = vpack.c.b16 %v4774, %v4770
  %v5107 = vpack.c.b16 %v4775, %v4771
  %v5108 = vpack.c.b16 %v4780, %v4776
  %v5109 = vpack.c.b16 %v4781, %v4777
  %v5110 = vpack.c.b16 %v4782, %v4778
  %v5111 = vpack.c.b16 %v4783, %v4779
  %v5112 = vpack.c.b16 %v4788, %v4784
  %v5113 = vpack.c.b16 %v4789, %v4785
  %v5114 = vpack.c.b16 %v4790, %v4786
  %v5115 = vpack.c.b16 %v4791, %v4787
  %v5116 = vpack.c.b16 %v4796, %v4792
  %v5117 = vpack.c.b16 %v4797, %v4793
  %v5118 = vpack.c.b16 %v4798, %v4794
  %v5119 = vpack.c.b16 %v4799, %v4795
  %v5120 = vpack.c.b16 %v4804, %v4800
  %v5121 = vpack.c.b16 %v4805, %v4801
  %v5122 = vpack.c.b16 %v4806, %v4802
  %v5123 = vpack.c.b16 %v4807, %v4803
  %v5124 = vpack.c.b16 %v4812, %v4808
  %v5125 = vpack.c.b16 %v4813, %v4809
  %v5126 = vpack.c.b16 %v4814, %v4810
  %v5127 = vpack.c.b16 %v4815, %v4811
  %v5128 = vpack.c.b16 %v4820, %v4816
  %v5129 = vpack.c.b16 %v4821, %v4817
  %v5130 = vpack.c.b16 %v4822, %v4818
  %v5131 = vpack.c.b16 %v4823, %v4819
  %v5132 = vpack.c.b16 %v4828, %v4824
  %v5133 = vpack.c.b16 %v4829, %v4825
  %v5134 = vpack.c.b16 %v4830, %v4826
  %v5135 = vpack.c.b16 %v4831, %v4827
  %v5136 = vpack.c.b16 %v4836, %v4832
  %v5137 = vpack.c.b16 %v4837, %v4833
  %v5138 = vpack.c.b16 %v4838, %v4834
  %v5139 = vpack.c.b16 %v4839, %v4835
  %v5140 = vpack.c.b16 %v4844, %v4840
  %v5141 = vpack.c.b16 %v4845, %v4841
  %v5142 = vpack.c.b16 %v4846, %v4842
  %v5143 = vpack.c.b16 %v4847, %v4843
  %v5144 = vpack.c.b16 %v4852, %v4848
  %v5145 = vpack.c.b16 %v4853, %v4849
  %v5146 = vpack.c.b16 %v4854, %v4850
  %v5147 = vpack.c.b16 %v4855, %v4851
  %v5148 = vpack.c.b16 %v4860, %v4856
  %v5149 = vpack.c.b16 %v4861, %v4857
  %v5150 = vpack.c.b16 %v4862, %v4858
  %v5151 = vpack.c.b16 %v4863, %v4859
  %v5152 = vpack.c.b16 %v4868, %v4864
  %v5153 = vpack.c.b16 %v4869, %v4865
  %v5154 = vpack.c.b16 %v4870, %v4866
  %v5155 = vpack.c.b16 %v4871, %v4867
  %v5156 = vpack.c.b16 %v4876, %v4872
  %v5157 = vpack.c.b16 %v4877, %v4873
  %v5158 = vpack.c.b16 %v4878, %v4874
  %v5159 = vpack.c.b16 %v4879, %v4875
  %v5160 = vpack.c.b16 %v4884, %v4880
  %v5161 = vpack.c.b16 %v4885, %v4881
  %v5162 = vpack.c.b16 %v4886, %v4882
  %v5163 = vpack.c.b16 %v4887, %v4883
  %v5164 = vpack.c.b16 %v4892, %v4888
  %v5165 = vpack.c.b16 %v4893, %v4889
  %v5166 = vpack.c.b16 %v4894, %v4890
  %v5167 = vpack.c.b16 %v4895, %v4891
  %v5168 = vpack.c.b16 %v4900, %v4896
  %v5169 = vpack.c.b16 %v4901, %v4897
  %v5170 = vpack.c.b16 %v4902, %v4898
  %v5171 = vpack.c.b16 %v4903, %v4899
  %v5172 = vpack.c.b16 %v4908, %v4904
  %v5173 = vpack.c.b16 %v4909, %v4905
  %v5174 = vpack.c.b16 %v4910, %v4906
  %v5175 = vpack.c.b16 %v4911, %v4907
  %v5176 = vpack.c.b16 %v4916, %v4912
  %v5177 = vpack.c.b16 %v4917, %v4913
  %v5178 = vpack.c.b16 %v4918, %v4914
  %v5179 = vpack.c.b16 %v4919, %v4915
  %v5180 = vpack.c.b16 %v4924, %v4920
  %v5181 = vpack.c.b16 %v4925, %v4921
  %v5182 = vpack.c.b16 %v4926, %v4922
  %v5183 = vpack.c.b16 %v4927, %v4923
  %5440 = vmatprep.subr.bf16.mxu0 %v4929
  %5441 = vmatpush1.bf16.msra.mxu0 %v4928
  %5442 = vmatprep.subr.bf16.mxu0 %v4933
  %5443 = vmatpush1.bf16.msra.mxu0 %v4932
  %5444 = vmatprep.subr.bf16.mxu0 %v4937
  %5445 = vmatpush1.bf16.msra.mxu0 %v4936
  %5446 = vmatprep.subr.bf16.mxu0 %v4941
  %5447 = vmatpush1.bf16.msra.mxu0 %v4940
  %5448 = vmatprep.subr.bf16.mxu0 %v4945
  %5449 = vmatpush1.bf16.msra.mxu0 %v4944
  %5450 = vmatprep.subr.bf16.mxu0 %v4949
  %5451 = vmatpush1.bf16.msra.mxu0 %v4948
  %5452 = vmatprep.subr.bf16.mxu0 %v4953
  %5453 = vmatpush1.bf16.msra.mxu0 %v4952
  %5454 = vmatprep.subr.bf16.mxu0 %v4957
  %5455 = vmatpush1.bf16.msra.mxu0 %v4956
  %5456 = vmatprep.subr.bf16.mxu0 %v4961
  %5457 = vmatpush1.bf16.msra.mxu0 %v4960
  %5458 = vmatprep.subr.bf16.mxu0 %v4965
  %5459 = vmatpush1.bf16.msra.mxu0 %v4964
  %5460 = vmatprep.subr.bf16.mxu0 %v4969
  %5461 = vmatpush1.bf16.msra.mxu0 %v4968
  %5462 = vmatprep.subr.bf16.mxu0 %v4973
  %5463 = vmatpush1.bf16.msra.mxu0 %v4972
  %5464 = vmatprep.subr.bf16.mxu0 %v4977
  %5465 = vmatpush1.bf16.msra.mxu0 %v4976
  %5466 = vmatprep.subr.bf16.mxu0 %v4981
  %5467 = vmatpush1.bf16.msra.mxu0 %v4980
  %5468 = vmatprep.subr.bf16.mxu0 %v4985
  %5469 = vmatpush1.bf16.msra.mxu0 %v4984
  %5470 = vmatprep.subr.bf16.mxu0 %v4989
  %5471 = vmatpush1.bf16.msra.mxu0 %v4988
  %5472 = vmatprep.mubr.bf16.mxu0 %v3875
  %5473 = vmatmul.mubr.bf16.gmra.mrb[0].mxu0 %v3874
  %v5474 = vpop.f32.mrb[0].mxu0
  %v5475 = vadd.f32 %v4143, %v5474
  %v5476 = vpop.f32.mrb[0].mxu0
  %v5477 = vadd.f32 %v4147, %v5476
  %v5478 = vpop.f32.mrb[0].mxu0
  %v5479 = vpop.f32.mrb[0].mxu0
  %5480 = vdwg.mxu0
  %5481 = vmatprep.subr.bf16.mxu0 %v4993
  %5482 = vmatpush1.bf16.msra.mxu0 %v4992
  %5483 = vmatprep.subr.bf16.mxu0 %v4997
  %5484 = vmatpush1.bf16.msra.mxu0 %v4996
  %5485 = vmatprep.subr.bf16.mxu0 %v5001
  %5486 = vmatpush1.bf16.msra.mxu0 %v5000
  %5487 = vmatprep.subr.bf16.mxu0 %v5005
  %5488 = vmatpush1.bf16.msra.mxu0 %v5004
  %5489 = vmatprep.subr.bf16.mxu0 %v5009
  %5490 = vmatpush1.bf16.msra.mxu0 %v5008
  %5491 = vmatprep.subr.bf16.mxu0 %v5013
  %5492 = vmatpush1.bf16.msra.mxu0 %v5012
  %5493 = vmatprep.subr.bf16.mxu0 %v5017
  %5494 = vmatpush1.bf16.msra.mxu0 %v5016
  %5495 = vmatprep.subr.bf16.mxu0 %v5021
  %5496 = vmatpush1.bf16.msra.mxu0 %v5020
  %5497 = vmatprep.subr.bf16.mxu0 %v5025
  %5498 = vmatpush1.bf16.msra.mxu0 %v5024
  %5499 = vmatprep.subr.bf16.mxu0 %v5029
  %5500 = vmatpush1.bf16.msra.mxu0 %v5028
  %5501 = vmatprep.subr.bf16.mxu0 %v5033
  %5502 = vmatpush1.bf16.msra.mxu0 %v5032
  %5503 = vmatprep.subr.bf16.mxu0 %v5037
  %5504 = vmatpush1.bf16.msra.mxu0 %v5036
  %5505 = vmatprep.subr.bf16.mxu0 %v5041
  %5506 = vmatpush1.bf16.msra.mxu0 %v5040
  %5507 = vmatprep.subr.bf16.mxu0 %v5045
  %5508 = vmatpush1.bf16.msra.mxu0 %v5044
  %5509 = vmatprep.subr.bf16.mxu0 %v5049
  %5510 = vmatpush1.bf16.msra.mxu0 %v5048
  %5511 = vmatprep.subr.bf16.mxu0 %v5053
  %5512 = vmatpush1.bf16.msra.mxu0 %v5052
  %5513 = vmatprep.mubr.bf16.mxu0 %v3877
  %5514 = vmatmul.mubr.bf16.gmra.mrb[0].mxu0 %v3876
  %v5515 = vpop.f32.mrb[0].mxu0
  %v5516 = vadd.f32 %v5475, %v5515
  %v5517 = vpop.f32.mrb[0].mxu0
  %v5518 = vadd.f32 %v5477, %v5517
  %v5519 = vpop.f32.mrb[0].mxu0
  %v5520 = vpop.f32.mrb[0].mxu0
  %5521 = vdwg.mxu0
  %5522 = vmatprep.subr.bf16.mxu0 %v5057
  %5523 = vmatpush1.bf16.msra.mxu0 %v5056
  %5524 = vmatprep.subr.bf16.mxu0 %v5061
  %5525 = vmatpush1.bf16.msra.mxu0 %v5060
  %5526 = vmatprep.subr.bf16.mxu0 %v5065
  %5527 = vmatpush1.bf16.msra.mxu0 %v5064
  %5528 = vmatprep.subr.bf16.mxu0 %v5069
  %5529 = vmatpush1.bf16.msra.mxu0 %v5068
  %5530 = vmatprep.subr.bf16.mxu0 %v5073
  %5531 = vmatpush1.bf16.msra.mxu0 %v5072
  %5532 = vmatprep.subr.bf16.mxu0 %v5077
  %5533 = vmatpush1.bf16.msra.mxu0 %v5076
  %5534 = vmatprep.subr.bf16.mxu0 %v5081
  %5535 = vmatpush1.bf16.msra.mxu0 %v5080
  %5536 = vmatprep.subr.bf16.mxu0 %v5085
  %5537 = vmatpush1.bf16.msra.mxu0 %v5084
  %5538 = vmatprep.subr.bf16.mxu0 %v5089
  %5539 = vmatpush1.bf16.msra.mxu0 %v5088
  %5540 = vmatprep.subr.bf16.mxu0 %v5093
  %5541 = vmatpush1.bf16.msra.mxu0 %v5092
  %5542 = vmatprep.subr.bf16.mxu0 %v5097
  %5543 = vmatpush1.bf16.msra.mxu0 %v5096
  %5544 = vmatprep.subr.bf16.mxu0 %v5101
  %5545 = vmatpush1.bf16.msra.mxu0 %v5100
  %5546 = vmatprep.subr.bf16.mxu0 %v5105
  %5547 = vmatpush1.bf16.msra.mxu0 %v5104
  %5548 = vmatprep.subr.bf16.mxu0 %v5109
  %5549 = vmatpush1.bf16.msra.mxu0 %v5108
  %5550 = vmatprep.subr.bf16.mxu0 %v5113
  %5551 = vmatpush1.bf16.msra.mxu0 %v5112
  %5552 = vmatprep.subr.bf16.mxu0 %v5117
  %5553 = vmatpush1.bf16.msra.mxu0 %v5116
  %5554 = vmatprep.mubr.bf16.mxu0 %v3879
  %5555 = vmatmul.mubr.bf16.gmra.mrb[0].mxu0 %v3878
  %v5556 = vpop.f32.mrb[0].mxu0
  %v5557 = vadd.f32 %v5516, %v5556
  %v5558 = vpop.f32.mrb[0].mxu0
  %v5559 = vadd.f32 %v5518, %v5558
  %v5560 = vpop.f32.mrb[0].mxu0
  %v5561 = vpop.f32.mrb[0].mxu0
  %5562 = vdwg.mxu0
  %5563 = vmatprep.subr.bf16.mxu0 %v5121
  %5564 = vmatpush1.bf16.msra.mxu0 %v5120
  %5565 = vmatprep.subr.bf16.mxu0 %v5125
  %5566 = vmatpush1.bf16.msra.mxu0 %v5124
  %5567 = vmatprep.subr.bf16.mxu0 %v5129
  %5568 = vmatpush1.bf16.msra.mxu0 %v5128
  %5569 = vmatprep.subr.bf16.mxu0 %v5133
  %5570 = vmatpush1.bf16.msra.mxu0 %v5132
  %5571 = vmatprep.subr.bf16.mxu0 %v5137
  %5572 = vmatpush1.bf16.msra.mxu0 %v5136
  %5573 = vmatprep.subr.bf16.mxu0 %v5141
  %5574 = vmatpush1.bf16.msra.mxu0 %v5140
  %5575 = vmatprep.subr.bf16.mxu0 %v5145
  %5576 = vmatpush1.bf16.msra.mxu0 %v5144
  %5577 = vmatprep.subr.bf16.mxu0 %v5149
  %5578 = vmatpush1.bf16.msra.mxu0 %v5148
  %5579 = vmatprep.subr.bf16.mxu0 %v5153
  %5580 = vmatpush1.bf16.msra.mxu0 %v5152
  %5581 = vmatprep.subr.bf16.mxu0 %v5157
  %5582 = vmatpush1.bf16.msra.mxu0 %v5156
  %5583 = vmatprep.subr.bf16.mxu0 %v5161
  %5584 = vmatpush1.bf16.msra.mxu0 %v5160
  %5585 = vmatprep.subr.bf16.mxu0 %v5165
  %5586 = vmatpush1.bf16.msra.mxu0 %v5164
  %5587 = vmatprep.subr.bf16.mxu0 %v5169
  %5588 = vmatpush1.bf16.msra.mxu0 %v5168
  %5589 = vmatprep.subr.bf16.mxu0 %v5173
  %5590 = vmatpush1.bf16.msra.mxu0 %v5172
  %5591 = vmatprep.subr.bf16.mxu0 %v5177
  %5592 = vmatpush1.bf16.msra.mxu0 %v5176
  %5593 = vmatprep.subr.bf16.mxu0 %v5181
  %5594 = vmatpush1.bf16.msra.mxu0 %v5180
  %5595 = vmatprep.mubr.bf16.mxu0 %v3881
  %5596 = vmatmul.mubr.bf16.gmra.mrb[0].mxu0 %v3880
  %v5597 = vpop.f32.mrb[0].mxu0
  %v5598 = vadd.f32 %v5557, %v5597
  %v5599 = vpop.f32.mrb[0].mxu0
  %v5600 = vadd.f32 %v5559, %v5599
  %v5601 = vpop.f32.mrb[0].mxu0
  %v5602 = vpop.f32.mrb[0].mxu0
  %5603 = vdwg.mxu0
  %5604 = vmatprep.subr.bf16.mxu0 %v4931
  %5605 = vmatpush1.bf16.msra.mxu0 %v4930
  %5606 = vmatprep.subr.bf16.mxu0 %v4935
  %5607 = vmatpush1.bf16.msra.mxu0 %v4934
  %5608 = vmatprep.subr.bf16.mxu0 %v4939
  %5609 = vmatpush1.bf16.msra.mxu0 %v4938
  %5610 = vmatprep.subr.bf16.mxu0 %v4943
  %5611 = vmatpush1.bf16.msra.mxu0 %v4942
  %5612 = vmatprep.subr.bf16.mxu0 %v4947
  %5613 = vmatpush1.bf16.msra.mxu0 %v4946
  %5614 = vmatprep.subr.bf16.mxu0 %v4951
  %5615 = vmatpush1.bf16.msra.mxu0 %v4950
  %5616 = vmatprep.subr.bf16.mxu0 %v4955
  %5617 = vmatpush1.bf16.msra.mxu0 %v4954
  %5618 = vmatprep.subr.bf16.mxu0 %v4959
  %5619 = vmatpush1.bf16.msra.mxu0 %v4958
  %5620 = vmatprep.subr.bf16.mxu0 %v4963
  %5621 = vmatpush1.bf16.msra.mxu0 %v4962
  %5622 = vmatprep.subr.bf16.mxu0 %v4967
  %5623 = vmatpush1.bf16.msra.mxu0 %v4966
  %5624 = vmatprep.subr.bf16.mxu0 %v4971
  %5625 = vmatpush1.bf16.msra.mxu0 %v4970
  %5626 = vmatprep.subr.bf16.mxu0 %v4975
  %5627 = vmatpush1.bf16.msra.mxu0 %v4974
  %5628 = vmatprep.subr.bf16.mxu0 %v4979
  %5629 = vmatpush1.bf16.msra.mxu0 %v4978
  %5630 = vmatprep.subr.bf16.mxu0 %v4983
  %5631 = vmatpush1.bf16.msra.mxu0 %v4982
  %5632 = vmatprep.subr.bf16.mxu0 %v4987
  %5633 = vmatpush1.bf16.msra.mxu0 %v4986
  %5634 = vmatprep.subr.bf16.mxu0 %v4991
  %5635 = vmatpush1.bf16.msra.mxu0 %v4990
  %5636 = vmatprep.mubr.bf16.mxu0 %v3875
  %5637 = vmatmul.mubr.bf16.gmra.mrb[0].mxu0 %v3874
  %v5638 = vpop.f32.mrb[0].mxu0
  %v5639 = vadd.f32 %v4151, %v5638
  %v5640 = vpop.f32.mrb[0].mxu0
  %v5641 = vadd.f32 %v4155, %v5640
  %v5642 = vpop.f32.mrb[0].mxu0
  %v5643 = vpop.f32.mrb[0].mxu0
  %5644 = vdwg.mxu0
  %5645 = vmatprep.subr.bf16.mxu0 %v4995
  %5646 = vmatpush1.bf16.msra.mxu0 %v4994
  %5647 = vmatprep.subr.bf16.mxu0 %v4999
  %5648 = vmatpush1.bf16.msra.mxu0 %v4998
  %5649 = vmatprep.subr.bf16.mxu0 %v5003
  %5650 = vmatpush1.bf16.msra.mxu0 %v5002
  %5651 = vmatprep.subr.bf16.mxu0 %v5007
  %5652 = vmatpush1.bf16.msra.mxu0 %v5006
  %5653 = vmatprep.subr.bf16.mxu0 %v5011
  %5654 = vmatpush1.bf16.msra.mxu0 %v5010
  %5655 = vmatprep.subr.bf16.mxu0 %v5015
  %5656 = vmatpush1.bf16.msra.mxu0 %v5014
  %5657 = vmatprep.subr.bf16.mxu0 %v5019
  %5658 = vmatpush1.bf16.msra.mxu0 %v5018
  %5659 = vmatprep.subr.bf16.mxu0 %v5023
  %5660 = vmatpush1.bf16.msra.mxu0 %v5022
  %5661 = vmatprep.subr.bf16.mxu0 %v5027
  %5662 = vmatpush1.bf16.msra.mxu0 %v5026
  %5663 = vmatprep.subr.bf16.mxu0 %v5031
  %5664 = vmatpush1.bf16.msra.mxu0 %v5030
  %5665 = vmatprep.subr.bf16.mxu0 %v5035
  %5666 = vmatpush1.bf16.msra.mxu0 %v5034
  %5667 = vmatprep.subr.bf16.mxu0 %v5039
  %5668 = vmatpush1.bf16.msra.mxu0 %v5038
  %5669 = vmatprep.subr.bf16.mxu0 %v5043
  %5670 = vmatpush1.bf16.msra.mxu0 %v5042
  %5671 = vmatprep.subr.bf16.mxu0 %v5047
  %5672 = vmatpush1.bf16.msra.mxu0 %v5046
  %5673 = vmatprep.subr.bf16.mxu0 %v5051
  %5674 = vmatpush1.bf16.msra.mxu0 %v5050
  %5675 = vmatprep.subr.bf16.mxu0 %v5055
  %5676 = vmatpush1.bf16.msra.mxu0 %v5054
  %5677 = vmatprep.mubr.bf16.mxu0 %v3877
  %5678 = vmatmul.mubr.bf16.gmra.mrb[0].mxu0 %v3876
  %v5679 = vpop.f32.mrb[0].mxu0
  %v5680 = vadd.f32 %v5639, %v5679
  %v5681 = vpop.f32.mrb[0].mxu0
  %v5682 = vadd.f32 %v5641, %v5681
  %v5683 = vpop.f32.mrb[0].mxu0
  %v5684 = vpop.f32.mrb[0].mxu0
  %5685 = vdwg.mxu0
  %5686 = vmatprep.subr.bf16.mxu0 %v5059
  %5687 = vmatpush1.bf16.msra.mxu0 %v5058
  %5688 = vmatprep.subr.bf16.mxu0 %v5063
  %5689 = vmatpush1.bf16.msra.mxu0 %v5062
  %5690 = vmatprep.subr.bf16.mxu0 %v5067
  %5691 = vmatpush1.bf16.msra.mxu0 %v5066
  %5692 = vmatprep.subr.bf16.mxu0 %v5071
  %5693 = vmatpush1.bf16.msra.mxu0 %v5070
  %5694 = vmatprep.subr.bf16.mxu0 %v5075
  %5695 = vmatpush1.bf16.msra.mxu0 %v5074
  %5696 = vmatprep.subr.bf16.mxu0 %v5079
  %5697 = vmatpush1.bf16.msra.mxu0 %v5078
  %5698 = vmatprep.subr.bf16.mxu0 %v5083
  %5699 = vmatpush1.bf16.msra.mxu0 %v5082
  %5700 = vmatprep.subr.bf16.mxu0 %v5087
  %5701 = vmatpush1.bf16.msra.mxu0 %v5086
  %5702 = vmatprep.subr.bf16.mxu0 %v5091
  %5703 = vmatpush1.bf16.msra.mxu0 %v5090
  %5704 = vmatprep.subr.bf16.mxu0 %v5095
  %5705 = vmatpush1.bf16.msra.mxu0 %v5094
  %5706 = vmatprep.subr.bf16.mxu0 %v5099
  %5707 = vmatpush1.bf16.msra.mxu0 %v5098
  %5708 = vmatprep.subr.bf16.mxu0 %v5103
  %5709 = vmatpush1.bf16.msra.mxu0 %v5102
  %5710 = vmatprep.subr.bf16.mxu0 %v5107
  %5711 = vmatpush1.bf16.msra.mxu0 %v5106
  %5712 = vmatprep.subr.bf16.mxu0 %v5111
  %5713 = vmatpush1.bf16.msra.mxu0 %v5110
  %5714 = vmatprep.subr.bf16.mxu0 %v5115
  %5715 = vmatpush1.bf16.msra.mxu0 %v5114
  %5716 = vmatprep.subr.bf16.mxu0 %v5119
  %5717 = vmatpush1.bf16.msra.mxu0 %v5118
  %5718 = vmatprep.mubr.bf16.mxu0 %v3879
  %5719 = vmatmul.mubr.bf16.gmra.mrb[0].mxu0 %v3878
  %v5720 = vpop.f32.mrb[0].mxu0
  %v5721 = vadd.f32 %v5680, %v5720
  %v5722 = vpop.f32.mrb[0].mxu0
  %v5723 = vadd.f32 %v5682, %v5722
  %v5724 = vpop.f32.mrb[0].mxu0
  %v5725 = vpop.f32.mrb[0].mxu0
  %5726 = vdwg.mxu0
  %5727 = vmatprep.subr.bf16.mxu0 %v5123
  %5728 = vmatpush1.bf16.msra.mxu0 %v5122
  %5729 = vmatprep.subr.bf16.mxu0 %v5127
  %5730 = vmatpush1.bf16.msra.mxu0 %v5126
  %5731 = vmatprep.subr.bf16.mxu0 %v5131
  %5732 = vmatpush1.bf16.msra.mxu0 %v5130
  %5733 = vmatprep.subr.bf16.mxu0 %v5135
  %5734 = vmatpush1.bf16.msra.mxu0 %v5134
  %5735 = vmatprep.subr.bf16.mxu0 %v5139
  %5736 = vmatpush1.bf16.msra.mxu0 %v5138
  %5737 = vmatprep.subr.bf16.mxu0 %v5143
  %5738 = vmatpush1.bf16.msra.mxu0 %v5142
  %5739 = vmatprep.subr.bf16.mxu0 %v5147
  %5740 = vmatpush1.bf16.msra.mxu0 %v5146
  %5741 = vmatprep.subr.bf16.mxu0 %v5151
  %5742 = vmatpush1.bf16.msra.mxu0 %v5150
  %5743 = vmatprep.subr.bf16.mxu0 %v5155
  %5744 = vmatpush1.bf16.msra.mxu0 %v5154
  %5745 = vmatprep.subr.bf16.mxu0 %v5159
  %5746 = vmatpush1.bf16.msra.mxu0 %v5158
  %5747 = vmatprep.subr.bf16.mxu0 %v5163
  %5748 = vmatpush1.bf16.msra.mxu0 %v5162
  %5749 = vmatprep.subr.bf16.mxu0 %v5167
  %5750 = vmatpush1.bf16.msra.mxu0 %v5166
  %5751 = vmatprep.subr.bf16.mxu0 %v5171
  %5752 = vmatpush1.bf16.msra.mxu0 %v5170
  %5753 = vmatprep.subr.bf16.mxu0 %v5175
  %5754 = vmatpush1.bf16.msra.mxu0 %v5174
  %5755 = vmatprep.subr.bf16.mxu0 %v5179
  %5756 = vmatpush1.bf16.msra.mxu0 %v5178
  %5757 = vmatprep.subr.bf16.mxu0 %v5183
  %5758 = vmatpush1.bf16.msra.mxu0 %v5182
  %5759 = vmatprep.mubr.bf16.mxu0 %v3881
  %5760 = vmatmul.mubr.bf16.gmra.mrb[0].mxu0 %v3880
  %v5761 = vpop.f32.mrb[0].mxu0
  %v5762 = vadd.f32 %v5721, %v5761
  %v5763 = vpop.f32.mrb[0].mxu0
  %v5764 = vadd.f32 %v5723, %v5763
  %v5765 = vpop.f32.mrb[0].mxu0
  %v5766 = vpop.f32.mrb[0].mxu0
  %5767 = vdwg.mxu0
  %v5768 = vmax.f32 %v5598, 0.0
  %v5769 = vmax.f32 %v5600, 0.0
  %v5770 = vmax.f32 %v5762, 0.0
  %v5771 = vmax.f32 %v5764, 0.0
  %v5772 = vpack.c.bf16 %v5768, %v5768
  %v5773 = vpack.c.bf16 %v5769, %v5769
  %v5774 = vpack.c.bf16 %v5770, %v5770
  %v5775 = vpack.c.bf16 %v5771, %v5771
  %v5776 = vld [vmem:[%s6] sm:$0xf]
  %v5777 = vld [vmem:[%s6 + $0x4] sm:$0xf]
  %v5778 = vld [vmem:[%s6 + $0x8] sm:$0xf]
  %v5779 = vld [vmem:[%s6 + $0xc] sm:$0xf]
  %v5780 = vld [vmem:[%s6 + $0x10] sm:$0xf]
  %v5781 = vld [vmem:[%s6 + $0x14] sm:$0xf]
  %v5782 = vld [vmem:[%s6 + $0x18] sm:$0xf]
  %v5783 = vld [vmem:[%s6 + $0x1c] sm:$0xf]
  %v5784 = vld [vmem:[%s6 + $0x20] sm:$0xf]
  %v5785 = vld [vmem:[%s6 + $0x24] sm:$0xf]
  %v5786 = vld [vmem:[%s6 + $0x28] sm:$0xf]
  %v5787 = vld [vmem:[%s6 + $0x2c] sm:$0xf]
  %v5788 = vld [vmem:[%s6 + $0x30] sm:$0xf]
  %v5789 = vld [vmem:[%s6 + $0x34] sm:$0xf]
  %v5790 = vld [vmem:[%s6 + $0x38] sm:$0xf]
  %v5791 = vld [vmem:[%s6 + $0x3c] sm:$0xf]
  %v5792 = vld [vmem:[%s6 + $0x40] sm:$0xf]
  %v5793 = vld [vmem:[%s6 + $0x44] sm:$0xf]
  %v5794 = vld [vmem:[%s6 + $0x48] sm:$0xf]
  %v5795 = vld [vmem:[%s6 + $0x4c] sm:$0xf]
  %v5796 = vld [vmem:[%s6 + $0x50] sm:$0xf]
  %v5797 = vld [vmem:[%s6 + $0x54] sm:$0xf]
  %v5798 = vld [vmem:[%s6 + $0x58] sm:$0xf]
  %v5799 = vld [vmem:[%s6 + $0x5c] sm:$0xf]
  %v5800 = vld [vmem:[%s6 + $0x60] sm:$0xf]
  %v5801 = vld [vmem:[%s6 + $0x64] sm:$0xf]
  %v5802 = vld [vmem:[%s6 + $0x68] sm:$0xf]
  %v5803 = vld [vmem:[%s6 + $0x6c] sm:$0xf]
  %v5804 = vld [vmem:[%s6 + $0x70] sm:$0xf]
  %v5805 = vld [vmem:[%s6 + $0x74] sm:$0xf]
  %v5806 = vld [vmem:[%s6 + $0x78] sm:$0xf]
  %v5807 = vld [vmem:[%s6 + $0x7c] sm:$0xf]
  %v5808 = vld [vmem:[%s6 + $0x80] sm:$0xf]
  %v5809 = vld [vmem:[%s6 + $0x84] sm:$0xf]
  %v5810 = vld [vmem:[%s6 + $0x88] sm:$0xf]
  %v5811 = vld [vmem:[%s6 + $0x8c] sm:$0xf]
  %v5812 = vld [vmem:[%s6 + $0x90] sm:$0xf]
  %v5813 = vld [vmem:[%s6 + $0x94] sm:$0xf]
  %v5814 = vld [vmem:[%s6 + $0x98] sm:$0xf]
  %v5815 = vld [vmem:[%s6 + $0x9c] sm:$0xf]
  %v5816 = vld [vmem:[%s6 + $0xa0] sm:$0xf]
  %v5817 = vld [vmem:[%s6 + $0xa4] sm:$0xf]
  %v5818 = vld [vmem:[%s6 + $0xa8] sm:$0xf]
  %v5819 = vld [vmem:[%s6 + $0xac] sm:$0xf]
  %v5820 = vld [vmem:[%s6 + $0xb0] sm:$0xf]
  %v5821 = vld [vmem:[%s6 + $0xb4] sm:$0xf]
  %v5822 = vld [vmem:[%s6 + $0xb8] sm:$0xf]
  %v5823 = vld [vmem:[%s6 + $0xbc] sm:$0xf]
  %v5824 = vld [vmem:[%s6 + $0xc0] sm:$0xf]
  %v5825 = vld [vmem:[%s6 + $0xc4] sm:$0xf]
  %v5826 = vld [vmem:[%s6 + $0xc8] sm:$0xf]
  %v5827 = vld [vmem:[%s6 + $0xcc] sm:$0xf]
  %v5828 = vld [vmem:[%s6 + $0xd0] sm:$0xf]
  %v5829 = vld [vmem:[%s6 + $0xd4] sm:$0xf]
  %v5830 = vld [vmem:[%s6 + $0xd8] sm:$0xf]
  %v5831 = vld [vmem:[%s6 + $0xdc] sm:$0xf]
  %v5832 = vld [vmem:[%s6 + $0xe0] sm:$0xf]
  %v5833 = vld [vmem:[%s6 + $0xe4] sm:$0xf]
  %v5834 = vld [vmem:[%s6 + $0xe8] sm:$0xf]
  %v5835 = vld [vmem:[%s6 + $0xec] sm:$0xf]
  %v5836 = vld [vmem:[%s6 + $0xf0] sm:$0xf]
  %v5837 = vld [vmem:[%s6 + $0xf4] sm:$0xf]
  %v5838 = vld [vmem:[%s6 + $0xf8] sm:$0xf]
  %v5839 = vld [vmem:[%s6 + $0xfc] sm:$0xf]
  %v5840 = vld [vmem:[%s7] sm:$0x1]
  %v5842 = vlaneseq
  %v5843 = vshrl.u32 %v5842, 7
  %v5844 = vsub.s32 0, %v5843
  %v5845 = vrot.slane %v5840, %v5844
  %v5911 = vunpack.c.l.b16 %v5776
  %v5912 = vunpack.c.l.b16 %v5777
  %v5913 = vunpack.c.l.b16 %v5778
  %v5914 = vunpack.c.l.b16 %v5779
  %v5915 = vunpack.c.l.b16 %v5780
  %v5916 = vunpack.c.l.b16 %v5781
  %v5917 = vunpack.c.l.b16 %v5782
  %v5918 = vunpack.c.l.b16 %v5783
  %v5919 = vunpack.c.l.b16 %v5784
  %v5920 = vunpack.c.l.b16 %v5785
  %v5921 = vunpack.c.l.b16 %v5786
  %v5922 = vunpack.c.l.b16 %v5787
  %v5923 = vunpack.c.l.b16 %v5788
  %v5924 = vunpack.c.l.b16 %v5789
  %v5925 = vunpack.c.l.b16 %v5790
  %v5926 = vunpack.c.l.b16 %v5791
  %v5927 = vunpack.c.l.b16 %v5792
  %v5928 = vunpack.c.l.b16 %v5793
  %v5929 = vunpack.c.l.b16 %v5794
  %v5930 = vunpack.c.l.b16 %v5795
  %v5931 = vunpack.c.l.b16 %v5796
  %v5932 = vunpack.c.l.b16 %v5797
  %v5933 = vunpack.c.l.b16 %v5798
  %v5934 = vunpack.c.l.b16 %v5799
  %v5935 = vunpack.c.l.b16 %v5800
  %v5936 = vunpack.c.l.b16 %v5801
  %v5937 = vunpack.c.l.b16 %v5802
  %v5938 = vunpack.c.l.b16 %v5803
  %v5939 = vunpack.c.l.b16 %v5804
  %v5940 = vunpack.c.l.b16 %v5805
  %v5941 = vunpack.c.l.b16 %v5806
  %v5942 = vunpack.c.l.b16 %v5807
  %v5943 = vunpack.c.l.b16 %v5808
  %v5944 = vunpack.c.l.b16 %v5809
  %v5945 = vunpack.c.l.b16 %v5810
  %v5946 = vunpack.c.l.b16 %v5811
  %v5947 = vunpack.c.l.b16 %v5812
  %v5948 = vunpack.c.l.b16 %v5813
  %v5949 = vunpack.c.l.b16 %v5814
  %v5950 = vunpack.c.l.b16 %v5815
  %v5951 = vunpack.c.l.b16 %v5816
  %v5952 = vunpack.c.l.b16 %v5817
  %v5953 = vunpack.c.l.b16 %v5818
  %v5954 = vunpack.c.l.b16 %v5819
  %v5955 = vunpack.c.l.b16 %v5820
  %v5956 = vunpack.c.l.b16 %v5821
  %v5957 = vunpack.c.l.b16 %v5822
  %v5958 = vunpack.c.l.b16 %v5823
  %v5959 = vunpack.c.l.b16 %v5824
  %v5960 = vunpack.c.l.b16 %v5825
  %v5961 = vunpack.c.l.b16 %v5826
  %v5962 = vunpack.c.l.b16 %v5827
  %v5963 = vunpack.c.l.b16 %v5828
  %v5964 = vunpack.c.l.b16 %v5829
  %v5965 = vunpack.c.l.b16 %v5830
  %v5966 = vunpack.c.l.b16 %v5831
  %v5967 = vunpack.c.l.b16 %v5832
  %v5968 = vunpack.c.l.b16 %v5833
  %v5969 = vunpack.c.l.b16 %v5834
  %v5970 = vunpack.c.l.b16 %v5835
  %v5971 = vunpack.c.l.b16 %v5836
  %v5972 = vunpack.c.l.b16 %v5837
  %v5973 = vunpack.c.l.b16 %v5838
  %v5974 = vunpack.c.l.b16 %v5839
  %v5975 = vpack.c.b16 %v5912, %v5911
  %v5976 = vpack.c.b16 %v5914, %v5913
  %v5977 = vpack.c.b16 %v5916, %v5915
  %v5978 = vpack.c.b16 %v5918, %v5917
  %v5979 = vpack.c.b16 %v5920, %v5919
  %v5980 = vpack.c.b16 %v5922, %v5921
  %v5981 = vpack.c.b16 %v5924, %v5923
  %v5982 = vpack.c.b16 %v5926, %v5925
  %v5983 = vpack.c.b16 %v5928, %v5927
  %v5984 = vpack.c.b16 %v5930, %v5929
  %v5985 = vpack.c.b16 %v5932, %v5931
  %v5986 = vpack.c.b16 %v5934, %v5933
  %v5987 = vpack.c.b16 %v5936, %v5935
  %v5988 = vpack.c.b16 %v5938, %v5937
  %v5989 = vpack.c.b16 %v5940, %v5939
  %v5990 = vpack.c.b16 %v5942, %v5941
  %v5991 = vpack.c.b16 %v5944, %v5943
  %v5992 = vpack.c.b16 %v5946, %v5945
  %v5993 = vpack.c.b16 %v5948, %v5947
  %v5994 = vpack.c.b16 %v5950, %v5949
  %v5995 = vpack.c.b16 %v5952, %v5951
  %v5996 = vpack.c.b16 %v5954, %v5953
  %v5997 = vpack.c.b16 %v5956, %v5955
  %v5998 = vpack.c.b16 %v5958, %v5957
  %v5999 = vpack.c.b16 %v5960, %v5959
  %v6000 = vpack.c.b16 %v5962, %v5961
  %v6001 = vpack.c.b16 %v5964, %v5963
  %v6002 = vpack.c.b16 %v5966, %v5965
  %v6003 = vpack.c.b16 %v5968, %v5967
  %v6004 = vpack.c.b16 %v5970, %v5969
  %v6005 = vpack.c.b16 %v5972, %v5971
  %v6006 = vpack.c.b16 %v5974, %v5973
  %6039 = vmatprep.subr.bf16.mxu0 0
  %6040 = vmatpush1.bf16.msra.mxu0 %v5975
  %6041 = vmatprep.subr.bf16.mxu0 0
  %6042 = vmatpush1.bf16.msra.mxu0 %v5976
  %6043 = vmatprep.subr.bf16.mxu0 0
  %6044 = vmatpush1.bf16.msra.mxu0 %v5977
  %6045 = vmatprep.subr.bf16.mxu0 0
  %6046 = vmatpush1.bf16.msra.mxu0 %v5978
  %6047 = vmatprep.subr.bf16.mxu0 0
  %6048 = vmatpush1.bf16.msra.mxu0 %v5979
  %6049 = vmatprep.subr.bf16.mxu0 0
  %6050 = vmatpush1.bf16.msra.mxu0 %v5980
  %6051 = vmatprep.subr.bf16.mxu0 0
  %6052 = vmatpush1.bf16.msra.mxu0 %v5981
  %6053 = vmatprep.subr.bf16.mxu0 0
  %6054 = vmatpush1.bf16.msra.mxu0 %v5982
  %6055 = vmatprep.subr.bf16.mxu0 0
  %6056 = vmatpush1.bf16.msra.mxu0 %v5983
  %6057 = vmatprep.subr.bf16.mxu0 0
  %6058 = vmatpush1.bf16.msra.mxu0 %v5984
  %6059 = vmatprep.subr.bf16.mxu0 0
  %6060 = vmatpush1.bf16.msra.mxu0 %v5985
  %6061 = vmatprep.subr.bf16.mxu0 0
  %6062 = vmatpush1.bf16.msra.mxu0 %v5986
  %6063 = vmatprep.subr.bf16.mxu0 0
  %6064 = vmatpush1.bf16.msra.mxu0 %v5987
  %6065 = vmatprep.subr.bf16.mxu0 0
  %6066 = vmatpush1.bf16.msra.mxu0 %v5988
  %6067 = vmatprep.subr.bf16.mxu0 0
  %6068 = vmatpush1.bf16.msra.mxu0 %v5989
  %6069 = vmatprep.subr.bf16.mxu0 0
  %6070 = vmatpush1.bf16.msra.mxu0 %v5990
  %6071 = vmatprep.mubr.bf16.mxu0 %v5773
  %6072 = vmatmul.mubr.bf16.gmra.mrb[0].mxu0 %v5772
  %v6073 = vpop.f32.mrb[0].mxu0
  %v6074 = vadd.f32 %v5845, %v6073
  %v6075 = vpop.f32.mrb[0].mxu0
  %v6076 = vpop.f32.mrb[0].mxu0
  %v6077 = vpop.f32.mrb[0].mxu0
  %6078 = vdwg.mxu0
  %6079 = vmatprep.subr.bf16.mxu0 0
  %6080 = vmatpush1.bf16.msra.mxu0 %v5991
  %6081 = vmatprep.subr.bf16.mxu0 0
  %6082 = vmatpush1.bf16.msra.mxu0 %v5992
  %6083 = vmatprep.subr.bf16.mxu0 0
  %6084 = vmatpush1.bf16.msra.mxu0 %v5993
  %6085 = vmatprep.subr.bf16.mxu0 0
  %6086 = vmatpush1.bf16.msra.mxu0 %v5994
  %6087 = vmatprep.subr.bf16.mxu0 0
  %6088 = vmatpush1.bf16.msra.mxu0 %v5995
  %6089 = vmatprep.subr.bf16.mxu0 0
  %6090 = vmatpush1.bf16.msra.mxu0 %v5996
  %6091 = vmatprep.subr.bf16.mxu0 0
  %6092 = vmatpush1.bf16.msra.mxu0 %v5997
  %6093 = vmatprep.subr.bf16.mxu0 0
  %6094 = vmatpush1.bf16.msra.mxu0 %v5998
  %6095 = vmatprep.subr.bf16.mxu0 0
  %6096 = vmatpush1.bf16.msra.mxu0 %v5999
  %6097 = vmatprep.subr.bf16.mxu0 0
  %6098 = vmatpush1.bf16.msra.mxu0 %v6000
  %6099 = vmatprep.subr.bf16.mxu0 0
  %6100 = vmatpush1.bf16.msra.mxu0 %v6001
  %6101 = vmatprep.subr.bf16.mxu0 0
  %6102 = vmatpush1.bf16.msra.mxu0 %v6002
  %6103 = vmatprep.subr.bf16.mxu0 0
  %6104 = vmatpush1.bf16.msra.mxu0 %v6003
  %6105 = vmatprep.subr.bf16.mxu0 0
  %6106 = vmatpush1.bf16.msra.mxu0 %v6004
  %6107 = vmatprep.subr.bf16.mxu0 0
  %6108 = vmatpush1.bf16.msra.mxu0 %v6005
  %6109 = vmatprep.subr.bf16.mxu0 0
  %6110 = vmatpush1.bf16.msra.mxu0 %v6006
  %6111 = vmatprep.mubr.bf16.mxu0 %v5775
  %6112 = vmatmul.mubr.bf16.gmra.mrb[0].mxu0 %v5774
  %v6113 = vpop.f32.mrb[0].mxu0
  %v6114 = vadd.f32 %v6074, %v6113
  %v6115 = vpop.f32.mrb[0].mxu0
  %v6116 = vpop.f32.mrb[0].mxu0
  %v6117 = vpop.f32.mrb[0].mxu0
  %6118 = vdwg.mxu0
  %v6119 = vmax.f32 %v6114, 0.0
  %v6120 = vld [vmem:[%s1] sm:$0x3]
  %6122 = vrot.lane.b32.xlu0 %v6120, 64
  %v6123 = vpop.permute.xlu0 %6122
  %vm6125 = vcmask 523264
  %v6126 = vsel %vm6125, %v6119, %v6123
  %v6127 = vpack.c.bf16 %v6126, %v6126
  %v6128 = vld [vmem:[%s8] sm:$0xff]
  %v6129 = vld [vmem:[%s8 + $0x8] sm:$0xff]
  %v6130 = vld [vmem:[%s8 + $0x10] sm:$0xff]
  %v6131 = vld [vmem:[%s8 + $0x18] sm:$0xff]
  %v6132 = vld [vmem:[%s8 + $0x20] sm:$0xff]
  %v6133 = vld [vmem:[%s8 + $0x28] sm:$0xff]
  %v6134 = vld [vmem:[%s8 + $0x30] sm:$0xff]
  %v6135 = vld [vmem:[%s8 + $0x38] sm:$0xff]
  %v6136 = vld [vmem:[%s8 + $0x40] sm:$0xff]
  %v6137 = vld [vmem:[%s8 + $0x48] sm:$0xff]
  %v6138 = vld [vmem:[%s8 + $0x50] sm:$0xff]
  %v6139 = vld [vmem:[%s8 + $0x58] sm:$0xff]
  %v6140 = vld [vmem:[%s8 + $0x60] sm:$0xff]
  %v6141 = vld [vmem:[%s8 + $0x68] sm:$0xff]
  %v6142 = vld [vmem:[%s8 + $0x70] sm:$0xff]
  %v6143 = vld [vmem:[%s8 + $0x78] sm:$0xff]
  %v6144 = vld [vmem:[%s9] sm:$0x3]
  %v6146 = vlaneseq
  %v6147 = vshrl.u32 %v6146, 7
  %v6148 = vsub.s32 0, %v6147
  %v6149 = vrot.slane %v6144, %v6148
  %v6150 = vlaneseq
  %v6151 = vshrl.u32 %v6150, 7
  %v6152 = vsub.s32 1, %v6151
  %v6153 = vrot.slane %v6144, %v6152
  %v6172 = vunpack.c.l.b16 %v6128
  %v6173 = vunpack.c.h.b16 %v6128
  %v6174 = vunpack.c.l.b16 %v6129
  %v6175 = vunpack.c.h.b16 %v6129
  %v6176 = vunpack.c.l.b16 %v6130
  %v6177 = vunpack.c.h.b16 %v6130
  %v6178 = vunpack.c.l.b16 %v6131
  %v6179 = vunpack.c.h.b16 %v6131
  %v6180 = vunpack.c.l.b16 %v6132
  %v6181 = vunpack.c.h.b16 %v6132
  %v6182 = vunpack.c.l.b16 %v6133
  %v6183 = vunpack.c.h.b16 %v6133
  %v6184 = vunpack.c.l.b16 %v6134
  %v6185 = vunpack.c.h.b16 %v6134
  %v6186 = vunpack.c.l.b16 %v6135
  %v6187 = vunpack.c.h.b16 %v6135
  %v6188 = vunpack.c.l.b16 %v6136
  %v6189 = vunpack.c.h.b16 %v6136
  %v6190 = vunpack.c.l.b16 %v6137
  %v6191 = vunpack.c.h.b16 %v6137
  %v6192 = vunpack.c.l.b16 %v6138
  %v6193 = vunpack.c.h.b16 %v6138
  %v6194 = vunpack.c.l.b16 %v6139
  %v6195 = vunpack.c.h.b16 %v6139
  %v6196 = vunpack.c.l.b16 %v6140
  %v6197 = vunpack.c.h.b16 %v6140
  %v6198 = vunpack.c.l.b16 %v6141
  %v6199 = vunpack.c.h.b16 %v6141
  %v6200 = vunpack.c.l.b16 %v6142
  %v6201 = vunpack.c.h.b16 %v6142
  %v6202 = vunpack.c.l.b16 %v6143
  %v6203 = vunpack.c.h.b16 %v6143
  %v6204 = vpack.c.b16 %v6174, %v6172
  %v6205 = vpack.c.b16 %v6175, %v6173
  %v6206 = vpack.c.b16 %v6178, %v6176
  %v6207 = vpack.c.b16 %v6179, %v6177
  %v6208 = vpack.c.b16 %v6182, %v6180
  %v6209 = vpack.c.b16 %v6183, %v6181
  %v6210 = vpack.c.b16 %v6186, %v6184
  %v6211 = vpack.c.b16 %v6187, %v6185
  %v6212 = vpack.c.b16 %v6190, %v6188
  %v6213 = vpack.c.b16 %v6191, %v6189
  %v6214 = vpack.c.b16 %v6194, %v6192
  %v6215 = vpack.c.b16 %v6195, %v6193
  %v6216 = vpack.c.b16 %v6198, %v6196
  %v6217 = vpack.c.b16 %v6199, %v6197
  %v6218 = vpack.c.b16 %v6202, %v6200
  %v6219 = vpack.c.b16 %v6203, %v6201
  %6236 = vmatprep.subr.bf16.mxu0 %v6205
  %6237 = vmatpush1.bf16.msra.mxu0 %v6204
  %6238 = vmatprep.subr.bf16.mxu0 %v6207
  %6239 = vmatpush1.bf16.msra.mxu0 %v6206
  %6240 = vmatprep.subr.bf16.mxu0 %v6209
  %6241 = vmatpush1.bf16.msra.mxu0 %v6208
  %6242 = vmatprep.subr.bf16.mxu0 %v6211
  %6243 = vmatpush1.bf16.msra.mxu0 %v6210
  %6244 = vmatprep.subr.bf16.mxu0 %v6213
  %6245 = vmatpush1.bf16.msra.mxu0 %v6212
  %6246 = vmatprep.subr.bf16.mxu0 %v6215
  %6247 = vmatpush1.bf16.msra.mxu0 %v6214
  %6248 = vmatprep.subr.bf16.mxu0 %v6217
  %6249 = vmatpush1.bf16.msra.mxu0 %v6216
  %6250 = vmatprep.subr.bf16.mxu0 %v6219
  %6251 = vmatpush1.bf16.msra.mxu0 %v6218
  %6252 = vmatprep.subr.bf16.mxu0 0
  %6253 = vmatpush1.bf16.msra.mxu0 0
  %6254 = vmatprep.subr.bf16.mxu0 0
  %6255 = vmatpush1.bf16.msra.mxu0 0
  %6256 = vmatprep.subr.bf16.mxu0 0
  %6257 = vmatpush1.bf16.msra.mxu0 0
  %6258 = vmatprep.subr.bf16.mxu0 0
  %6259 = vmatpush1.bf16.msra.mxu0 0
  %6260 = vmatprep.subr.bf16.mxu0 0
  %6261 = vmatpush1.bf16.msra.mxu0 0
  %6262 = vmatprep.subr.bf16.mxu0 0
  %6263 = vmatpush1.bf16.msra.mxu0 0
  %6264 = vmatprep.subr.bf16.mxu0 0
  %6265 = vmatpush1.bf16.msra.mxu0 0
  %6266 = vmatprep.subr.bf16.mxu0 0
  %6267 = vmatpush1.bf16.msra.mxu0 0
  %6268 = vmatprep.mubr.bf16.mxu0 0
  %6269 = vmatmul.mubr.bf16.gmra.mrb[0].mxu0 %v6127
  %v6270 = vpop.f32.mrb[0].mxu0
  %v6271 = vadd.f32 %v6149, %v6270
  %v6272 = vpop.f32.mrb[0].mxu0
  %v6273 = vadd.f32 %v6153, %v6272
  %v6274 = vpop.f32.mrb[0].mxu0
  %v6275 = vpop.f32.mrb[0].mxu0
  %6276 = vdwg.mxu0
  %v6277 = vxor.u32 %v6271, 2147483648
  %v6278 = vmul.f32 %v6277, 1.442695
  %v6279 = vpow.pop %v6278
  %v6280 = vadd.f32 %v6279, 1.0
  %v6281 = vrcp.pop %v6280
  %v6282 = vmul.f32 1.0, %v6281
  %6284 = vrot.lane.b32.xlu0 %v6273, 64
  %v6285 = vpop.permute.xlu0 %6284
  %v6287 = vmul.f32 %v6282, %v6285
  %v6288 = vadd.f32 %v6273, %v6287
  %v6289 = vtanh.pop %v6288
  %v6290 = vsub.f32 1.0, %v6282
  %6292 = vrot.lane.b32.xlu0 %v6289, 64
  %v6293 = vpop.permute.xlu0 %6292
  %v6295 = vmul.f32 %v6290, %v6293
  %v6296 = vmul.f32 %v6282, %v6123
  %v6297 = vadd.f32 %v6295, %v6296
  %v6298 = vpack.c.bf16 %v6297, %v6297
  %v6299 = vld [vmem:[%s10] sm:$0xf]
  %v6300 = vld [vmem:[%s10 + $0x4] sm:$0xf]
  %v6301 = vld [vmem:[%s10 + $0x8] sm:$0xf]
  %v6302 = vld [vmem:[%s10 + $0xc] sm:$0xf]
  %v6303 = vld [vmem:[%s10 + $0x10] sm:$0xf]
  %v6304 = vld [vmem:[%s10 + $0x14] sm:$0xf]
  %v6305 = vld [vmem:[%s10 + $0x18] sm:$0xf]
  %v6306 = vld [vmem:[%s10 + $0x1c] sm:$0xf]
  %v6307 = vld [vmem:[%s11] sm:$0x1]
  %v6309 = vlaneseq
  %v6310 = vshrl.u32 %v6309, 7
  %v6311 = vsub.s32 0, %v6310
  %v6312 = vrot.slane %v6307, %v6311
  %6315 = vrot.lane.b32.xlu0 %v6298, 64
  %v6316 = vpop.permute.xlu0 %6315
  %v6325 = vunpack.c.l.b16 %v6299
  %v6326 = vunpack.c.l.b16 %v6300
  %v6327 = vunpack.c.l.b16 %v6301
  %v6328 = vunpack.c.l.b16 %v6302
  %v6329 = vunpack.c.l.b16 %v6303
  %v6330 = vunpack.c.l.b16 %v6304
  %v6331 = vunpack.c.l.b16 %v6305
  %v6332 = vunpack.c.l.b16 %v6306
  %v6333 = vpack.c.b16 %v6326, %v6325
  %v6334 = vpack.c.b16 %v6328, %v6327
  %v6335 = vpack.c.b16 %v6330, %v6329
  %v6336 = vpack.c.b16 %v6332, %v6331
  %v6342 = vsel %vm6125, %v6316, 0
  %6344 = vmatprep.subr.bf16.mxu0 0
  %6345 = vmatpush1.bf16.msra.mxu0 %v6333
  %6346 = vmatprep.subr.bf16.mxu0 0
  %6347 = vmatpush1.bf16.msra.mxu0 %v6334
  %6348 = vmatprep.subr.bf16.mxu0 0
  %6349 = vmatpush1.bf16.msra.mxu0 %v6335
  %6350 = vmatprep.subr.bf16.mxu0 0
  %6351 = vmatpush1.bf16.msra.mxu0 %v6336
  %6352 = vmatprep.subr.bf16.mxu0 0
  %6353 = vmatpush1.bf16.msra.mxu0 0
  %6354 = vmatprep.subr.bf16.mxu0 0
  %6355 = vmatpush1.bf16.msra.mxu0 0
  %6356 = vmatprep.subr.bf16.mxu0 0
  %6357 = vmatpush1.bf16.msra.mxu0 0
  %6358 = vmatprep.subr.bf16.mxu0 0
  %6359 = vmatpush1.bf16.msra.mxu0 0
  %6360 = vmatprep.subr.bf16.mxu0 0
  %6361 = vmatpush1.bf16.msra.mxu0 0
  %6362 = vmatprep.subr.bf16.mxu0 0
  %6363 = vmatpush1.bf16.msra.mxu0 0
  %6364 = vmatprep.subr.bf16.mxu0 0
  %6365 = vmatpush1.bf16.msra.mxu0 0
  %6366 = vmatprep.subr.bf16.mxu0 0
  %6367 = vmatpush1.bf16.msra.mxu0 0
  %6368 = vmatprep.subr.bf16.mxu0 0
  %6369 = vmatpush1.bf16.msra.mxu0 0
  %6370 = vmatprep.subr.bf16.mxu0 0
  %6371 = vmatpush1.bf16.msra.mxu0 0
  %6372 = vmatprep.subr.bf16.mxu0 0
  %6373 = vmatpush1.bf16.msra.mxu0 0
  %6374 = vmatprep.subr.bf16.mxu0 0
  %6375 = vmatpush1.bf16.msra.mxu0 0
  %6376 = vmatprep.mubr.bf16.mxu0 0
  %6377 = vmatmul.mubr.bf16.gmra.mrb[0].mxu0 %v6342
  %v6378 = vpop.f32.mrb[0].mxu0
  %v6379 = vadd.f32 %v6312, %v6378
  %v6380 = vpop.f32.mrb[0].mxu0
  %v6381 = vpop.f32.mrb[0].mxu0
  %v6382 = vpop.f32.mrb[0].mxu0
  %6383 = vdwg.mxu0
  %vm6384 = vcmask 50184
  %v6385 = vsel %vm6384, %v6379, -inf
  %6386 = vmax.xlane.f32.xlu0 %v6385
  %v6387 = vpop.xlane.xlu0 %6386
  %v6388 = vsub.f32 %v6379, %v6387
  %v6389 = vmul.f32 %v6388, 1.442695
  %v6390 = vpow.pop %v6389
  %6392 = vrot.lane.b32.xlu0 %v6390, 127
  %v6393 = vpop.permute.xlu0 %6392
  %vm6395 = vcmask 41984
  %v6396 = vsel %vm6395, %v6393, 0.0
  %6397 = vadd.xlane.f32.xlu0 %v6396
  %v6398 = vpop.xlane.xlu0 %6397
  %v6399 = vlog2.pop %v6398
  %v6400 = vmul.f32 %v6399, 0.6931472
  %v6401 = vadd.f32 %v6400, %v6387
  %v6402 = vsub.f32 %v6379, %v6401
  %6403 = vrot.lane.b32.xlu0 %v6120, 65
  %v6404 = vpop.permute.xlu0 %6403
  %v6406 = vadd.f32 %v6379, %v6404
  %v6407 = vsel %vm6384, %v6406, -inf
  %6408 = vmax.xlane.f32.xlu0 %v6407
  %v6409 = vpop.xlane.xlu0 %6408
  %v6410 = vlaneseq
  %v6411 = vand.u32 %v6410, 127
  %vm6412 = vcmp.ge.f32.partialorder %v6406, %v6409
  %6413 = vrot.lane.b32.xlu0 %v6411, 1
  %v6414 = vpop.permute.xlu0 %6413
  %v6415 = vsel %vm6412, %v6414, 6
  %v6416 = vsel %vm6384, %v6415, 2147483647
  %v6417 = vand.u32 %v6416, 65535
  %v6418 = vshra.s32 %v6416, 16
  %v6419 = vcvt.s32.f32 %v6417
  %v6420 = vcvt.s32.f32 %v6418
  %6421 = vmin.xlane.f32.xlu0 %v6420
  %v6422 = vpop.xlane.xlu0 %6421
  %vm6423 = vcmp.eq.f32.partialorder %v6420, %v6422
  %v6424 = vsel %vm6423, %v6419, inf
  %6425 = vmin.xlane.f32.xlu0 %v6424
  %v6426 = vpop.xlane.xlu0 %6425
  %v6427 = vcvt.f32.s32 %v6426
  %v6428 = vcvt.f32.s32 %v6422
  %v6429 = vshll.u32 %v6428, 16
  %v6430 = vadd.s32 %v6429, %v6427
  %vm6431 = vcmp.eq.s32.totalorder %v6411, %v6430
  %6433 = vrot.lane.b32.xlu0 %v6402, 127
  %v6434 = vpop.permute.xlu0 %6433
  %v6436 = vsel %vm6431, %v6434, 0.0
  %v6437 = vsel %vm6395, %v6436, 0.0
  %6438 = vadd.xlane.f32.xlu0 %v6437
  %v6439 = vpop.xlane.xlu0 %6438
  %v6440 = vcvt.s32.f32 %v6430
  %6442 = vrot.lane.b32.xlu0 %v6297, 64
  %v6443 = vpop.permute.xlu0 %6442
  %6446 = vrot.lane.b32.xlu0 %v6379, 63
  %v6447 = vpop.permute.xlu0 %6446
  %6449 = vrot.lane.b32.xlu0 %v6379, 70
  %v6450 = vpop.permute.xlu0 %6449
  %v6452 = vsel %vm6125, %v6443, %v6447
  %vm6453 = vcmask 572416
  %v6454 = vsel %vm6453, %v6452, %v6450
  %vm6455 = vcmask 580608
  %v6456 = vsel %vm6455, %v6454, %v6440
  %vm6457 = vcmask 588800
  %v6458 = vsel %vm6457, %v6456, %v6439
  %vm6459 = vcmask 596992
  %v6460 = vsel %vm6459, %v6458, 0.0
  %6461 = vst [vmem:[%s12] sm:$0x3] %v6460
  // Predicated region
  $region50: #{actor_critic_forward.1} parent=0 // pred_check
    _
  $region51: #{actor_critic_forward.1} parent=0 // pred_check_branch
    %6463 = sbr.rel (0) target = $region53
  $region52: #{actor_critic_forward.1} parent=0 // pred_region
    _
  $region53: #{actor_critic_forward.1} parent=0 // pred_fallthru
    _
  // Predicated region
  $region54: #{actor_critic_forward.1} parent=0 // pred_check
    _
  $region55: #{actor_critic_forward.1} parent=0 // pred_check_branch
    %6465 = sbr.rel (0) target = $region57
  $region56: #{actor_critic_forward.1} parent=0 // pred_region
    _
  $region57: #{actor_critic_forward.1} parent=0 // pred_fallthru
    _

</llo_original>
